<compile_context>
chip_gen: v5e
topology: v5e:2x2
jax: 0.10.0
libtpu: 0.0.40
codegen_flags: <defaults>
</compile_context>

<pallas_src>
import functools
import math

import jax
import jax.numpy as jnp
from jax.experimental import pallas as pl
from jax.experimental.pallas import tpu as pltpu


# ----------------------------------------------------------------------------
# Fused whole-network kernel (one grid step == one batch element)
# ----------------------------------------------------------------------------
def _vit_fused_kernel(
    # inputs -------------------------------------------------------------
    patches_ref,                       # (1, S, C*P*P)  row 0 is zeros
    patch_w_ref, patch_b_ref,          # (C*P*P, D), (1, D)
    cls_ref, pos_ref,                  # (1, D), (S, D)
    ln1_g_ref, ln1_b_ref,              # (depth, 1, D) each
    qkv_w_ref, qkv_b_ref,              # (depth, D, 3D), (depth, 1, 3D)
    proj_w_ref, proj_b_ref,            # (depth, D, D), (depth, 1, D)
    ln2_g_ref, ln2_b_ref,              # (depth, 1, D) each
    fc1_w_ref, fc1_b_ref,              # (depth, D, H), (depth, 1, H)
    fc2_w_ref, fc2_b_ref,              # (depth, H, D), (depth, 1, D)
    norm_g_ref, norm_b_ref,            # (1, D) each
    head_w_ref, head_b_ref,            # (D, n_cls), (1, n_cls)
    # outputs ------------------------------------------------------------
    out_ref,                           # (1, 1, n_cls)
    *, S, D, nh, dh, depth, eps):
    f32 = jnp.float32
    bf16 = jnp.bfloat16

    def mm(a, w):
        # bf16 operands, fp32 accumulation (single-pass MXU)
        return jax.lax.dot_general(
            a.astype(bf16), w.astype(bf16), (((1,), (0,)), ((), ())),
            preferred_element_type=f32)

    def ln(xv, g, b):
        mu = jnp.mean(xv, axis=-1, keepdims=True)
        xc = xv - mu
        var = jnp.mean(xc * xc, axis=-1, keepdims=True)
        return xc * jax.lax.rsqrt(var + eps) * g + b

    # --- patch embedding + sequence assembly (no concat, no scratch) --------
    # Row 0 of `patches` is zeros, so the matmul contributes nothing there and
    # the cls token is injected with a per-row select; other rows get the
    # conv bias.  Result: x[0] = cls + pos[0], x[i>=1] = patch_i @ W + b + pos[i].
    emb = mm(patches_ref[0], patch_w_ref[...])                        # (S, D)
    rows = jax.lax.broadcasted_iota(jnp.int32, (S, D), 0)
    row0_add = jnp.where(rows == 0,
                         jnp.broadcast_to(cls_ref[...], (S, D)),
                         jnp.broadcast_to(patch_b_ref[...], (S, D)))
    x = emb + pos_ref[...] + row0_add                                 # (S, D)

    scale = 1.0 / math.sqrt(dh)
    inv_sqrt2 = 1.0 / math.sqrt(2.0)

    # --- transformer blocks (pre-LN), statically unrolled --------------------
    for d in range(depth):
        # multi-head self-attention
        hx = ln(x, ln1_g_ref[d], ln1_b_ref[d])
        qkv = mm(hx, qkv_w_ref[d]) + qkv_b_ref[d]                     # (S, 3D)
        pw = proj_w_ref[d]                                            # (D, D)
        # per-head outputs are folded directly into the output projection:
        #   attn @ W_proj = sum_h  o_h @ W_proj[h*dh:(h+1)*dh, :]
        attn_proj = jnp.broadcast_to(proj_b_ref[d], (S, D)).astype(f32)
        for hh in range(nh):
            c0 = hh * dh
            qs = qkv[:, c0:c0 + dh]                                   # (S, dh)
            ks = qkv[:, D + c0:D + c0 + dh]
            vs = qkv[:, 2 * D + c0:2 * D + c0 + dh]
            # contract on dh of both operands -> no explicit k.T transpose
            s = jax.lax.dot_general(
                qs.astype(bf16), ks.astype(bf16), (((1,), (1,)), ((), ())),
                preferred_element_type=f32) * scale                  # (S, S)
            m = jnp.max(s, axis=-1, keepdims=True)
            p = jnp.exp(s - m)
            l = jnp.sum(p, axis=-1, keepdims=True)
            o = mm(p, vs) * pl.reciprocal(l, approx=True)             # (S, dh)
            attn_proj = attn_proj + mm(o, pw[c0:c0 + dh, :])          # (S, D)
        x = x + attn_proj

        # MLP (exact erf GELU, matching torch.nn.GELU default)
        hx = ln(x, ln2_g_ref[d], ln2_b_ref[d])
        hx = mm(hx, fc1_w_ref[d]) + fc1_b_ref[d]
        hx = 0.5 * hx * (1.0 + jax.lax.erf(hx * inv_sqrt2))
        hx = mm(hx, fc2_w_ref[d]) + fc2_b_ref[d]
        x = x + hx

    # --- final norm + classification head on the CLS row only ----------------
    cls_tok = x[0:1, :]                                               # (1, D)
    hcls = ln(cls_tok, norm_g_ref[...], norm_b_ref[...])
    out_ref[0] = mm(hcls, head_w_ref[...]) + head_b_ref[...]          # (1, n_cls)


# ----------------------------------------------------------------------------
# Forward pass (== self.head(self.model(x)) of the PyTorch module)
# ----------------------------------------------------------------------------
def vit_dino_class_forward(params, x, *, patch, num_heads, eps=1e-6):
    B, C, H, W = x.shape
    P = patch
    D = params["patch_w"].shape[1]
    depth = params["qkv_w"].shape[0]
    nh = num_heads
    dh = D // nh
    gh, gw = H // P, W // P
    N = gh * gw
    S = N + 1
    CPP = C * P * P
    n_classes = params["head_w"].shape[1]

    # patch extraction = pure layout glue (flatten each P x P patch in (c,i,j)
    # order to match the conv weight flattening), plus a zero row 0 per batch
    # so the in-kernel patch-embed matmul directly emits an (S, D) sequence.
    patches = (
        x.reshape(B, C, gh, P, gw, P)
        .transpose(0, 2, 4, 1, 3, 5)
        .reshape(B, N, CPP)
    )
    patches = jnp.concatenate(
        [jnp.zeros((B, 1, CPP), patches.dtype), patches], axis=1)     # (B,S,CPP)

    kernel = functools.partial(
        _vit_fused_kernel, S=S, D=D, nh=nh, dh=dh, depth=depth, eps=eps)

    weights = (
        params["patch_w"], params["patch_b"],
        params["cls_token"], params["pos_embed"],
        params["ln1_g"], params["ln1_b"],
        params["qkv_w"], params["qkv_b"],
        params["proj_w"], params["proj_b"],
        params["ln2_g"], params["ln2_b"],
        params["fc1_w"], params["fc1_b"],
        params["fc2_w"], params["fc2_b"],
        params["norm_g"], params["norm_b"],
        params["head_w"], params["head_b"],
    )

    def _resident(arr):
        # full-array block, constant index map -> loaded once, stays in VMEM
        nd = arr.ndim
        return pl.BlockSpec(arr.shape, lambda b, _n=nd: (0,) * _n)

    out = pl.pallas_call(
        kernel,
        out_shape=jax.ShapeDtypeStruct((B, 1, n_classes), jnp.float32),
        grid=(B,),
        in_specs=[pl.BlockSpec((1, S, CPP), lambda b: (b, 0, 0))]
                 + [_resident(w) for w in weights],
        out_specs=pl.BlockSpec((1, 1, n_classes), lambda b: (b, 0, 0)),
        compiler_params=pltpu.CompilerParams(
            dimension_semantics=("parallel",)),
    )(patches, *weights)
    return out.reshape(B, n_classes)


# ----------------------------------------------------------------------------
# Parameter construction (deterministic, synthetic — arrays only, no ints)
# ----------------------------------------------------------------------------
# TODO(synk): load_pretrained_weights (DINO checkpoint I/O) has no in-script
# equivalent; deterministic synthetic parameters are used instead.
def init_params(key, *, img=32, patch=16, in_ch=3, embed_dim=32, depth=2,
                num_heads=4, mlp_ratio=4, n_classes=4):
    del num_heads  # static config, not stored in the traced pytree
    n_patches = (img // patch) ** 2
    S = n_patches + 1
    hidden = embed_dim * mlp_ratio
    keys = iter(jax.random.split(key, 16 + depth * 8))

    def nrm(shape, scale=0.02):
        return (scale * jax.random.normal(next(keys), shape)).astype(jnp.float32)

    D = embed_dim
    params = {
        "patch_w": nrm((in_ch * patch * patch, D)),
        "patch_b": nrm((1, D)),
        "cls_token": nrm((1, D)),
        "pos_embed": nrm((S, D)),
        "norm_g": jnp.ones((1, D), jnp.float32),
        "norm_b": jnp.zeros((1, D), jnp.float32),
        "head_w": nrm((D, n_classes)),
        "head_b": jnp.zeros((1, n_classes), jnp.float32),
        # stacked per-block weights (leading depth axis; indexed in-kernel)
        "ln1_g": jnp.ones((depth, 1, D), jnp.float32),
        "ln1_b": jnp.zeros((depth, 1, D), jnp.float32),
        "qkv_w": jnp.stack([nrm((D, 3 * D)) for _ in range(depth)]),
        "qkv_b": jnp.zeros((depth, 1, 3 * D), jnp.float32),
        "proj_w": jnp.stack([nrm((D, D)) for _ in range(depth)]),
        "proj_b": jnp.zeros((depth, 1, D), jnp.float32),
        "ln2_g": jnp.ones((depth, 1, D), jnp.float32),
        "ln2_b": jnp.zeros((depth, 1, D), jnp.float32),
        "fc1_w": jnp.stack([nrm((D, hidden)) for _ in range(depth)]),
        "fc1_b": jnp.zeros((depth, 1, hidden), jnp.float32),
        "fc2_w": jnp.stack([nrm((hidden, D)) for _ in range(depth)]),
        "fc2_b": jnp.zeros((depth, 1, D), jnp.float32),
    }
    return params


# ----------------------------------------------------------------------------
if __name__ == "__main__":
    key = jax.random.PRNGKey(0)
    kp, kx = jax.random.split(key)

    # small config consistent with the module: patch_size=16, a 32x32 RGB image
    # gives a 2x2 patch grid; embed_dim=32, depth=2, heads=4, head -> 4 classes.
    params = init_params(kp, img=32, patch=16, in_ch=3, embed_dim=32,
                         depth=2, num_heads=4, mlp_ratio=4, n_classes=4)

    x = jax.random.normal(kx, (2, 3, 32, 32), dtype=jnp.float32)  # NCHW input

    fwd = jax.jit(functools.partial(vit_dino_class_forward,
                                    patch=16, num_heads=4, eps=1e-6))
    out = fwd(params, x)
    jax.block_until_ready(out)
    assert out.shape == (2, 4) and out.dtype == jnp.float32
    print("KERNEL_OK")
</pallas_src>

<mosaic_0001>
module attributes {stable_mosaic.version = 11 : i64} {
  func.func @_vit_fused_kernel(%arg0: i32, %arg1: memref<1x5x768xf32, #tpu.memory_space<vmem>>, %arg2: memref<768x32xf32, #tpu.memory_space<vmem>>, %arg3: memref<1x32xf32, #tpu.memory_space<vmem>>, %arg4: memref<1x32xf32, #tpu.memory_space<vmem>>, %arg5: memref<5x32xf32, #tpu.memory_space<vmem>>, %arg6: memref<2x1x32xf32, #tpu.memory_space<vmem>>, %arg7: memref<2x1x32xf32, #tpu.memory_space<vmem>>, %arg8: memref<2x32x96xf32, #tpu.memory_space<vmem>>, %arg9: memref<2x1x96xf32, #tpu.memory_space<vmem>>, %arg10: memref<2x32x32xf32, #tpu.memory_space<vmem>>, %arg11: memref<2x1x32xf32, #tpu.memory_space<vmem>>, %arg12: memref<2x1x32xf32, #tpu.memory_space<vmem>>, %arg13: memref<2x1x32xf32, #tpu.memory_space<vmem>>, %arg14: memref<2x32x128xf32, #tpu.memory_space<vmem>>, %arg15: memref<2x1x128xf32, #tpu.memory_space<vmem>>, %arg16: memref<2x128x32xf32, #tpu.memory_space<vmem>>, %arg17: memref<2x1x32xf32, #tpu.memory_space<vmem>>, %arg18: memref<1x32xf32, #tpu.memory_space<vmem>>, %arg19: memref<1x32xf32, #tpu.memory_space<vmem>>, %arg20: memref<32x4xf32, #tpu.memory_space<vmem>>, %arg21: memref<1x4xf32, #tpu.memory_space<vmem>>, %arg22: memref<1x1x4xf32, #tpu.memory_space<vmem>>) attributes {dimension_semantics = [#tpu.dimension_semantics<parallel>], iteration_bounds = array<i64: 2>, scalar_prefetch = 0 : i64, scratch_operands = 0 : i64, tpu.core_type = #tpu.core_type<tc>, window_params = [{transform_indices = @transform_0, window_bounds = array<i64: 1, 5, 768>}, {pipeline_mode = #tpu.pipeline_mode<synchronous>, transform_indices = @transform_1, window_bounds = array<i64: 768, 32>}, {pipeline_mode = #tpu.pipeline_mode<synchronous>, transform_indices = @transform_2, window_bounds = array<i64: 1, 32>}, {pipeline_mode = #tpu.pipeline_mode<synchronous>, transform_indices = @transform_3, window_bounds = array<i64: 1, 32>}, {pipeline_mode = #tpu.pipeline_mode<synchronous>, transform_indices = @transform_4, window_bounds = array<i64: 5, 32>}, {pipeline_mode = #tpu.pipeline_mode<synchronous>, transform_indices = @transform_5, window_bounds = array<i64: 2, 1, 32>}, {pipeline_mode = #tpu.pipeline_mode<synchronous>, transform_indices = @transform_6, window_bounds = array<i64: 2, 1, 32>}, {pipeline_mode = #tpu.pipeline_mode<synchronous>, transform_indices = @transform_7, window_bounds = array<i64: 2, 32, 96>}, {pipeline_mode = #tpu.pipeline_mode<synchronous>, transform_indices = @transform_8, window_bounds = array<i64: 2, 1, 96>}, {pipeline_mode = #tpu.pipeline_mode<synchronous>, transform_indices = @transform_9, window_bounds = array<i64: 2, 32, 32>}, {pipeline_mode = #tpu.pipeline_mode<synchronous>, transform_indices = @transform_10, window_bounds = array<i64: 2, 1, 32>}, {pipeline_mode = #tpu.pipeline_mode<synchronous>, transform_indices = @transform_11, window_bounds = array<i64: 2, 1, 32>}, {pipeline_mode = #tpu.pipeline_mode<synchronous>, transform_indices = @transform_12, window_bounds = array<i64: 2, 1, 32>}, {pipeline_mode = #tpu.pipeline_mode<synchronous>, transform_indices = @transform_13, window_bounds = array<i64: 2, 32, 128>}, {pipeline_mode = #tpu.pipeline_mode<synchronous>, transform_indices = @transform_14, window_bounds = array<i64: 2, 1, 128>}, {pipeline_mode = #tpu.pipeline_mode<synchronous>, transform_indices = @transform_15, window_bounds = array<i64: 2, 128, 32>}, {pipeline_mode = #tpu.pipeline_mode<synchronous>, transform_indices = @transform_16, window_bounds = array<i64: 2, 1, 32>}, {pipeline_mode = #tpu.pipeline_mode<synchronous>, transform_indices = @transform_17, window_bounds = array<i64: 1, 32>}, {pipeline_mode = #tpu.pipeline_mode<synchronous>, transform_indices = @transform_18, window_bounds = array<i64: 1, 32>}, {pipeline_mode = #tpu.pipeline_mode<synchronous>, transform_indices = @transform_19, window_bounds = array<i64: 32, 4>}, {pipeline_mode = #tpu.pipeline_mode<synchronous>, transform_indices = @transform_20, window_bounds = array<i64: 1, 4>}, {transform_indices = @transform_21, window_bounds = array<i64: 1, 1, 4>}]} {
    %c0 = arith.constant 0 : index
    %c0_0 = arith.constant 0 : index
    %c0_1 = arith.constant 0 : index
    %0 = vector.load %arg1[%c0, %c0_0, %c0_1] : memref<1x5x768xf32, #tpu.memory_space<vmem>>, vector<1x5x768xf32>
    %1 = vector.shape_cast %0 : vector<1x5x768xf32> to vector<5x768xf32>
    %c0_2 = arith.constant 0 : index
    %c0_3 = arith.constant 0 : index
    %2 = vector.load %arg2[%c0_2, %c0_3] : memref<768x32xf32, #tpu.memory_space<vmem>>, vector<768x32xf32>
    %3 = arith.truncf %1 : vector<5x768xf32> to vector<5x768xbf16>
    %4 = arith.truncf %2 : vector<768x32xf32> to vector<768x32xbf16>
    %cst = arith.constant dense<0.000000e+00> : vector<5x32xf32>
    %5 = tpu.matmul %3, %4, %cst {dimension_numbers = #tpu.dot_dimension_numbers<[1], [0], [0], [1], [0, 0, 1, 1], [], []>} : vector<5x768xbf16>, vector<768x32xbf16>, vector<5x32xf32> -> vector<5x32xf32>
    %6 = tpu.iota {dimensions = array<i32: 0>} : vector<5x32xi32>
    %c0_i32 = arith.constant 0 : i32
    %7 = vector.broadcast %c0_i32 : i32 to vector<5x32xi32>
    %8 = arith.cmpi eq, %6, %7 : vector<5x32xi32>
    %c0_4 = arith.constant 0 : index
    %c0_5 = arith.constant 0 : index
    %9 = vector.load %arg4[%c0_4, %c0_5] : memref<1x32xf32, #tpu.memory_space<vmem>>, vector<1x32xf32>
    %10 = vector.shape_cast %9 : vector<1x32xf32> to vector<1x32xf32>
    %11 = vector.broadcast %10 : vector<1x32xf32> to vector<5x32xf32>
    %c0_6 = arith.constant 0 : index
    %c0_7 = arith.constant 0 : index
    %12 = vector.load %arg3[%c0_6, %c0_7] : memref<1x32xf32, #tpu.memory_space<vmem>>, vector<1x32xf32>
    %13 = vector.shape_cast %12 : vector<1x32xf32> to vector<1x32xf32>
    %14 = vector.broadcast %13 : vector<1x32xf32> to vector<5x32xf32>
    %15 = arith.select %8, %11, %14 : vector<5x32xi1>, vector<5x32xf32>
    %c0_8 = arith.constant 0 : index
    %c0_9 = arith.constant 0 : index
    %16 = vector.load %arg5[%c0_8, %c0_9] : memref<5x32xf32, #tpu.memory_space<vmem>>, vector<5x32xf32>
    %17 = arith.addf %5, %16 : vector<5x32xf32>
    %18 = arith.addf %17, %15 : vector<5x32xf32>
    %c0_10 = arith.constant 0 : index
    %c0_11 = arith.constant 0 : index
    %c0_12 = arith.constant 0 : index
    %19 = vector.load %arg6[%c0_10, %c0_11, %c0_12] : memref<2x1x32xf32, #tpu.memory_space<vmem>>, vector<1x1x32xf32>
    %20 = vector.shape_cast %19 : vector<1x1x32xf32> to vector<1x32xf32>
    %c0_13 = arith.constant 0 : index
    %c0_14 = arith.constant 0 : index
    %c0_15 = arith.constant 0 : index
    %21 = vector.load %arg7[%c0_13, %c0_14, %c0_15] : memref<2x1x32xf32, #tpu.memory_space<vmem>>, vector<1x1x32xf32>
    %22 = vector.shape_cast %21 : vector<1x1x32xf32> to vector<1x32xf32>
    %cst_16 = arith.constant dense<0.000000e+00> : vector<5xf32>
    %23 = vector.multi_reduction <add>, %18, %cst_16 [1] : vector<5x32xf32> to vector<5xf32>
    %24 = vector.shape_cast %23 : vector<5xf32> to vector<5x1xf32>
    %cst_17 = arith.constant 3.200000e+01 : f32
    %25 = vector.broadcast %cst_17 : f32 to vector<5x1xf32>
    %26 = arith.divf %24, %25 : vector<5x1xf32>
    %27 = vector.broadcast %26 : vector<5x1xf32> to vector<5x32xf32>
    %28 = arith.subf %18, %27 : vector<5x32xf32>
    %29 = arith.mulf %28, %28 : vector<5x32xf32>
    %cst_18 = arith.constant dense<0.000000e+00> : vector<5xf32>
    %30 = vector.multi_reduction <add>, %29, %cst_18 [1] : vector<5x32xf32> to vector<5xf32>
    %31 = vector.shape_cast %30 : vector<5xf32> to vector<5x1xf32>
    %cst_19 = arith.constant 3.200000e+01 : f32
    %32 = vector.broadcast %cst_19 : f32 to vector<5x1xf32>
    %33 = arith.divf %31, %32 : vector<5x1xf32>
    %cst_20 = arith.constant 9.99999997E-7 : f32
    %34 = vector.broadcast %cst_20 : f32 to vector<5x1xf32>
    %35 = arith.addf %33, %34 : vector<5x1xf32>
    %36 = math.rsqrt %35 : vector<5x1xf32>
    %37 = vector.broadcast %36 : vector<5x1xf32> to vector<5x32xf32>
    %38 = arith.mulf %28, %37 : vector<5x32xf32>
    %39 = vector.broadcast %20 : vector<1x32xf32> to vector<5x32xf32>
    %40 = arith.mulf %38, %39 : vector<5x32xf32>
    %41 = vector.broadcast %22 : vector<1x32xf32> to vector<5x32xf32>
    %42 = arith.addf %40, %41 : vector<5x32xf32>
    %c0_21 = arith.constant 0 : index
    %c0_22 = arith.constant 0 : index
    %c0_23 = arith.constant 0 : index
    %43 = vector.load %arg8[%c0_21, %c0_22, %c0_23] : memref<2x32x96xf32, #tpu.memory_space<vmem>>, vector<1x32x96xf32>
    %44 = vector.shape_cast %43 : vector<1x32x96xf32> to vector<32x96xf32>
    %45 = arith.truncf %42 : vector<5x32xf32> to vector<5x32xbf16>
    %46 = arith.truncf %44 : vector<32x96xf32> to vector<32x96xbf16>
    %cst_24 = arith.constant dense<0.000000e+00> : vector<5x96xf32>
    %47 = tpu.matmul %45, %46, %cst_24 {dimension_numbers = #tpu.dot_dimension_numbers<[1], [0], [0], [1], [0, 0, 1, 1], [], []>} : vector<5x32xbf16>, vector<32x96xbf16>, vector<5x96xf32> -> vector<5x96xf32>
    %c0_25 = arith.constant 0 : index
    %c0_26 = arith.constant 0 : index
    %c0_27 = arith.constant 0 : index
    %48 = vector.load %arg9[%c0_25, %c0_26, %c0_27] : memref<2x1x96xf32, #tpu.memory_space<vmem>>, vector<1x1x96xf32>
    %49 = vector.shape_cast %48 : vector<1x1x96xf32> to vector<1x96xf32>
    %50 = vector.broadcast %49 : vector<1x96xf32> to vector<5x96xf32>
    %51 = arith.addf %47, %50 : vector<5x96xf32>
    %c0_28 = arith.constant 0 : index
    %c0_29 = arith.constant 0 : index
    %c0_30 = arith.constant 0 : index
    %52 = vector.load %arg10[%c0_28, %c0_29, %c0_30] : memref<2x32x32xf32, #tpu.memory_space<vmem>>, vector<1x32x32xf32>
    %53 = vector.shape_cast %52 : vector<1x32x32xf32> to vector<32x32xf32>
    %c0_31 = arith.constant 0 : index
    %c0_32 = arith.constant 0 : index
    %c0_33 = arith.constant 0 : index
    %54 = vector.load %arg11[%c0_31, %c0_32, %c0_33] : memref<2x1x32xf32, #tpu.memory_space<vmem>>, vector<1x1x32xf32>
    %55 = vector.shape_cast %54 : vector<1x1x32xf32> to vector<1x32xf32>
    %56 = vector.shape_cast %55 : vector<1x32xf32> to vector<1x32xf32>
    %57 = vector.broadcast %56 : vector<1x32xf32> to vector<5x32xf32>
    %58 = vector.extract_strided_slice %51 {offsets = [0, 0], sizes = [5, 8], strides = [1, 1]} : vector<5x96xf32> to vector<5x8xf32>
    %59 = vector.extract_strided_slice %51 {offsets = [0, 32], sizes = [5, 8], strides = [1, 1]} : vector<5x96xf32> to vector<5x8xf32>
    %60 = vector.extract_strided_slice %51 {offsets = [0, 64], sizes = [5, 8], strides = [1, 1]} : vector<5x96xf32> to vector<5x8xf32>
    %61 = arith.truncf %58 : vector<5x8xf32> to vector<5x8xbf16>
    %62 = arith.truncf %59 : vector<5x8xf32> to vector<5x8xbf16>
    %cst_34 = arith.constant dense<0.000000e+00> : vector<5x5xf32>
    %63 = tpu.matmul %61, %62, %cst_34 {dimension_numbers = #tpu.dot_dimension_numbers<[1], [1], [0], [0], [0, 0, 1, 0], [], []>} : vector<5x8xbf16>, vector<5x8xbf16>, vector<5x5xf32> -> vector<5x5xf32>
    %cst_35 = arith.constant 0.353553385 : f32
    %64 = vector.broadcast %cst_35 : f32 to vector<5x5xf32>
    %65 = arith.mulf %63, %64 : vector<5x5xf32>
    %cst_36 = arith.constant dense<0xFF800000> : vector<5xf32>
    %66 = vector.multi_reduction <maximumf>, %65, %cst_36 [1] : vector<5x5xf32> to vector<5xf32>
    %67 = vector.shape_cast %66 : vector<5xf32> to vector<5x1xf32>
    %68 = vector.broadcast %67 : vector<5x1xf32> to vector<5x5xf32>
    %69 = arith.subf %65, %68 : vector<5x5xf32>
    %70 = math.exp %69 : vector<5x5xf32>
    %cst_37 = arith.constant dense<0.000000e+00> : vector<5xf32>
    %71 = vector.multi_reduction <add>, %70, %cst_37 [1] : vector<5x5xf32> to vector<5xf32>
    %72 = vector.shape_cast %71 : vector<5xf32> to vector<5x1xf32>
    %73 = arith.truncf %70 : vector<5x5xf32> to vector<5x5xbf16>
    %74 = arith.truncf %60 : vector<5x8xf32> to vector<5x8xbf16>
    %cst_38 = arith.constant dense<0.000000e+00> : vector<5x8xf32>
    %75 = tpu.matmul %73, %74, %cst_38 {dimension_numbers = #tpu.dot_dimension_numbers<[1], [0], [0], [1], [0, 0, 1, 1], [], []>} : vector<5x5xbf16>, vector<5x8xbf16>, vector<5x8xf32> -> vector<5x8xf32>
    %76 = tpu.reciprocal %72 {approx = true} : vector<5x1xf32> -> vector<5x1xf32>
    %77 = vector.broadcast %76 : vector<5x1xf32> to vector<5x8xf32>
    %78 = arith.mulf %75, %77 : vector<5x8xf32>
    %79 = vector.extract_strided_slice %53 {offsets = [0, 0], sizes = [8, 32], strides = [1, 1]} : vector<32x32xf32> to vector<8x32xf32>
    %80 = arith.truncf %78 : vector<5x8xf32> to vector<5x8xbf16>
    %81 = arith.truncf %79 : vector<8x32xf32> to vector<8x32xbf16>
    %cst_39 = arith.constant dense<0.000000e+00> : vector<5x32xf32>
    %82 = tpu.matmul %80, %81, %cst_39 {dimension_numbers = #tpu.dot_dimension_numbers<[1], [0], [0], [1], [0, 0, 1, 1], [], []>} : vector<5x8xbf16>, vector<8x32xbf16>, vector<5x32xf32> -> vector<5x32xf32>
    %83 = arith.addf %57, %82 : vector<5x32xf32>
    %84 = vector.extract_strided_slice %51 {offsets = [0, 8], sizes = [5, 8], strides = [1, 1]} : vector<5x96xf32> to vector<5x8xf32>
    %85 = vector.extract_strided_slice %51 {offsets = [0, 40], sizes = [5, 8], strides = [1, 1]} : vector<5x96xf32> to vector<5x8xf32>
    %86 = vector.extract_strided_slice %51 {offsets = [0, 72], sizes = [5, 8], strides = [1, 1]} : vector<5x96xf32> to vector<5x8xf32>
    %87 = arith.truncf %84 : vector<5x8xf32> to vector<5x8xbf16>
    %88 = arith.truncf %85 : vector<5x8xf32> to vector<5x8xbf16>
    %cst_40 = arith.constant dense<0.000000e+00> : vector<5x5xf32>
    %89 = tpu.matmul %87, %88, %cst_40 {dimension_numbers = #tpu.dot_dimension_numbers<[1], [1], [0], [0], [0, 0, 1, 0], [], []>} : vector<5x8xbf16>, vector<5x8xbf16>, vector<5x5xf32> -> vector<5x5xf32>
    %cst_41 = arith.constant 0.353553385 : f32
    %90 = vector.broadcast %cst_41 : f32 to vector<5x5xf32>
    %91 = arith.mulf %89, %90 : vector<5x5xf32>
    %cst_42 = arith.constant dense<0xFF800000> : vector<5xf32>
    %92 = vector.multi_reduction <maximumf>, %91, %cst_42 [1] : vector<5x5xf32> to vector<5xf32>
    %93 = vector.shape_cast %92 : vector<5xf32> to vector<5x1xf32>
    %94 = vector.broadcast %93 : vector<5x1xf32> to vector<5x5xf32>
    %95 = arith.subf %91, %94 : vector<5x5xf32>
    %96 = math.exp %95 : vector<5x5xf32>
    %cst_43 = arith.constant dense<0.000000e+00> : vector<5xf32>
    %97 = vector.multi_reduction <add>, %96, %cst_43 [1] : vector<5x5xf32> to vector<5xf32>
    %98 = vector.shape_cast %97 : vector<5xf32> to vector<5x1xf32>
    %99 = arith.truncf %96 : vector<5x5xf32> to vector<5x5xbf16>
    %100 = arith.truncf %86 : vector<5x8xf32> to vector<5x8xbf16>
    %cst_44 = arith.constant dense<0.000000e+00> : vector<5x8xf32>
    %101 = tpu.matmul %99, %100, %cst_44 {dimension_numbers = #tpu.dot_dimension_numbers<[1], [0], [0], [1], [0, 0, 1, 1], [], []>} : vector<5x5xbf16>, vector<5x8xbf16>, vector<5x8xf32> -> vector<5x8xf32>
    %102 = tpu.reciprocal %98 {approx = true} : vector<5x1xf32> -> vector<5x1xf32>
    %103 = vector.broadcast %102 : vector<5x1xf32> to vector<5x8xf32>
    %104 = arith.mulf %101, %103 : vector<5x8xf32>
    %105 = vector.extract_strided_slice %53 {offsets = [8, 0], sizes = [8, 32], strides = [1, 1]} : vector<32x32xf32> to vector<8x32xf32>
    %106 = arith.truncf %104 : vector<5x8xf32> to vector<5x8xbf16>
    %107 = arith.truncf %105 : vector<8x32xf32> to vector<8x32xbf16>
    %cst_45 = arith.constant dense<0.000000e+00> : vector<5x32xf32>
    %108 = tpu.matmul %106, %107, %cst_45 {dimension_numbers = #tpu.dot_dimension_numbers<[1], [0], [0], [1], [0, 0, 1, 1], [], []>} : vector<5x8xbf16>, vector<8x32xbf16>, vector<5x32xf32> -> vector<5x32xf32>
    %109 = arith.addf %83, %108 : vector<5x32xf32>
    %110 = vector.extract_strided_slice %51 {offsets = [0, 16], sizes = [5, 8], strides = [1, 1]} : vector<5x96xf32> to vector<5x8xf32>
    %111 = vector.extract_strided_slice %51 {offsets = [0, 48], sizes = [5, 8], strides = [1, 1]} : vector<5x96xf32> to vector<5x8xf32>
    %112 = vector.extract_strided_slice %51 {offsets = [0, 80], sizes = [5, 8], strides = [1, 1]} : vector<5x96xf32> to vector<5x8xf32>
    %113 = arith.truncf %110 : vector<5x8xf32> to vector<5x8xbf16>
    %114 = arith.truncf %111 : vector<5x8xf32> to vector<5x8xbf16>
    %cst_46 = arith.constant dense<0.000000e+00> : vector<5x5xf32>
    %115 = tpu.matmul %113, %114, %cst_46 {dimension_numbers = #tpu.dot_dimension_numbers<[1], [1], [0], [0], [0, 0, 1, 0], [], []>} : vector<5x8xbf16>, vector<5x8xbf16>, vector<5x5xf32> -> vector<5x5xf32>
    %cst_47 = arith.constant 0.353553385 : f32
    %116 = vector.broadcast %cst_47 : f32 to vector<5x5xf32>
    %117 = arith.mulf %115, %116 : vector<5x5xf32>
    %cst_48 = arith.constant dense<0xFF800000> : vector<5xf32>
    %118 = vector.multi_reduction <maximumf>, %117, %cst_48 [1] : vector<5x5xf32> to vector<5xf32>
    %119 = vector.shape_cast %118 : vector<5xf32> to vector<5x1xf32>
    %120 = vector.broadcast %119 : vector<5x1xf32> to vector<5x5xf32>
    %121 = arith.subf %117, %120 : vector<5x5xf32>
    %122 = math.exp %121 : vector<5x5xf32>
    %cst_49 = arith.constant dense<0.000000e+00> : vector<5xf32>
    %123 = vector.multi_reduction <add>, %122, %cst_49 [1] : vector<5x5xf32> to vector<5xf32>
    %124 = vector.shape_cast %123 : vector<5xf32> to vector<5x1xf32>
    %125 = arith.truncf %122 : vector<5x5xf32> to vector<5x5xbf16>
    %126 = arith.truncf %112 : vector<5x8xf32> to vector<5x8xbf16>
    %cst_50 = arith.constant dense<0.000000e+00> : vector<5x8xf32>
    %127 = tpu.matmul %125, %126, %cst_50 {dimension_numbers = #tpu.dot_dimension_numbers<[1], [0], [0], [1], [0, 0, 1, 1], [], []>} : vector<5x5xbf16>, vector<5x8xbf16>, vector<5x8xf32> -> vector<5x8xf32>
    %128 = tpu.reciprocal %124 {approx = true} : vector<5x1xf32> -> vector<5x1xf32>
    %129 = vector.broadcast %128 : vector<5x1xf32> to vector<5x8xf32>
    %130 = arith.mulf %127, %129 : vector<5x8xf32>
    %131 = vector.extract_strided_slice %53 {offsets = [16, 0], sizes = [8, 32], strides = [1, 1]} : vector<32x32xf32> to vector<8x32xf32>
    %132 = arith.truncf %130 : vector<5x8xf32> to vector<5x8xbf16>
    %133 = arith.truncf %131 : vector<8x32xf32> to vector<8x32xbf16>
    %cst_51 = arith.constant dense<0.000000e+00> : vector<5x32xf32>
    %134 = tpu.matmul %132, %133, %cst_51 {dimension_numbers = #tpu.dot_dimension_numbers<[1], [0], [0], [1], [0, 0, 1, 1], [], []>} : vector<5x8xbf16>, vector<8x32xbf16>, vector<5x32xf32> -> vector<5x32xf32>
    %135 = arith.addf %109, %134 : vector<5x32xf32>
    %136 = vector.extract_strided_slice %51 {offsets = [0, 24], sizes = [5, 8], strides = [1, 1]} : vector<5x96xf32> to vector<5x8xf32>
    %137 = vector.extract_strided_slice %51 {offsets = [0, 56], sizes = [5, 8], strides = [1, 1]} : vector<5x96xf32> to vector<5x8xf32>
    %138 = vector.extract_strided_slice %51 {offsets = [0, 88], sizes = [5, 8], strides = [1, 1]} : vector<5x96xf32> to vector<5x8xf32>
    %139 = arith.truncf %136 : vector<5x8xf32> to vector<5x8xbf16>
    %140 = arith.truncf %137 : vector<5x8xf32> to vector<5x8xbf16>
    %cst_52 = arith.constant dense<0.000000e+00> : vector<5x5xf32>
    %141 = tpu.matmul %139, %140, %cst_52 {dimension_numbers = #tpu.dot_dimension_numbers<[1], [1], [0], [0], [0, 0, 1, 0], [], []>} : vector<5x8xbf16>, vector<5x8xbf16>, vector<5x5xf32> -> vector<5x5xf32>
    %cst_53 = arith.constant 0.353553385 : f32
    %142 = vector.broadcast %cst_53 : f32 to vector<5x5xf32>
    %143 = arith.mulf %141, %142 : vector<5x5xf32>
    %cst_54 = arith.constant dense<0xFF800000> : vector<5xf32>
    %144 = vector.multi_reduction <maximumf>, %143, %cst_54 [1] : vector<5x5xf32> to vector<5xf32>
    %145 = vector.shape_cast %144 : vector<5xf32> to vector<5x1xf32>
    %146 = vector.broadcast %145 : vector<5x1xf32> to vector<5x5xf32>
    %147 = arith.subf %143, %146 : vector<5x5xf32>
    %148 = math.exp %147 : vector<5x5xf32>
    %cst_55 = arith.constant dense<0.000000e+00> : vector<5xf32>
    %149 = vector.multi_reduction <add>, %148, %cst_55 [1] : vector<5x5xf32> to vector<5xf32>
    %150 = vector.shape_cast %149 : vector<5xf32> to vector<5x1xf32>
    %151 = arith.truncf %148 : vector<5x5xf32> to vector<5x5xbf16>
    %152 = arith.truncf %138 : vector<5x8xf32> to vector<5x8xbf16>
    %cst_56 = arith.constant dense<0.000000e+00> : vector<5x8xf32>
    %153 = tpu.matmul %151, %152, %cst_56 {dimension_numbers = #tpu.dot_dimension_numbers<[1], [0], [0], [1], [0, 0, 1, 1], [], []>} : vector<5x5xbf16>, vector<5x8xbf16>, vector<5x8xf32> -> vector<5x8xf32>
    %154 = tpu.reciprocal %150 {approx = true} : vector<5x1xf32> -> vector<5x1xf32>
    %155 = vector.broadcast %154 : vector<5x1xf32> to vector<5x8xf32>
    %156 = arith.mulf %153, %155 : vector<5x8xf32>
    %157 = vector.extract_strided_slice %53 {offsets = [24, 0], sizes = [8, 32], strides = [1, 1]} : vector<32x32xf32> to vector<8x32xf32>
    %158 = arith.truncf %156 : vector<5x8xf32> to vector<5x8xbf16>
    %159 = arith.truncf %157 : vector<8x32xf32> to vector<8x32xbf16>
    %cst_57 = arith.constant dense<0.000000e+00> : vector<5x32xf32>
    %160 = tpu.matmul %158, %159, %cst_57 {dimension_numbers = #tpu.dot_dimension_numbers<[1], [0], [0], [1], [0, 0, 1, 1], [], []>} : vector<5x8xbf16>, vector<8x32xbf16>, vector<5x32xf32> -> vector<5x32xf32>
    %161 = arith.addf %135, %160 : vector<5x32xf32>
    %162 = arith.addf %18, %161 : vector<5x32xf32>
    %c0_58 = arith.constant 0 : index
    %c0_59 = arith.constant 0 : index
    %c0_60 = arith.constant 0 : index
    %163 = vector.load %arg12[%c0_58, %c0_59, %c0_60] : memref<2x1x32xf32, #tpu.memory_space<vmem>>, vector<1x1x32xf32>
    %164 = vector.shape_cast %163 : vector<1x1x32xf32> to vector<1x32xf32>
    %c0_61 = arith.constant 0 : index
    %c0_62 = arith.constant 0 : index
    %c0_63 = arith.constant 0 : index
    %165 = vector.load %arg13[%c0_61, %c0_62, %c0_63] : memref<2x1x32xf32, #tpu.memory_space<vmem>>, vector<1x1x32xf32>
    %166 = vector.shape_cast %165 : vector<1x1x32xf32> to vector<1x32xf32>
    %cst_64 = arith.constant dense<0.000000e+00> : vector<5xf32>
    %167 = vector.multi_reduction <add>, %162, %cst_64 [1] : vector<5x32xf32> to vector<5xf32>
    %168 = vector.shape_cast %167 : vector<5xf32> to vector<5x1xf32>
    %cst_65 = arith.constant 3.200000e+01 : f32
    %169 = vector.broadcast %cst_65 : f32 to vector<5x1xf32>
    %170 = arith.divf %168, %169 : vector<5x1xf32>
    %171 = vector.broadcast %170 : vector<5x1xf32> to vector<5x32xf32>
    %172 = arith.subf %162, %171 : vector<5x32xf32>
    %173 = arith.mulf %172, %172 : vector<5x32xf32>
    %cst_66 = arith.constant dense<0.000000e+00> : vector<5xf32>
    %174 = vector.multi_reduction <add>, %173, %cst_66 [1] : vector<5x32xf32> to vector<5xf32>
    %175 = vector.shape_cast %174 : vector<5xf32> to vector<5x1xf32>
    %cst_67 = arith.constant 3.200000e+01 : f32
    %176 = vector.broadcast %cst_67 : f32 to vector<5x1xf32>
    %177 = arith.divf %175, %176 : vector<5x1xf32>
    %cst_68 = arith.constant 9.99999997E-7 : f32
    %178 = vector.broadcast %cst_68 : f32 to vector<5x1xf32>
    %179 = arith.addf %177, %178 : vector<5x1xf32>
    %180 = math.rsqrt %179 : vector<5x1xf32>
    %181 = vector.broadcast %180 : vector<5x1xf32> to vector<5x32xf32>
    %182 = arith.mulf %172, %181 : vector<5x32xf32>
    %183 = vector.broadcast %164 : vector<1x32xf32> to vector<5x32xf32>
    %184 = arith.mulf %182, %183 : vector<5x32xf32>
    %185 = vector.broadcast %166 : vector<1x32xf32> to vector<5x32xf32>
    %186 = arith.addf %184, %185 : vector<5x32xf32>
    %c0_69 = arith.constant 0 : index
    %c0_70 = arith.constant 0 : index
    %c0_71 = arith.constant 0 : index
    %187 = vector.load %arg14[%c0_69, %c0_70, %c0_71] : memref<2x32x128xf32, #tpu.memory_space<vmem>>, vector<1x32x128xf32>
    %188 = vector.shape_cast %187 : vector<1x32x128xf32> to vector<32x128xf32>
    %189 = arith.truncf %186 : vector<5x32xf32> to vector<5x32xbf16>
    %190 = arith.truncf %188 : vector<32x128xf32> to vector<32x128xbf16>
    %cst_72 = arith.constant dense<0.000000e+00> : vector<5x128xf32>
    %191 = tpu.matmul %189, %190, %cst_72 {dimension_numbers = #tpu.dot_dimension_numbers<[1], [0], [0], [1], [0, 0, 1, 1], [], []>} : vector<5x32xbf16>, vector<32x128xbf16>, vector<5x128xf32> -> vector<5x128xf32>
    %c0_73 = arith.constant 0 : index
    %c0_74 = arith.constant 0 : index
    %c0_75 = arith.constant 0 : index
    %192 = vector.load %arg15[%c0_73, %c0_74, %c0_75] : memref<2x1x128xf32, #tpu.memory_space<vmem>>, vector<1x1x128xf32>
    %193 = vector.shape_cast %192 : vector<1x1x128xf32> to vector<1x128xf32>
    %194 = vector.broadcast %193 : vector<1x128xf32> to vector<5x128xf32>
    %195 = arith.addf %191, %194 : vector<5x128xf32>
    %cst_76 = arith.constant 5.000000e-01 : f32
    %196 = vector.broadcast %cst_76 : f32 to vector<5x128xf32>
    %197 = arith.mulf %196, %195 : vector<5x128xf32>
    %cst_77 = arith.constant 0.707106769 : f32
    %198 = vector.broadcast %cst_77 : f32 to vector<5x128xf32>
    %199 = arith.mulf %195, %198 : vector<5x128xf32>
    %200 = math.erf %199 : vector<5x128xf32>
    %cst_78 = arith.constant 1.000000e+00 : f32
    %201 = vector.broadcast %cst_78 : f32 to vector<5x128xf32>
    %202 = arith.addf %201, %200 : vector<5x128xf32>
    %203 = arith.mulf %197, %202 : vector<5x128xf32>
    %c0_79 = arith.constant 0 : index
    %c0_80 = arith.constant 0 : index
    %c0_81 = arith.constant 0 : index
    %204 = vector.load %arg16[%c0_79, %c0_80, %c0_81] : memref<2x128x32xf32, #tpu.memory_space<vmem>>, vector<1x128x32xf32>
    %205 = vector.shape_cast %204 : vector<1x128x32xf32> to vector<128x32xf32>
    %206 = arith.truncf %203 : vector<5x128xf32> to vector<5x128xbf16>
    %207 = arith.truncf %205 : vector<128x32xf32> to vector<128x32xbf16>
    %cst_82 = arith.constant dense<0.000000e+00> : vector<5x32xf32>
    %208 = tpu.matmul %206, %207, %cst_82 {dimension_numbers = #tpu.dot_dimension_numbers<[1], [0], [0], [1], [0, 0, 1, 1], [], []>} : vector<5x128xbf16>, vector<128x32xbf16>, vector<5x32xf32> -> vector<5x32xf32>
    %c0_83 = arith.constant 0 : index
    %c0_84 = arith.constant 0 : index
    %c0_85 = arith.constant 0 : index
    %209 = vector.load %arg17[%c0_83, %c0_84, %c0_85] : memref<2x1x32xf32, #tpu.memory_space<vmem>>, vector<1x1x32xf32>
    %210 = vector.shape_cast %209 : vector<1x1x32xf32> to vector<1x32xf32>
    %211 = vector.broadcast %210 : vector<1x32xf32> to vector<5x32xf32>
    %212 = arith.addf %208, %211 : vector<5x32xf32>
    %213 = arith.addf %162, %212 : vector<5x32xf32>
    %c1 = arith.constant 1 : index
    %c0_86 = arith.constant 0 : index
    %c0_87 = arith.constant 0 : index
    %214 = vector.load %arg6[%c1, %c0_86, %c0_87] : memref<2x1x32xf32, #tpu.memory_space<vmem>>, vector<1x1x32xf32>
    %215 = vector.shape_cast %214 : vector<1x1x32xf32> to vector<1x32xf32>
    %c1_88 = arith.constant 1 : index
    %c0_89 = arith.constant 0 : index
    %c0_90 = arith.constant 0 : index
    %216 = vector.load %arg7[%c1_88, %c0_89, %c0_90] : memref<2x1x32xf32, #tpu.memory_space<vmem>>, vector<1x1x32xf32>
    %217 = vector.shape_cast %216 : vector<1x1x32xf32> to vector<1x32xf32>
    %cst_91 = arith.constant dense<0.000000e+00> : vector<5xf32>
    %218 = vector.multi_reduction <add>, %213, %cst_91 [1] : vector<5x32xf32> to vector<5xf32>
    %219 = vector.shape_cast %218 : vector<5xf32> to vector<5x1xf32>
    %cst_92 = arith.constant 3.200000e+01 : f32
    %220 = vector.broadcast %cst_92 : f32 to vector<5x1xf32>
    %221 = arith.divf %219, %220 : vector<5x1xf32>
    %222 = vector.broadcast %221 : vector<5x1xf32> to vector<5x32xf32>
    %223 = arith.subf %213, %222 : vector<5x32xf32>
    %224 = arith.mulf %223, %223 : vector<5x32xf32>
    %cst_93 = arith.constant dense<0.000000e+00> : vector<5xf32>
    %225 = vector.multi_reduction <add>, %224, %cst_93 [1] : vector<5x32xf32> to vector<5xf32>
    %226 = vector.shape_cast %225 : vector<5xf32> to vector<5x1xf32>
    %cst_94 = arith.constant 3.200000e+01 : f32
    %227 = vector.broadcast %cst_94 : f32 to vector<5x1xf32>
    %228 = arith.divf %226, %227 : vector<5x1xf32>
    %cst_95 = arith.constant 9.99999997E-7 : f32
    %229 = vector.broadcast %cst_95 : f32 to vector<5x1xf32>
    %230 = arith.addf %228, %229 : vector<5x1xf32>
    %231 = math.rsqrt %230 : vector<5x1xf32>
    %232 = vector.broadcast %231 : vector<5x1xf32> to vector<5x32xf32>
    %233 = arith.mulf %223, %232 : vector<5x32xf32>
    %234 = vector.broadcast %215 : vector<1x32xf32> to vector<5x32xf32>
    %235 = arith.mulf %233, %234 : vector<5x32xf32>
    %236 = vector.broadcast %217 : vector<1x32xf32> to vector<5x32xf32>
    %237 = arith.addf %235, %236 : vector<5x32xf32>
    %c1_96 = arith.constant 1 : index
    %c0_97 = arith.constant 0 : index
    %c0_98 = arith.constant 0 : index
    %238 = vector.load %arg8[%c1_96, %c0_97, %c0_98] : memref<2x32x96xf32, #tpu.memory_space<vmem>>, vector<1x32x96xf32>
    %239 = vector.shape_cast %238 : vector<1x32x96xf32> to vector<32x96xf32>
    %240 = arith.truncf %237 : vector<5x32xf32> to vector<5x32xbf16>
    %241 = arith.truncf %239 : vector<32x96xf32> to vector<32x96xbf16>
    %cst_99 = arith.constant dense<0.000000e+00> : vector<5x96xf32>
    %242 = tpu.matmul %240, %241, %cst_99 {dimension_numbers = #tpu.dot_dimension_numbers<[1], [0], [0], [1], [0, 0, 1, 1], [], []>} : vector<5x32xbf16>, vector<32x96xbf16>, vector<5x96xf32> -> vector<5x96xf32>
    %c1_100 = arith.constant 1 : index
    %c0_101 = arith.constant 0 : index
    %c0_102 = arith.constant 0 : index
    %243 = vector.load %arg9[%c1_100, %c0_101, %c0_102] : memref<2x1x96xf32, #tpu.memory_space<vmem>>, vector<1x1x96xf32>
    %244 = vector.shape_cast %243 : vector<1x1x96xf32> to vector<1x96xf32>
    %245 = vector.broadcast %244 : vector<1x96xf32> to vector<5x96xf32>
    %246 = arith.addf %242, %245 : vector<5x96xf32>
    %c1_103 = arith.constant 1 : index
    %c0_104 = arith.constant 0 : index
    %c0_105 = arith.constant 0 : index
    %247 = vector.load %arg10[%c1_103, %c0_104, %c0_105] : memref<2x32x32xf32, #tpu.memory_space<vmem>>, vector<1x32x32xf32>
    %248 = vector.shape_cast %247 : vector<1x32x32xf32> to vector<32x32xf32>
    %c1_106 = arith.constant 1 : index
    %c0_107 = arith.constant 0 : index
    %c0_108 = arith.constant 0 : index
    %249 = vector.load %arg11[%c1_106, %c0_107, %c0_108] : memref<2x1x32xf32, #tpu.memory_space<vmem>>, vector<1x1x32xf32>
    %250 = vector.shape_cast %249 : vector<1x1x32xf32> to vector<1x32xf32>
    %251 = vector.shape_cast %250 : vector<1x32xf32> to vector<1x32xf32>
    %252 = vector.broadcast %251 : vector<1x32xf32> to vector<5x32xf32>
    %253 = vector.extract_strided_slice %246 {offsets = [0, 0], sizes = [5, 8], strides = [1, 1]} : vector<5x96xf32> to vector<5x8xf32>
    %254 = vector.extract_strided_slice %246 {offsets = [0, 32], sizes = [5, 8], strides = [1, 1]} : vector<5x96xf32> to vector<5x8xf32>
    %255 = vector.extract_strided_slice %246 {offsets = [0, 64], sizes = [5, 8], strides = [1, 1]} : vector<5x96xf32> to vector<5x8xf32>
    %256 = arith.truncf %253 : vector<5x8xf32> to vector<5x8xbf16>
    %257 = arith.truncf %254 : vector<5x8xf32> to vector<5x8xbf16>
    %cst_109 = arith.constant dense<0.000000e+00> : vector<5x5xf32>
    %258 = tpu.matmul %256, %257, %cst_109 {dimension_numbers = #tpu.dot_dimension_numbers<[1], [1], [0], [0], [0, 0, 1, 0], [], []>} : vector<5x8xbf16>, vector<5x8xbf16>, vector<5x5xf32> -> vector<5x5xf32>
    %cst_110 = arith.constant 0.353553385 : f32
    %259 = vector.broadcast %cst_110 : f32 to vector<5x5xf32>
    %260 = arith.mulf %258, %259 : vector<5x5xf32>
    %cst_111 = arith.constant dense<0xFF800000> : vector<5xf32>
    %261 = vector.multi_reduction <maximumf>, %260, %cst_111 [1] : vector<5x5xf32> to vector<5xf32>
    %262 = vector.shape_cast %261 : vector<5xf32> to vector<5x1xf32>
    %263 = vector.broadcast %262 : vector<5x1xf32> to vector<5x5xf32>
    %264 = arith.subf %260, %263 : vector<5x5xf32>
    %265 = math.exp %264 : vector<5x5xf32>
    %cst_112 = arith.constant dense<0.000000e+00> : vector<5xf32>
    %266 = vector.multi_reduction <add>, %265, %cst_112 [1] : vector<5x5xf32> to vector<5xf32>
    %267 = vector.shape_cast %266 : vector<5xf32> to vector<5x1xf32>
    %268 = arith.truncf %265 : vector<5x5xf32> to vector<5x5xbf16>
    %269 = arith.truncf %255 : vector<5x8xf32> to vector<5x8xbf16>
    %cst_113 = arith.constant dense<0.000000e+00> : vector<5x8xf32>
    %270 = tpu.matmul %268, %269, %cst_113 {dimension_numbers = #tpu.dot_dimension_numbers<[1], [0], [0], [1], [0, 0, 1, 1], [], []>} : vector<5x5xbf16>, vector<5x8xbf16>, vector<5x8xf32> -> vector<5x8xf32>
    %271 = tpu.reciprocal %267 {approx = true} : vector<5x1xf32> -> vector<5x1xf32>
    %272 = vector.broadcast %271 : vector<5x1xf32> to vector<5x8xf32>
    %273 = arith.mulf %270, %272 : vector<5x8xf32>
    %274 = vector.extract_strided_slice %248 {offsets = [0, 0], sizes = [8, 32], strides = [1, 1]} : vector<32x32xf32> to vector<8x32xf32>
    %275 = arith.truncf %273 : vector<5x8xf32> to vector<5x8xbf16>
    %276 = arith.truncf %274 : vector<8x32xf32> to vector<8x32xbf16>
    %cst_114 = arith.constant dense<0.000000e+00> : vector<5x32xf32>
    %277 = tpu.matmul %275, %276, %cst_114 {dimension_numbers = #tpu.dot_dimension_numbers<[1], [0], [0], [1], [0, 0, 1, 1], [], []>} : vector<5x8xbf16>, vector<8x32xbf16>, vector<5x32xf32> -> vector<5x32xf32>
    %278 = arith.addf %252, %277 : vector<5x32xf32>
    %279 = vector.extract_strided_slice %246 {offsets = [0, 8], sizes = [5, 8], strides = [1, 1]} : vector<5x96xf32> to vector<5x8xf32>
    %280 = vector.extract_strided_slice %246 {offsets = [0, 40], sizes = [5, 8], strides = [1, 1]} : vector<5x96xf32> to vector<5x8xf32>
    %281 = vector.extract_strided_slice %246 {offsets = [0, 72], sizes = [5, 8], strides = [1, 1]} : vector<5x96xf32> to vector<5x8xf32>
    %282 = arith.truncf %279 : vector<5x8xf32> to vector<5x8xbf16>
    %283 = arith.truncf %280 : vector<5x8xf32> to vector<5x8xbf16>
    %cst_115 = arith.constant dense<0.000000e+00> : vector<5x5xf32>
    %284 = tpu.matmul %282, %283, %cst_115 {dimension_numbers = #tpu.dot_dimension_numbers<[1], [1], [0], [0], [0, 0, 1, 0], [], []>} : vector<5x8xbf16>, vector<5x8xbf16>, vector<5x5xf32> -> vector<5x5xf32>
    %cst_116 = arith.constant 0.353553385 : f32
    %285 = vector.broadcast %cst_116 : f32 to vector<5x5xf32>
    %286 = arith.mulf %284, %285 : vector<5x5xf32>
    %cst_117 = arith.constant dense<0xFF800000> : vector<5xf32>
    %287 = vector.multi_reduction <maximumf>, %286, %cst_117 [1] : vector<5x5xf32> to vector<5xf32>
    %288 = vector.shape_cast %287 : vector<5xf32> to vector<5x1xf32>
    %289 = vector.broadcast %288 : vector<5x1xf32> to vector<5x5xf32>
    %290 = arith.subf %286, %289 : vector<5x5xf32>
    %291 = math.exp %290 : vector<5x5xf32>
    %cst_118 = arith.constant dense<0.000000e+00> : vector<5xf32>
    %292 = vector.multi_reduction <add>, %291, %cst_118 [1] : vector<5x5xf32> to vector<5xf32>
    %293 = vector.shape_cast %292 : vector<5xf32> to vector<5x1xf32>
    %294 = arith.truncf %291 : vector<5x5xf32> to vector<5x5xbf16>
    %295 = arith.truncf %281 : vector<5x8xf32> to vector<5x8xbf16>
    %cst_119 = arith.constant dense<0.000000e+00> : vector<5x8xf32>
    %296 = tpu.matmul %294, %295, %cst_119 {dimension_numbers = #tpu.dot_dimension_numbers<[1], [0], [0], [1], [0, 0, 1, 1], [], []>} : vector<5x5xbf16>, vector<5x8xbf16>, vector<5x8xf32> -> vector<5x8xf32>
    %297 = tpu.reciprocal %293 {approx = true} : vector<5x1xf32> -> vector<5x1xf32>
    %298 = vector.broadcast %297 : vector<5x1xf32> to vector<5x8xf32>
    %299 = arith.mulf %296, %298 : vector<5x8xf32>
    %300 = vector.extract_strided_slice %248 {offsets = [8, 0], sizes = [8, 32], strides = [1, 1]} : vector<32x32xf32> to vector<8x32xf32>
    %301 = arith.truncf %299 : vector<5x8xf32> to vector<5x8xbf16>
    %302 = arith.truncf %300 : vector<8x32xf32> to vector<8x32xbf16>
    %cst_120 = arith.constant dense<0.000000e+00> : vector<5x32xf32>
    %303 = tpu.matmul %301, %302, %cst_120 {dimension_numbers = #tpu.dot_dimension_numbers<[1], [0], [0], [1], [0, 0, 1, 1], [], []>} : vector<5x8xbf16>, vector<8x32xbf16>, vector<5x32xf32> -> vector<5x32xf32>
    %304 = arith.addf %278, %303 : vector<5x32xf32>
    %305 = vector.extract_strided_slice %246 {offsets = [0, 16], sizes = [5, 8], strides = [1, 1]} : vector<5x96xf32> to vector<5x8xf32>
    %306 = vector.extract_strided_slice %246 {offsets = [0, 48], sizes = [5, 8], strides = [1, 1]} : vector<5x96xf32> to vector<5x8xf32>
    %307 = vector.extract_strided_slice %246 {offsets = [0, 80], sizes = [5, 8], strides = [1, 1]} : vector<5x96xf32> to vector<5x8xf32>
    %308 = arith.truncf %305 : vector<5x8xf32> to vector<5x8xbf16>
    %309 = arith.truncf %306 : vector<5x8xf32> to vector<5x8xbf16>
    %cst_121 = arith.constant dense<0.000000e+00> : vector<5x5xf32>
    %310 = tpu.matmul %308, %309, %cst_121 {dimension_numbers = #tpu.dot_dimension_numbers<[1], [1], [0], [0], [0, 0, 1, 0], [], []>} : vector<5x8xbf16>, vector<5x8xbf16>, vector<5x5xf32> -> vector<5x5xf32>
    %cst_122 = arith.constant 0.353553385 : f32
    %311 = vector.broadcast %cst_122 : f32 to vector<5x5xf32>
    %312 = arith.mulf %310, %311 : vector<5x5xf32>
    %cst_123 = arith.constant dense<0xFF800000> : vector<5xf32>
    %313 = vector.multi_reduction <maximumf>, %312, %cst_123 [1] : vector<5x5xf32> to vector<5xf32>
    %314 = vector.shape_cast %313 : vector<5xf32> to vector<5x1xf32>
    %315 = vector.broadcast %314 : vector<5x1xf32> to vector<5x5xf32>
    %316 = arith.subf %312, %315 : vector<5x5xf32>
    %317 = math.exp %316 : vector<5x5xf32>
    %cst_124 = arith.constant dense<0.000000e+00> : vector<5xf32>
    %318 = vector.multi_reduction <add>, %317, %cst_124 [1] : vector<5x5xf32> to vector<5xf32>
    %319 = vector.shape_cast %318 : vector<5xf32> to vector<5x1xf32>
    %320 = arith.truncf %317 : vector<5x5xf32> to vector<5x5xbf16>
    %321 = arith.truncf %307 : vector<5x8xf32> to vector<5x8xbf16>
    %cst_125 = arith.constant dense<0.000000e+00> : vector<5x8xf32>
    %322 = tpu.matmul %320, %321, %cst_125 {dimension_numbers = #tpu.dot_dimension_numbers<[1], [0], [0], [1], [0, 0, 1, 1], [], []>} : vector<5x5xbf16>, vector<5x8xbf16>, vector<5x8xf32> -> vector<5x8xf32>
    %323 = tpu.reciprocal %319 {approx = true} : vector<5x1xf32> -> vector<5x1xf32>
    %324 = vector.broadcast %323 : vector<5x1xf32> to vector<5x8xf32>
    %325 = arith.mulf %322, %324 : vector<5x8xf32>
    %326 = vector.extract_strided_slice %248 {offsets = [16, 0], sizes = [8, 32], strides = [1, 1]} : vector<32x32xf32> to vector<8x32xf32>
    %327 = arith.truncf %325 : vector<5x8xf32> to vector<5x8xbf16>
    %328 = arith.truncf %326 : vector<8x32xf32> to vector<8x32xbf16>
    %cst_126 = arith.constant dense<0.000000e+00> : vector<5x32xf32>
    %329 = tpu.matmul %327, %328, %cst_126 {dimension_numbers = #tpu.dot_dimension_numbers<[1], [0], [0], [1], [0, 0, 1, 1], [], []>} : vector<5x8xbf16>, vector<8x32xbf16>, vector<5x32xf32> -> vector<5x32xf32>
    %330 = arith.addf %304, %329 : vector<5x32xf32>
    %331 = vector.extract_strided_slice %246 {offsets = [0, 24], sizes = [5, 8], strides = [1, 1]} : vector<5x96xf32> to vector<5x8xf32>
    %332 = vector.extract_strided_slice %246 {offsets = [0, 56], sizes = [5, 8], strides = [1, 1]} : vector<5x96xf32> to vector<5x8xf32>
    %333 = vector.extract_strided_slice %246 {offsets = [0, 88], sizes = [5, 8], strides = [1, 1]} : vector<5x96xf32> to vector<5x8xf32>
    %334 = arith.truncf %331 : vector<5x8xf32> to vector<5x8xbf16>
    %335 = arith.truncf %332 : vector<5x8xf32> to vector<5x8xbf16>
    %cst_127 = arith.constant dense<0.000000e+00> : vector<5x5xf32>
    %336 = tpu.matmul %334, %335, %cst_127 {dimension_numbers = #tpu.dot_dimension_numbers<[1], [1], [0], [0], [0, 0, 1, 0], [], []>} : vector<5x8xbf16>, vector<5x8xbf16>, vector<5x5xf32> -> vector<5x5xf32>
    %cst_128 = arith.constant 0.353553385 : f32
    %337 = vector.broadcast %cst_128 : f32 to vector<5x5xf32>
    %338 = arith.mulf %336, %337 : vector<5x5xf32>
    %cst_129 = arith.constant dense<0xFF800000> : vector<5xf32>
    %339 = vector.multi_reduction <maximumf>, %338, %cst_129 [1] : vector<5x5xf32> to vector<5xf32>
    %340 = vector.shape_cast %339 : vector<5xf32> to vector<5x1xf32>
    %341 = vector.broadcast %340 : vector<5x1xf32> to vector<5x5xf32>
    %342 = arith.subf %338, %341 : vector<5x5xf32>
    %343 = math.exp %342 : vector<5x5xf32>
    %cst_130 = arith.constant dense<0.000000e+00> : vector<5xf32>
    %344 = vector.multi_reduction <add>, %343, %cst_130 [1] : vector<5x5xf32> to vector<5xf32>
    %345 = vector.shape_cast %344 : vector<5xf32> to vector<5x1xf32>
    %346 = arith.truncf %343 : vector<5x5xf32> to vector<5x5xbf16>
    %347 = arith.truncf %333 : vector<5x8xf32> to vector<5x8xbf16>
    %cst_131 = arith.constant dense<0.000000e+00> : vector<5x8xf32>
    %348 = tpu.matmul %346, %347, %cst_131 {dimension_numbers = #tpu.dot_dimension_numbers<[1], [0], [0], [1], [0, 0, 1, 1], [], []>} : vector<5x5xbf16>, vector<5x8xbf16>, vector<5x8xf32> -> vector<5x8xf32>
    %349 = tpu.reciprocal %345 {approx = true} : vector<5x1xf32> -> vector<5x1xf32>
    %350 = vector.broadcast %349 : vector<5x1xf32> to vector<5x8xf32>
    %351 = arith.mulf %348, %350 : vector<5x8xf32>
    %352 = vector.extract_strided_slice %248 {offsets = [24, 0], sizes = [8, 32], strides = [1, 1]} : vector<32x32xf32> to vector<8x32xf32>
    %353 = arith.truncf %351 : vector<5x8xf32> to vector<5x8xbf16>
    %354 = arith.truncf %352 : vector<8x32xf32> to vector<8x32xbf16>
    %cst_132 = arith.constant dense<0.000000e+00> : vector<5x32xf32>
    %355 = tpu.matmul %353, %354, %cst_132 {dimension_numbers = #tpu.dot_dimension_numbers<[1], [0], [0], [1], [0, 0, 1, 1], [], []>} : vector<5x8xbf16>, vector<8x32xbf16>, vector<5x32xf32> -> vector<5x32xf32>
    %356 = arith.addf %330, %355 : vector<5x32xf32>
    %357 = arith.addf %213, %356 : vector<5x32xf32>
    %c1_133 = arith.constant 1 : index
    %c0_134 = arith.constant 0 : index
    %c0_135 = arith.constant 0 : index
    %358 = vector.load %arg12[%c1_133, %c0_134, %c0_135] : memref<2x1x32xf32, #tpu.memory_space<vmem>>, vector<1x1x32xf32>
    %359 = vector.shape_cast %358 : vector<1x1x32xf32> to vector<1x32xf32>
    %c1_136 = arith.constant 1 : index
    %c0_137 = arith.constant 0 : index
    %c0_138 = arith.constant 0 : index
    %360 = vector.load %arg13[%c1_136, %c0_137, %c0_138] : memref<2x1x32xf32, #tpu.memory_space<vmem>>, vector<1x1x32xf32>
    %361 = vector.shape_cast %360 : vector<1x1x32xf32> to vector<1x32xf32>
    %cst_139 = arith.constant dense<0.000000e+00> : vector<5xf32>
    %362 = vector.multi_reduction <add>, %357, %cst_139 [1] : vector<5x32xf32> to vector<5xf32>
    %363 = vector.shape_cast %362 : vector<5xf32> to vector<5x1xf32>
    %cst_140 = arith.constant 3.200000e+01 : f32
    %364 = vector.broadcast %cst_140 : f32 to vector<5x1xf32>
    %365 = arith.divf %363, %364 : vector<5x1xf32>
    %366 = vector.broadcast %365 : vector<5x1xf32> to vector<5x32xf32>
    %367 = arith.subf %357, %366 : vector<5x32xf32>
    %368 = arith.mulf %367, %367 : vector<5x32xf32>
    %cst_141 = arith.constant dense<0.000000e+00> : vector<5xf32>
    %369 = vector.multi_reduction <add>, %368, %cst_141 [1] : vector<5x32xf32> to vector<5xf32>
    %370 = vector.shape_cast %369 : vector<5xf32> to vector<5x1xf32>
    %cst_142 = arith.constant 3.200000e+01 : f32
    %371 = vector.broadcast %cst_142 : f32 to vector<5x1xf32>
    %372 = arith.divf %370, %371 : vector<5x1xf32>
    %cst_143 = arith.constant 9.99999997E-7 : f32
    %373 = vector.broadcast %cst_143 : f32 to vector<5x1xf32>
    %374 = arith.addf %372, %373 : vector<5x1xf32>
    %375 = math.rsqrt %374 : vector<5x1xf32>
    %376 = vector.broadcast %375 : vector<5x1xf32> to vector<5x32xf32>
    %377 = arith.mulf %367, %376 : vector<5x32xf32>
    %378 = vector.broadcast %359 : vector<1x32xf32> to vector<5x32xf32>
    %379 = arith.mulf %377, %378 : vector<5x32xf32>
    %380 = vector.broadcast %361 : vector<1x32xf32> to vector<5x32xf32>
    %381 = arith.addf %379, %380 : vector<5x32xf32>
    %c1_144 = arith.constant 1 : index
    %c0_145 = arith.constant 0 : index
    %c0_146 = arith.constant 0 : index
    %382 = vector.load %arg14[%c1_144, %c0_145, %c0_146] : memref<2x32x128xf32, #tpu.memory_space<vmem>>, vector<1x32x128xf32>
    %383 = vector.shape_cast %382 : vector<1x32x128xf32> to vector<32x128xf32>
    %384 = arith.truncf %381 : vector<5x32xf32> to vector<5x32xbf16>
    %385 = arith.truncf %383 : vector<32x128xf32> to vector<32x128xbf16>
    %cst_147 = arith.constant dense<0.000000e+00> : vector<5x128xf32>
    %386 = tpu.matmul %384, %385, %cst_147 {dimension_numbers = #tpu.dot_dimension_numbers<[1], [0], [0], [1], [0, 0, 1, 1], [], []>} : vector<5x32xbf16>, vector<32x128xbf16>, vector<5x128xf32> -> vector<5x128xf32>
    %c1_148 = arith.constant 1 : index
    %c0_149 = arith.constant 0 : index
    %c0_150 = arith.constant 0 : index
    %387 = vector.load %arg15[%c1_148, %c0_149, %c0_150] : memref<2x1x128xf32, #tpu.memory_space<vmem>>, vector<1x1x128xf32>
    %388 = vector.shape_cast %387 : vector<1x1x128xf32> to vector<1x128xf32>
    %389 = vector.broadcast %388 : vector<1x128xf32> to vector<5x128xf32>
    %390 = arith.addf %386, %389 : vector<5x128xf32>
    %cst_151 = arith.constant 5.000000e-01 : f32
    %391 = vector.broadcast %cst_151 : f32 to vector<5x128xf32>
    %392 = arith.mulf %391, %390 : vector<5x128xf32>
    %cst_152 = arith.constant 0.707106769 : f32
    %393 = vector.broadcast %cst_152 : f32 to vector<5x128xf32>
    %394 = arith.mulf %390, %393 : vector<5x128xf32>
    %395 = math.erf %394 : vector<5x128xf32>
    %cst_153 = arith.constant 1.000000e+00 : f32
    %396 = vector.broadcast %cst_153 : f32 to vector<5x128xf32>
    %397 = arith.addf %396, %395 : vector<5x128xf32>
    %398 = arith.mulf %392, %397 : vector<5x128xf32>
    %c1_154 = arith.constant 1 : index
    %c0_155 = arith.constant 0 : index
    %c0_156 = arith.constant 0 : index
    %399 = vector.load %arg16[%c1_154, %c0_155, %c0_156] : memref<2x128x32xf32, #tpu.memory_space<vmem>>, vector<1x128x32xf32>
    %400 = vector.shape_cast %399 : vector<1x128x32xf32> to vector<128x32xf32>
    %401 = arith.truncf %398 : vector<5x128xf32> to vector<5x128xbf16>
    %402 = arith.truncf %400 : vector<128x32xf32> to vector<128x32xbf16>
    %cst_157 = arith.constant dense<0.000000e+00> : vector<5x32xf32>
    %403 = tpu.matmul %401, %402, %cst_157 {dimension_numbers = #tpu.dot_dimension_numbers<[1], [0], [0], [1], [0, 0, 1, 1], [], []>} : vector<5x128xbf16>, vector<128x32xbf16>, vector<5x32xf32> -> vector<5x32xf32>
    %c1_158 = arith.constant 1 : index
    %c0_159 = arith.constant 0 : index
    %c0_160 = arith.constant 0 : index
    %404 = vector.load %arg17[%c1_158, %c0_159, %c0_160] : memref<2x1x32xf32, #tpu.memory_space<vmem>>, vector<1x1x32xf32>
    %405 = vector.shape_cast %404 : vector<1x1x32xf32> to vector<1x32xf32>
    %406 = vector.broadcast %405 : vector<1x32xf32> to vector<5x32xf32>
    %407 = arith.addf %403, %406 : vector<5x32xf32>
    %408 = arith.addf %357, %407 : vector<5x32xf32>
    %409 = vector.extract_strided_slice %408 {offsets = [0, 0], sizes = [1, 32], strides = [1, 1]} : vector<5x32xf32> to vector<1x32xf32>
    %c0_161 = arith.constant 0 : index
    %c0_162 = arith.constant 0 : index
    %410 = vector.load %arg18[%c0_161, %c0_162] : memref<1x32xf32, #tpu.memory_space<vmem>>, vector<1x32xf32>
    %c0_163 = arith.constant 0 : index
    %c0_164 = arith.constant 0 : index
    %411 = vector.load %arg19[%c0_163, %c0_164] : memref<1x32xf32, #tpu.memory_space<vmem>>, vector<1x32xf32>
    %cst_165 = arith.constant dense<0.000000e+00> : vector<1xf32>
    %412 = vector.multi_reduction <add>, %409, %cst_165 [1] : vector<1x32xf32> to vector<1xf32>
    %413 = vector.shape_cast %412 : vector<1xf32> to vector<1x1xf32>
    %cst_166 = arith.constant 3.200000e+01 : f32
    %414 = vector.broadcast %cst_166 : f32 to vector<1x1xf32>
    %415 = arith.divf %413, %414 : vector<1x1xf32>
    %416 = vector.broadcast %415 : vector<1x1xf32> to vector<1x32xf32>
    %417 = arith.subf %409, %416 : vector<1x32xf32>
    %418 = arith.mulf %417, %417 : vector<1x32xf32>
    %cst_167 = arith.constant dense<0.000000e+00> : vector<1xf32>
    %419 = vector.multi_reduction <add>, %418, %cst_167 [1] : vector<1x32xf32> to vector<1xf32>
    %420 = vector.shape_cast %419 : vector<1xf32> to vector<1x1xf32>
    %cst_168 = arith.constant 3.200000e+01 : f32
    %421 = vector.broadcast %cst_168 : f32 to vector<1x1xf32>
    %422 = arith.divf %420, %421 : vector<1x1xf32>
    %cst_169 = arith.constant 9.99999997E-7 : f32
    %423 = vector.broadcast %cst_169 : f32 to vector<1x1xf32>
    %424 = arith.addf %422, %423 : vector<1x1xf32>
    %425 = math.rsqrt %424 : vector<1x1xf32>
    %426 = vector.broadcast %425 : vector<1x1xf32> to vector<1x32xf32>
    %427 = arith.mulf %417, %426 : vector<1x32xf32>
    %428 = arith.mulf %427, %410 : vector<1x32xf32>
    %429 = arith.addf %428, %411 : vector<1x32xf32>
    %c0_170 = arith.constant 0 : index
    %c0_171 = arith.constant 0 : index
    %430 = vector.load %arg20[%c0_170, %c0_171] : memref<32x4xf32, #tpu.memory_space<vmem>>, vector<32x4xf32>
    %431 = arith.truncf %429 : vector<1x32xf32> to vector<1x32xbf16>
    %432 = arith.truncf %430 : vector<32x4xf32> to vector<32x4xbf16>
    %cst_172 = arith.constant dense<0.000000e+00> : vector<1x4xf32>
    %433 = tpu.matmul %431, %432, %cst_172 {dimension_numbers = #tpu.dot_dimension_numbers<[1], [0], [0], [1], [0, 0, 1, 1], [], []>} : vector<1x32xbf16>, vector<32x4xbf16>, vector<1x4xf32> -> vector<1x4xf32>
    %c0_173 = arith.constant 0 : index
    %c0_174 = arith.constant 0 : index
    %434 = vector.load %arg21[%c0_173, %c0_174] : memref<1x4xf32, #tpu.memory_space<vmem>>, vector<1x4xf32>
    %435 = arith.addf %433, %434 : vector<1x4xf32>
    %c0_175 = arith.constant 0 : index
    %c0_176 = arith.constant 0 : index
    %c0_177 = arith.constant 0 : index
    %436 = vector.load %arg22[%c0_175, %c0_176, %c0_177] : memref<1x1x4xf32, #tpu.memory_space<vmem>>, vector<1x1x4xf32>
    %437 = vector.shape_cast %436 : vector<1x1x4xf32> to vector<1x4xf32>
    %438 = vector.shape_cast %435 : vector<1x4xf32> to vector<1x1x4xf32>
    tpu.vector_store %arg22[%c0_175, %c0_176, %c0_177], %438 {strides = array<i32>} : memref<1x1x4xf32, #tpu.memory_space<vmem>>, vector<1x1x4xf32>,
    return
  }
  func.func @transform_0(%arg0: i32) -> (i32, i32, i32) {
    %c0_i32 = arith.constant 0 : i32
    %c0_i32_0 = arith.constant 0 : i32
    %c0_i32_1 = arith.constant 0 : i32
    return %arg0, %c0_i32, %c0_i32_0 : i32, i32, i32
  }
  func.func @transform_1(%arg0: i32) -> (i32, i32) {
    %c0_i32 = arith.constant 0 : i32
    %c0_i32_0 = arith.constant 0 : i32
    %c0_i32_1 = arith.constant 0 : i32
    return %c0_i32, %c0_i32_0 : i32, i32
  }
  func.func @transform_2(%arg0: i32) -> (i32, i32) {
    %c0_i32 = arith.constant 0 : i32
    %c0_i32_0 = arith.constant 0 : i32
    %c0_i32_1 = arith.constant 0 : i32
    return %c0_i32, %c0_i32_0 : i32, i32
  }
  func.func @transform_3(%arg0: i32) -> (i32, i32) {
    %c0_i32 = arith.constant 0 : i32
    %c0_i32_0 = arith.constant 0 : i32
    %c0_i32_1 = arith.constant 0 : i32
    return %c0_i32, %c0_i32_0 : i32, i32
  }
  func.func @transform_4(%arg0: i32) -> (i32, i32) {
    %c0_i32 = arith.constant 0 : i32
    %c0_i32_0 = arith.constant 0 : i32
    %c0_i32_1 = arith.constant 0 : i32
    return %c0_i32, %c0_i32_0 : i32, i32
  }
  func.func @transform_5(%arg0: i32) -> (i32, i32, i32) {
    %c0_i32 = arith.constant 0 : i32
    %c0_i32_0 = arith.constant 0 : i32
    %c0_i32_1 = arith.constant 0 : i32
    %c0_i32_2 = arith.constant 0 : i32
    return %c0_i32, %c0_i32_0, %c0_i32_1 : i32, i32, i32
  }
  func.func @transform_6(%arg0: i32) -> (i32, i32, i32) {
    %c0_i32 = arith.constant 0 : i32
    %c0_i32_0 = arith.constant 0 : i32
    %c0_i32_1 = arith.constant 0 : i32
    %c0_i32_2 = arith.constant 0 : i32
    return %c0_i32, %c0_i32_0, %c0_i32_1 : i32, i32, i32
  }
  func.func @transform_7(%arg0: i32) -> (i32, i32, i32) {
    %c0_i32 = arith.constant 0 : i32
    %c0_i32_0 = arith.constant 0 : i32
    %c0_i32_1 = arith.constant 0 : i32
    %c0_i32_2 = arith.constant 0 : i32
    return %c0_i32, %c0_i32_0, %c0_i32_1 : i32, i32, i32
  }
  func.func @transform_8(%arg0: i32) -> (i32, i32, i32) {
    %c0_i32 = arith.constant 0 : i32
    %c0_i32_0 = arith.constant 0 : i32
    %c0_i32_1 = arith.constant 0 : i32
    %c0_i32_2 = arith.constant 0 : i32
    return %c0_i32, %c0_i32_0, %c0_i32_1 : i32, i32, i32
  }
  func.func @transform_9(%arg0: i32) -> (i32, i32, i32) {
    %c0_i32 = arith.constant 0 : i32
    %c0_i32_0 = arith.constant 0 : i32
    %c0_i32_1 = arith.constant 0 : i32
    %c0_i32_2 = arith.constant 0 : i32
    return %c0_i32, %c0_i32_0, %c0_i32_1 : i32, i32, i32
  }
  func.func @transform_10(%arg0: i32) -> (i32, i32, i32) {
    %c0_i32 = arith.constant 0 : i32
    %c0_i32_0 = arith.constant 0 : i32
    %c0_i32_1 = arith.constant 0 : i32
    %c0_i32_2 = arith.constant 0 : i32
    return %c0_i32, %c0_i32_0, %c0_i32_1 : i32, i32, i32
  }
  func.func @transform_11(%arg0: i32) -> (i32, i32, i32) {
    %c0_i32 = arith.constant 0 : i32
    %c0_i32_0 = arith.constant 0 : i32
    %c0_i32_1 = arith.constant 0 : i32
    %c0_i32_2 = arith.constant 0 : i32
    return %c0_i32, %c0_i32_0, %c0_i32_1 : i32, i32, i32
  }
  func.func @transform_12(%arg0: i32) -> (i32, i32, i32) {
    %c0_i32 = arith.constant 0 : i32
    %c0_i32_0 = arith.constant 0 : i32
    %c0_i32_1 = arith.constant 0 : i32
    %c0_i32_2 = arith.constant 0 : i32
    return %c0_i32, %c0_i32_0, %c0_i32_1 : i32, i32, i32
  }
  func.func @transform_13(%arg0: i32) -> (i32, i32, i32) {
    %c0_i32 = arith.constant 0 : i32
    %c0_i32_0 = arith.constant 0 : i32
    %c0_i32_1 = arith.constant 0 : i32
    %c0_i32_2 = arith.constant 0 : i32
    return %c0_i32, %c0_i32_0, %c0_i32_1 : i32, i32, i32
  }
  func.func @transform_14(%arg0: i32) -> (i32, i32, i32) {
    %c0_i32 = arith.constant 0 : i32
    %c0_i32_0 = arith.constant 0 : i32
    %c0_i32_1 = arith.constant 0 : i32
    %c0_i32_2 = arith.constant 0 : i32
    return %c0_i32, %c0_i32_0, %c0_i32_1 : i32, i32, i32
  }
  func.func @transform_15(%arg0: i32) -> (i32, i32, i32) {
    %c0_i32 = arith.constant 0 : i32
    %c0_i32_0 = arith.constant 0 : i32
    %c0_i32_1 = arith.constant 0 : i32
    %c0_i32_2 = arith.constant 0 : i32
    return %c0_i32, %c0_i32_0, %c0_i32_1 : i32, i32, i32
  }
  func.func @transform_16(%arg0: i32) -> (i32, i32, i32) {
    %c0_i32 = arith.constant 0 : i32
    %c0_i32_0 = arith.constant 0 : i32
    %c0_i32_1 = arith.constant 0 : i32
    %c0_i32_2 = arith.constant 0 : i32
    return %c0_i32, %c0_i32_0, %c0_i32_1 : i32, i32, i32
  }
  func.func @transform_17(%arg0: i32) -> (i32, i32) {
    %c0_i32 = arith.constant 0 : i32
    %c0_i32_0 = arith.constant 0 : i32
    %c0_i32_1 = arith.constant 0 : i32
    return %c0_i32, %c0_i32_0 : i32, i32
  }
  func.func @transform_18(%arg0: i32) -> (i32, i32) {
    %c0_i32 = arith.constant 0 : i32
    %c0_i32_0 = arith.constant 0 : i32
    %c0_i32_1 = arith.constant 0 : i32
    return %c0_i32, %c0_i32_0 : i32, i32
  }
  func.func @transform_19(%arg0: i32) -> (i32, i32) {
    %c0_i32 = arith.constant 0 : i32
    %c0_i32_0 = arith.constant 0 : i32
    %c0_i32_1 = arith.constant 0 : i32
    return %c0_i32, %c0_i32_0 : i32, i32
  }
  func.func @transform_20(%arg0: i32) -> (i32, i32) {
    %c0_i32 = arith.constant 0 : i32
    %c0_i32_0 = arith.constant 0 : i32
    %c0_i32_1 = arith.constant 0 : i32
    return %c0_i32, %c0_i32_0 : i32, i32
  }
  func.func @transform_21(%arg0: i32) -> (i32, i32, i32) {
    %c0_i32 = arith.constant 0 : i32
    %c0_i32_0 = arith.constant 0 : i32
    %c0_i32_1 = arith.constant 0 : i32
    return %arg0, %c0_i32, %c0_i32_0 : i32, i32, i32
  }
}

</mosaic_0001>

<llo_original>
// kernel: vit_dino_class_forward.1
$region0: #{vit_dino_class_forward.1}
  #allocation0 [shape = 'u32[]', space=smem, size = 0x4, offset = 0x4, fixed_abs, tag = 'smem constant byte address 0x4 - core index']
  #allocation1 [shape = 'u32[72,128]{1,0:T(1,128)}', space=vmem, size = 0x9000, scoped, tag = 'internal scratch']
  %s0 = inlined_call_operand.vmem [shape: f32[2,5,768], index: 0, kind: input, shape index: {}]
  %s1 = inlined_call_operand.vmem [shape: f32[768,32], index: 1, kind: input, shape index: {}]
  %s2 = inlined_call_operand.vmem [shape: f32[1,32], index: 2, kind: input, shape index: {}]
  %s3 = inlined_call_operand.vmem [shape: f32[1,32], index: 3, kind: input, shape index: {}]
  %s4 = inlined_call_operand.vmem [shape: f32[5,32], index: 4, kind: input, shape index: {}]
  %s5 = inlined_call_operand.vmem [shape: f32[2,1,32], index: 5, kind: input, shape index: {}]
  %s6 = inlined_call_operand.vmem [shape: f32[2,1,32], index: 6, kind: input, shape index: {}]
  %s7 = inlined_call_operand.vmem [shape: f32[2,32,96], index: 7, kind: input, shape index: {}]
  %s8 = inlined_call_operand.vmem [shape: f32[2,1,96], index: 8, kind: input, shape index: {}]
  %s9 = inlined_call_operand.vmem [shape: f32[2,32,32], index: 9, kind: input, shape index: {}]
  %s10 = inlined_call_operand.vmem [shape: f32[2,1,32], index: 10, kind: input, shape index: {}]
  %s11 = inlined_call_operand.vmem [shape: f32[2,1,32], index: 11, kind: input, shape index: {}]
  %s12 = inlined_call_operand.vmem [shape: f32[2,1,32], index: 12, kind: input, shape index: {}]
  %s13 = inlined_call_operand.vmem [shape: f32[2,32,128], index: 13, kind: input, shape index: {}]
  %s14 = inlined_call_operand.vmem [shape: f32[2,1,128], index: 14, kind: input, shape index: {}]
  %s15 = inlined_call_operand.vmem [shape: f32[2,128,32], index: 15, kind: input, shape index: {}]
  %s16 = inlined_call_operand.vmem [shape: f32[2,1,32], index: 16, kind: input, shape index: {}]
  %s17 = inlined_call_operand.vmem [shape: f32[1,32], index: 17, kind: input, shape index: {}]
  %s18 = inlined_call_operand.vmem [shape: f32[1,32], index: 18, kind: input, shape index: {}]
  %s19 = inlined_call_operand.vmem [shape: f32[32,4], index: 19, kind: input, shape index: {}]
  %s20 = inlined_call_operand.vmem [shape: f32[1,4], index: 20, kind: input, shape index: {}]
  %s21 = inlined_call_operand.hbm [shape: f32[2,1,4], index: 21, kind: output, shape index: {}]
  %s22 = sld [smem:[#allocation0]]
  $region117: #{vit_dino_class_forward.1} parent=0
    _
  %s24 = ssub.s32 1, %s22
  %s25 = scalar_select 0, %s24, %s22
  $region1: #{vit_dino_class_forward.1} parent=0
    #allocation2 [shape = 'u8[1024]{0}', space=vmem, size = 0x400, scoped, tag = 'output window, operand 0']
    #allocation3 [shape = 's32[2]{0}', space=sflag, size = 0x8, scoped, tag = 'scoped memory for vit_dino_class_forward.1']
    %26 = vsyncpa [#allocation3], 0
    %s27 = scalar_lea.sflag [#allocation3], 1
    %28 = vsyncpa %s27, 0
    loop: start=0, step=1, limit=4
    $region2: #{vit_dino_class_forward.1} parent=1 // loop_pre_header
      _
    $region3: #{vit_dino_class_forward.1} parent=1 // loop_header
      %s30 = sphi 0, %s34
      %p31 = scmp.ge.s32.totalorder %s30, 4
      %s40 = sphi 0, %s42
      %s43 = sphi 0, %s40
      %s44 = sphi 0, %s43
      %s60 = sphi 0, %s44
      %s64 = sphi 0, %s64
      %s66 = sphi 0, %s64
      %s67 = sphi 0, %s66
      %s81 = sphi 0, %s67
      %s85 = sphi 0, %s85
      %s87 = sphi 0, %s85
      %s88 = sphi 0, %s87
      %s102 = sphi 0, %s88
      %s106 = sphi 0, %s106
      %s108 = sphi 0, %s106
      %s109 = sphi 0, %s108
      %s123 = sphi 0, %s109
      %s127 = sphi 0, %s127
      %s129 = sphi 0, %s127
      %s130 = sphi 0, %s129
      %s144 = sphi 0, %s130
      %s148 = sphi 0, %s148
      %s150 = sphi 0, %s148
      %s151 = sphi 0, %s150
      %s165 = sphi 0, %s151
      %s169 = sphi 0, %s169
      %s171 = sphi 0, %s169
      %s172 = sphi 0, %s171
      %s186 = sphi 0, %s172
      %s190 = sphi 0, %s190
      %s192 = sphi 0, %s190
      %s193 = sphi 0, %s192
      %s207 = sphi 0, %s193
      %s211 = sphi 0, %s211
      %s213 = sphi 0, %s211
      %s214 = sphi 0, %s213
      %s228 = sphi 0, %s214
      %s232 = sphi 0, %s232
      %s234 = sphi 0, %s232
      %s235 = sphi 0, %s234
      %s249 = sphi 0, %s235
      %s253 = sphi 0, %s253
      %s255 = sphi 0, %s253
      %s256 = sphi 0, %s255
      %s270 = sphi 0, %s256
      %s274 = sphi 0, %s274
      %s276 = sphi 0, %s274
      %s277 = sphi 0, %s276
      %s291 = sphi 0, %s277
      %s295 = sphi 0, %s295
      %s297 = sphi 0, %s295
      %s298 = sphi 0, %s297
      %s312 = sphi 0, %s298
      %s316 = sphi 0, %s316
      %s318 = sphi 0, %s316
      %s319 = sphi 0, %s318
      %s333 = sphi 0, %s319
      %s337 = sphi 0, %s337
      %s339 = sphi 0, %s337
      %s340 = sphi 0, %s339
      %s354 = sphi 0, %s340
      %s358 = sphi 0, %s358
      %s360 = sphi 0, %s358
      %s361 = sphi 0, %s360
      %s375 = sphi 0, %s361
      %s379 = sphi 0, %s379
      %s381 = sphi 0, %s379
      %s382 = sphi 0, %s381
      %s396 = sphi 0, %s382
      %s400 = sphi 0, %s400
      %s402 = sphi 0, %s400
      %s403 = sphi 0, %s402
      %s417 = sphi 0, %s403
      %s421 = sphi 0, %s421
      %s423 = sphi 0, %s421
      %s424 = sphi 0, %s423
      %s438 = sphi 0, %s424
      %s442 = sphi 0, %s442
      %s444 = sphi 0, %s442
      %s445 = sphi 0, %s444
      %s459 = sphi 0, %s445
      %s463 = sphi 0, %s463
      %s465 = sphi 0, %s463
      %s466 = sphi 0, %s465
      %s480 = sphi 0, %s466
      %s486 = sphi 0, %s488
      %s489 = sphi 0, %s486
      %s490 = sphi 0, %s489
      %s506 = sphi 0, %s490
    $region4: #{vit_dino_class_forward.1} parent=1 // loop_header_branch
      %33 = sbr.rel (%p31) target = $region8
    $region5: #{vit_dino_class_forward.1} parent=1 // loop_body
      %s35 = ssub.s32 %s30, 1
      %s36 = ssub.s32 %s30, 2
      %s37 = sadd.s32 %s30, 1
      %s38 = ssub.s32 %s30, %s37
      %p39 = scmp.eq.s32.totalorder %s38, 0
      %s41 = sadd.s32 %s40, 1
      %s42 = scalar_select %p39, %s40, %s41
      %p45 = pneg %p39
      %p46 = scmp.eq.s32.totalorder %s30, 1
      %p47 = por %p45, %p46
      %p48 = scmp.ne.s32.totalorder %s40, %s43
      %p49 = scmp.eq.s32.totalorder %s30, 0
      %p50 = por %p48, %p49
      %p51 = scmp.ne.s32.totalorder %s40, %s43
      %p52 = scmp.eq.s32.totalorder %s35, 1
      %p53 = por %p51, %p52
      %p54 = scmp.ne.s32.totalorder %s43, %s44
      %p55 = scmp.eq.s32.totalorder %s35, 0
      %p56 = por %p54, %p55
      %p57 = scmp.ne.s32.totalorder %s43, %s44
      %p58 = scmp.eq.s32.totalorder %s36, 1
      %p59 = por %p57, %p58
      %p61 = scmp.ne.s32.totalorder %s44, %s60
      %p62 = scmp.eq.s32.totalorder %s36, 0
      %p63 = por %p61, %p62
      %s65 = sadd.s32 %s64, 1
      %p68 = scmp.eq.s32.totalorder %s30, 1
      %p69 = scmp.ne.s32.totalorder %s64, %s66
      %p70 = scmp.eq.s32.totalorder %s30, 0
      %p71 = por %p69, %p70
      %p72 = scmp.ne.s32.totalorder %s64, %s66
      %p73 = scmp.eq.s32.totalorder %s35, 1
      %p74 = por %p72, %p73
      %p75 = scmp.ne.s32.totalorder %s66, %s67
      %p76 = scmp.eq.s32.totalorder %s35, 0
      %p77 = por %p75, %p76
      %p78 = scmp.ne.s32.totalorder %s66, %s67
      %p79 = scmp.eq.s32.totalorder %s36, 1
      %p80 = por %p78, %p79
      %p82 = scmp.ne.s32.totalorder %s67, %s81
      %p83 = scmp.eq.s32.totalorder %s36, 0
      %p84 = por %p82, %p83
      %s86 = sadd.s32 %s85, 1
      %p89 = scmp.eq.s32.totalorder %s30, 1
      %p90 = scmp.ne.s32.totalorder %s85, %s87
      %p91 = scmp.eq.s32.totalorder %s30, 0
      %p92 = por %p90, %p91
      %p93 = scmp.ne.s32.totalorder %s85, %s87
      %p94 = scmp.eq.s32.totalorder %s35, 1
      %p95 = por %p93, %p94
      %p96 = scmp.ne.s32.totalorder %s87, %s88
      %p97 = scmp.eq.s32.totalorder %s35, 0
      %p98 = por %p96, %p97
      %p99 = scmp.ne.s32.totalorder %s87, %s88
      %p100 = scmp.eq.s32.totalorder %s36, 1
      %p101 = por %p99, %p100
      %p103 = scmp.ne.s32.totalorder %s88, %s102
      %p104 = scmp.eq.s32.totalorder %s36, 0
      %p105 = por %p103, %p104
      %s107 = sadd.s32 %s106, 1
      %p110 = scmp.eq.s32.totalorder %s30, 1
      %p111 = scmp.ne.s32.totalorder %s106, %s108
      %p112 = scmp.eq.s32.totalorder %s30, 0
      %p113 = por %p111, %p112
      %p114 = scmp.ne.s32.totalorder %s106, %s108
      %p115 = scmp.eq.s32.totalorder %s35, 1
      %p116 = por %p114, %p115
      %p117 = scmp.ne.s32.totalorder %s108, %s109
      %p118 = scmp.eq.s32.totalorder %s35, 0
      %p119 = por %p117, %p118
      %p120 = scmp.ne.s32.totalorder %s108, %s109
      %p121 = scmp.eq.s32.totalorder %s36, 1
      %p122 = por %p120, %p121
      %p124 = scmp.ne.s32.totalorder %s109, %s123
      %p125 = scmp.eq.s32.totalorder %s36, 0
      %p126 = por %p124, %p125
      %s128 = sadd.s32 %s127, 1
      %p131 = scmp.eq.s32.totalorder %s30, 1
      %p132 = scmp.ne.s32.totalorder %s127, %s129
      %p133 = scmp.eq.s32.totalorder %s30, 0
      %p134 = por %p132, %p133
      %p135 = scmp.ne.s32.totalorder %s127, %s129
      %p136 = scmp.eq.s32.totalorder %s35, 1
      %p137 = por %p135, %p136
      %p138 = scmp.ne.s32.totalorder %s129, %s130
      %p139 = scmp.eq.s32.totalorder %s35, 0
      %p140 = por %p138, %p139
      %p141 = scmp.ne.s32.totalorder %s129, %s130
      %p142 = scmp.eq.s32.totalorder %s36, 1
      %p143 = por %p141, %p142
      %p145 = scmp.ne.s32.totalorder %s130, %s144
      %p146 = scmp.eq.s32.totalorder %s36, 0
      %p147 = por %p145, %p146
      %s149 = sadd.s32 %s148, 1
      %p152 = scmp.eq.s32.totalorder %s30, 1
      %p153 = scmp.ne.s32.totalorder %s148, %s150
      %p154 = scmp.eq.s32.totalorder %s30, 0
      %p155 = por %p153, %p154
      %p156 = scmp.ne.s32.totalorder %s148, %s150
      %p157 = scmp.eq.s32.totalorder %s35, 1
      %p158 = por %p156, %p157
      %p159 = scmp.ne.s32.totalorder %s150, %s151
      %p160 = scmp.eq.s32.totalorder %s35, 0
      %p161 = por %p159, %p160
      %p162 = scmp.ne.s32.totalorder %s150, %s151
      %p163 = scmp.eq.s32.totalorder %s36, 1
      %p164 = por %p162, %p163
      %p166 = scmp.ne.s32.totalorder %s151, %s165
      %p167 = scmp.eq.s32.totalorder %s36, 0
      %p168 = por %p166, %p167
      %s170 = sadd.s32 %s169, 1
      %p173 = scmp.eq.s32.totalorder %s30, 1
      %p174 = scmp.ne.s32.totalorder %s169, %s171
      %p175 = scmp.eq.s32.totalorder %s30, 0
      %p176 = por %p174, %p175
      %p177 = scmp.ne.s32.totalorder %s169, %s171
      %p178 = scmp.eq.s32.totalorder %s35, 1
      %p179 = por %p177, %p178
      %p180 = scmp.ne.s32.totalorder %s171, %s172
      %p181 = scmp.eq.s32.totalorder %s35, 0
      %p182 = por %p180, %p181
      %p183 = scmp.ne.s32.totalorder %s171, %s172
      %p184 = scmp.eq.s32.totalorder %s36, 1
      %p185 = por %p183, %p184
      %p187 = scmp.ne.s32.totalorder %s172, %s186
      %p188 = scmp.eq.s32.totalorder %s36, 0
      %p189 = por %p187, %p188
      %s191 = sadd.s32 %s190, 1
      %p194 = scmp.eq.s32.totalorder %s30, 1
      %p195 = scmp.ne.s32.totalorder %s190, %s192
      %p196 = scmp.eq.s32.totalorder %s30, 0
      %p197 = por %p195, %p196
      %p198 = scmp.ne.s32.totalorder %s190, %s192
      %p199 = scmp.eq.s32.totalorder %s35, 1
      %p200 = por %p198, %p199
      %p201 = scmp.ne.s32.totalorder %s192, %s193
      %p202 = scmp.eq.s32.totalorder %s35, 0
      %p203 = por %p201, %p202
      %p204 = scmp.ne.s32.totalorder %s192, %s193
      %p205 = scmp.eq.s32.totalorder %s36, 1
      %p206 = por %p204, %p205
      %p208 = scmp.ne.s32.totalorder %s193, %s207
      %p209 = scmp.eq.s32.totalorder %s36, 0
      %p210 = por %p208, %p209
      %s212 = sadd.s32 %s211, 1
      %p215 = scmp.eq.s32.totalorder %s30, 1
      %p216 = scmp.ne.s32.totalorder %s211, %s213
      %p217 = scmp.eq.s32.totalorder %s30, 0
      %p218 = por %p216, %p217
      %p219 = scmp.ne.s32.totalorder %s211, %s213
      %p220 = scmp.eq.s32.totalorder %s35, 1
      %p221 = por %p219, %p220
      %p222 = scmp.ne.s32.totalorder %s213, %s214
      %p223 = scmp.eq.s32.totalorder %s35, 0
      %p224 = por %p222, %p223
      %p225 = scmp.ne.s32.totalorder %s213, %s214
      %p226 = scmp.eq.s32.totalorder %s36, 1
      %p227 = por %p225, %p226
      %p229 = scmp.ne.s32.totalorder %s214, %s228
      %p230 = scmp.eq.s32.totalorder %s36, 0
      %p231 = por %p229, %p230
      %s233 = sadd.s32 %s232, 1
      %p236 = scmp.eq.s32.totalorder %s30, 1
      %p237 = scmp.ne.s32.totalorder %s232, %s234
      %p238 = scmp.eq.s32.totalorder %s30, 0
      %p239 = por %p237, %p238
      %p240 = scmp.ne.s32.totalorder %s232, %s234
      %p241 = scmp.eq.s32.totalorder %s35, 1
      %p242 = por %p240, %p241
      %p243 = scmp.ne.s32.totalorder %s234, %s235
      %p244 = scmp.eq.s32.totalorder %s35, 0
      %p245 = por %p243, %p244
      %p246 = scmp.ne.s32.totalorder %s234, %s235
      %p247 = scmp.eq.s32.totalorder %s36, 1
      %p248 = por %p246, %p247
      %p250 = scmp.ne.s32.totalorder %s235, %s249
      %p251 = scmp.eq.s32.totalorder %s36, 0
      %p252 = por %p250, %p251
      %s254 = sadd.s32 %s253, 1
      %p257 = scmp.eq.s32.totalorder %s30, 1
      %p258 = scmp.ne.s32.totalorder %s253, %s255
      %p259 = scmp.eq.s32.totalorder %s30, 0
      %p260 = por %p258, %p259
      %p261 = scmp.ne.s32.totalorder %s253, %s255
      %p262 = scmp.eq.s32.totalorder %s35, 1
      %p263 = por %p261, %p262
      %p264 = scmp.ne.s32.totalorder %s255, %s256
      %p265 = scmp.eq.s32.totalorder %s35, 0
      %p266 = por %p264, %p265
      %p267 = scmp.ne.s32.totalorder %s255, %s256
      %p268 = scmp.eq.s32.totalorder %s36, 1
      %p269 = por %p267, %p268
      %p271 = scmp.ne.s32.totalorder %s256, %s270
      %p272 = scmp.eq.s32.totalorder %s36, 0
      %p273 = por %p271, %p272
      %s275 = sadd.s32 %s274, 1
      %p278 = scmp.eq.s32.totalorder %s30, 1
      %p279 = scmp.ne.s32.totalorder %s274, %s276
      %p280 = scmp.eq.s32.totalorder %s30, 0
      %p281 = por %p279, %p280
      %p282 = scmp.ne.s32.totalorder %s274, %s276
      %p283 = scmp.eq.s32.totalorder %s35, 1
      %p284 = por %p282, %p283
      %p285 = scmp.ne.s32.totalorder %s276, %s277
      %p286 = scmp.eq.s32.totalorder %s35, 0
      %p287 = por %p285, %p286
      %p288 = scmp.ne.s32.totalorder %s276, %s277
      %p289 = scmp.eq.s32.totalorder %s36, 1
      %p290 = por %p288, %p289
      %p292 = scmp.ne.s32.totalorder %s277, %s291
      %p293 = scmp.eq.s32.totalorder %s36, 0
      %p294 = por %p292, %p293
      %s296 = sadd.s32 %s295, 1
      %p299 = scmp.eq.s32.totalorder %s30, 1
      %p300 = scmp.ne.s32.totalorder %s295, %s297
      %p301 = scmp.eq.s32.totalorder %s30, 0
      %p302 = por %p300, %p301
      %p303 = scmp.ne.s32.totalorder %s295, %s297
      %p304 = scmp.eq.s32.totalorder %s35, 1
      %p305 = por %p303, %p304
      %p306 = scmp.ne.s32.totalorder %s297, %s298
      %p307 = scmp.eq.s32.totalorder %s35, 0
      %p308 = por %p306, %p307
      %p309 = scmp.ne.s32.totalorder %s297, %s298
      %p310 = scmp.eq.s32.totalorder %s36, 1
      %p311 = por %p309, %p310
      %p313 = scmp.ne.s32.totalorder %s298, %s312
      %p314 = scmp.eq.s32.totalorder %s36, 0
      %p315 = por %p313, %p314
      %s317 = sadd.s32 %s316, 1
      %p320 = scmp.eq.s32.totalorder %s30, 1
      %p321 = scmp.ne.s32.totalorder %s316, %s318
      %p322 = scmp.eq.s32.totalorder %s30, 0
      %p323 = por %p321, %p322
      %p324 = scmp.ne.s32.totalorder %s316, %s318
      %p325 = scmp.eq.s32.totalorder %s35, 1
      %p326 = por %p324, %p325
      %p327 = scmp.ne.s32.totalorder %s318, %s319
      %p328 = scmp.eq.s32.totalorder %s35, 0
      %p329 = por %p327, %p328
      %p330 = scmp.ne.s32.totalorder %s318, %s319
      %p331 = scmp.eq.s32.totalorder %s36, 1
      %p332 = por %p330, %p331
      %p334 = scmp.ne.s32.totalorder %s319, %s333
      %p335 = scmp.eq.s32.totalorder %s36, 0
      %p336 = por %p334, %p335
      %s338 = sadd.s32 %s337, 1
      %p341 = scmp.eq.s32.totalorder %s30, 1
      %p342 = scmp.ne.s32.totalorder %s337, %s339
      %p343 = scmp.eq.s32.totalorder %s30, 0
      %p344 = por %p342, %p343
      %p345 = scmp.ne.s32.totalorder %s337, %s339
      %p346 = scmp.eq.s32.totalorder %s35, 1
      %p347 = por %p345, %p346
      %p348 = scmp.ne.s32.totalorder %s339, %s340
      %p349 = scmp.eq.s32.totalorder %s35, 0
      %p350 = por %p348, %p349
      %p351 = scmp.ne.s32.totalorder %s339, %s340
      %p352 = scmp.eq.s32.totalorder %s36, 1
      %p353 = por %p351, %p352
      %p355 = scmp.ne.s32.totalorder %s340, %s354
      %p356 = scmp.eq.s32.totalorder %s36, 0
      %p357 = por %p355, %p356
      %s359 = sadd.s32 %s358, 1
      %p362 = scmp.eq.s32.totalorder %s30, 1
      %p363 = scmp.ne.s32.totalorder %s358, %s360
      %p364 = scmp.eq.s32.totalorder %s30, 0
      %p365 = por %p363, %p364
      %p366 = scmp.ne.s32.totalorder %s358, %s360
      %p367 = scmp.eq.s32.totalorder %s35, 1
      %p368 = por %p366, %p367
      %p369 = scmp.ne.s32.totalorder %s360, %s361
      %p370 = scmp.eq.s32.totalorder %s35, 0
      %p371 = por %p369, %p370
      %p372 = scmp.ne.s32.totalorder %s360, %s361
      %p373 = scmp.eq.s32.totalorder %s36, 1
      %p374 = por %p372, %p373
      %p376 = scmp.ne.s32.totalorder %s361, %s375
      %p377 = scmp.eq.s32.totalorder %s36, 0
      %p378 = por %p376, %p377
      %s380 = sadd.s32 %s379, 1
      %p383 = scmp.eq.s32.totalorder %s30, 1
      %p384 = scmp.ne.s32.totalorder %s379, %s381
      %p385 = scmp.eq.s32.totalorder %s30, 0
      %p386 = por %p384, %p385
      %p387 = scmp.ne.s32.totalorder %s379, %s381
      %p388 = scmp.eq.s32.totalorder %s35, 1
      %p389 = por %p387, %p388
      %p390 = scmp.ne.s32.totalorder %s381, %s382
      %p391 = scmp.eq.s32.totalorder %s35, 0
      %p392 = por %p390, %p391
      %p393 = scmp.ne.s32.totalorder %s381, %s382
      %p394 = scmp.eq.s32.totalorder %s36, 1
      %p395 = por %p393, %p394
      %p397 = scmp.ne.s32.totalorder %s382, %s396
      %p398 = scmp.eq.s32.totalorder %s36, 0
      %p399 = por %p397, %p398
      %s401 = sadd.s32 %s400, 1
      %p404 = scmp.eq.s32.totalorder %s30, 1
      %p405 = scmp.ne.s32.totalorder %s400, %s402
      %p406 = scmp.eq.s32.totalorder %s30, 0
      %p407 = por %p405, %p406
      %p408 = scmp.ne.s32.totalorder %s400, %s402
      %p409 = scmp.eq.s32.totalorder %s35, 1
      %p410 = por %p408, %p409
      %p411 = scmp.ne.s32.totalorder %s402, %s403
      %p412 = scmp.eq.s32.totalorder %s35, 0
      %p413 = por %p411, %p412
      %p414 = scmp.ne.s32.totalorder %s402, %s403
      %p415 = scmp.eq.s32.totalorder %s36, 1
      %p416 = por %p414, %p415
      %p418 = scmp.ne.s32.totalorder %s403, %s417
      %p419 = scmp.eq.s32.totalorder %s36, 0
      %p420 = por %p418, %p419
      %s422 = sadd.s32 %s421, 1
      %p425 = scmp.eq.s32.totalorder %s30, 1
      %p426 = scmp.ne.s32.totalorder %s421, %s423
      %p427 = scmp.eq.s32.totalorder %s30, 0
      %p428 = por %p426, %p427
      %p429 = scmp.ne.s32.totalorder %s421, %s423
      %p430 = scmp.eq.s32.totalorder %s35, 1
      %p431 = por %p429, %p430
      %p432 = scmp.ne.s32.totalorder %s423, %s424
      %p433 = scmp.eq.s32.totalorder %s35, 0
      %p434 = por %p432, %p433
      %p435 = scmp.ne.s32.totalorder %s423, %s424
      %p436 = scmp.eq.s32.totalorder %s36, 1
      %p437 = por %p435, %p436
      %p439 = scmp.ne.s32.totalorder %s424, %s438
      %p440 = scmp.eq.s32.totalorder %s36, 0
      %p441 = por %p439, %p440
      %s443 = sadd.s32 %s442, 1
      %p446 = scmp.eq.s32.totalorder %s30, 1
      %p447 = scmp.ne.s32.totalorder %s442, %s444
      %p448 = scmp.eq.s32.totalorder %s30, 0
      %p449 = por %p447, %p448
      %p450 = scmp.ne.s32.totalorder %s442, %s444
      %p451 = scmp.eq.s32.totalorder %s35, 1
      %p452 = por %p450, %p451
      %p453 = scmp.ne.s32.totalorder %s444, %s445
      %p454 = scmp.eq.s32.totalorder %s35, 0
      %p455 = por %p453, %p454
      %p456 = scmp.ne.s32.totalorder %s444, %s445
      %p457 = scmp.eq.s32.totalorder %s36, 1
      %p458 = por %p456, %p457
      %p460 = scmp.ne.s32.totalorder %s445, %s459
      %p461 = scmp.eq.s32.totalorder %s36, 0
      %p462 = por %p460, %p461
      %s464 = sadd.s32 %s463, 1
      %p467 = scmp.eq.s32.totalorder %s30, 1
      %p468 = scmp.ne.s32.totalorder %s463, %s465
      %p469 = scmp.eq.s32.totalorder %s30, 0
      %p470 = por %p468, %p469
      %p471 = scmp.ne.s32.totalorder %s463, %s465
      %p472 = scmp.eq.s32.totalorder %s35, 1
      %p473 = por %p471, %p472
      %p474 = scmp.ne.s32.totalorder %s465, %s466
      %p475 = scmp.eq.s32.totalorder %s35, 0
      %p476 = por %p474, %p475
      %p477 = scmp.ne.s32.totalorder %s465, %s466
      %p478 = scmp.eq.s32.totalorder %s36, 1
      %p479 = por %p477, %p478
      %p481 = scmp.ne.s32.totalorder %s466, %s480
      %p482 = scmp.eq.s32.totalorder %s36, 0
      %p483 = por %p481, %p482
      %s484 = ssub.s32 %s30, %s37
      %p485 = scmp.eq.s32.totalorder %s484, 0
      %s487 = sadd.s32 %s486, 1
      %s488 = scalar_select %p485, %s486, %s487
      %p491 = pneg %p485
      %p492 = scmp.eq.s32.totalorder %s30, 1
      %p493 = por %p491, %p492
      %p494 = scmp.ne.s32.totalorder %s486, %s489
      %p495 = scmp.eq.s32.totalorder %s30, 0
      %p496 = por %p494, %p495
      %p497 = scmp.ne.s32.totalorder %s486, %s489
      %p498 = scmp.eq.s32.totalorder %s35, 1
      %p499 = por %p497, %p498
      %p500 = scmp.ne.s32.totalorder %s489, %s490
      %p501 = scmp.eq.s32.totalorder %s35, 0
      %p502 = por %p500, %p501
      %p503 = scmp.ne.s32.totalorder %s489, %s490
      %p504 = scmp.eq.s32.totalorder %s36, 1
      %p505 = por %p503, %p504
      %p507 = scmp.ne.s32.totalorder %s490, %s506
      %p508 = scmp.eq.s32.totalorder %s36, 0
      %p509 = por %p507, %p508
      %p510 = scmp.le.s32.totalorder 1, %s30
      %p511 = scmp.lt.s32.totalorder %s30, 3
      %p512 = pnand %p510, %p511
      %p513 = pneg %p512
      // Predicated region
      $region9: #{vit_dino_class_forward.1} parent=5 // pred_check
        _
      $region10: #{vit_dino_class_forward.1} parent=5 // pred_check_branch
        %515 = sbr.rel (%p512) target = $region12
      $region11: #{vit_dino_class_forward.1} parent=5 // pred_region
        %s516 = ssub.s32 %s30, 1
        // Predicated region
        $region13: #{vit_dino_class_forward.1} parent=11 // pred_check
          %p517 = pneg %p77
        $region14: #{vit_dino_class_forward.1} parent=11 // pred_check_branch
          %519 = sbr.rel (%p517) target = $region16
        $region15: #{vit_dino_class_forward.1} parent=11 // pred_region
          _
        $region16: #{vit_dino_class_forward.1} parent=11 // pred_fallthru
          _
        // Predicated region
        $region17: #{vit_dino_class_forward.1} parent=11 // pred_check
          %p520 = pneg %p98
        $region18: #{vit_dino_class_forward.1} parent=11 // pred_check_branch
          %522 = sbr.rel (%p520) target = $region20
        $region19: #{vit_dino_class_forward.1} parent=11 // pred_region
          _
        $region20: #{vit_dino_class_forward.1} parent=11 // pred_fallthru
          _
        // Predicated region
        $region21: #{vit_dino_class_forward.1} parent=11 // pred_check
          %p523 = pneg %p119
        $region22: #{vit_dino_class_forward.1} parent=11 // pred_check_branch
          %525 = sbr.rel (%p523) target = $region24
        $region23: #{vit_dino_class_forward.1} parent=11 // pred_region
          _
        $region24: #{vit_dino_class_forward.1} parent=11 // pred_fallthru
          _
        // Predicated region
        $region25: #{vit_dino_class_forward.1} parent=11 // pred_check
          %p526 = pneg %p140
        $region26: #{vit_dino_class_forward.1} parent=11 // pred_check_branch
          %528 = sbr.rel (%p526) target = $region28
        $region27: #{vit_dino_class_forward.1} parent=11 // pred_region
          _
        $region28: #{vit_dino_class_forward.1} parent=11 // pred_fallthru
          _
        // Predicated region
        $region29: #{vit_dino_class_forward.1} parent=11 // pred_check
          %p529 = pneg %p161
        $region30: #{vit_dino_class_forward.1} parent=11 // pred_check_branch
          %531 = sbr.rel (%p529) target = $region32
        $region31: #{vit_dino_class_forward.1} parent=11 // pred_region
          _
        $region32: #{vit_dino_class_forward.1} parent=11 // pred_fallthru
          _
        // Predicated region
        $region33: #{vit_dino_class_forward.1} parent=11 // pred_check
          %p532 = pneg %p182
        $region34: #{vit_dino_class_forward.1} parent=11 // pred_check_branch
          %534 = sbr.rel (%p532) target = $region36
        $region35: #{vit_dino_class_forward.1} parent=11 // pred_region
          _
        $region36: #{vit_dino_class_forward.1} parent=11 // pred_fallthru
          _
        // Predicated region
        $region37: #{vit_dino_class_forward.1} parent=11 // pred_check
          %p535 = pneg %p203
        $region38: #{vit_dino_class_forward.1} parent=11 // pred_check_branch
          %537 = sbr.rel (%p535) target = $region40
        $region39: #{vit_dino_class_forward.1} parent=11 // pred_region
          _
        $region40: #{vit_dino_class_forward.1} parent=11 // pred_fallthru
          _
        // Predicated region
        $region41: #{vit_dino_class_forward.1} parent=11 // pred_check
          %p538 = pneg %p224
        $region42: #{vit_dino_class_forward.1} parent=11 // pred_check_branch
          %540 = sbr.rel (%p538) target = $region44
        $region43: #{vit_dino_class_forward.1} parent=11 // pred_region
          _
        $region44: #{vit_dino_class_forward.1} parent=11 // pred_fallthru
          _
        // Predicated region
        $region45: #{vit_dino_class_forward.1} parent=11 // pred_check
          %p541 = pneg %p245
        $region46: #{vit_dino_class_forward.1} parent=11 // pred_check_branch
          %543 = sbr.rel (%p541) target = $region48
        $region47: #{vit_dino_class_forward.1} parent=11 // pred_region
          _
        $region48: #{vit_dino_class_forward.1} parent=11 // pred_fallthru
          _
        // Predicated region
        $region49: #{vit_dino_class_forward.1} parent=11 // pred_check
          %p544 = pneg %p266
        $region50: #{vit_dino_class_forward.1} parent=11 // pred_check_branch
          %546 = sbr.rel (%p544) target = $region52
        $region51: #{vit_dino_class_forward.1} parent=11 // pred_region
          _
        $region52: #{vit_dino_class_forward.1} parent=11 // pred_fallthru
          _
        // Predicated region
        $region53: #{vit_dino_class_forward.1} parent=11 // pred_check
          %p547 = pneg %p287
        $region54: #{vit_dino_class_forward.1} parent=11 // pred_check_branch
          %549 = sbr.rel (%p547) target = $region56
        $region55: #{vit_dino_class_forward.1} parent=11 // pred_region
          _
        $region56: #{vit_dino_class_forward.1} parent=11 // pred_fallthru
          _
        // Predicated region
        $region57: #{vit_dino_class_forward.1} parent=11 // pred_check
          %p550 = pneg %p308
        $region58: #{vit_dino_class_forward.1} parent=11 // pred_check_branch
          %552 = sbr.rel (%p550) target = $region60
        $region59: #{vit_dino_class_forward.1} parent=11 // pred_region
          _
        $region60: #{vit_dino_class_forward.1} parent=11 // pred_fallthru
          _
        // Predicated region
        $region61: #{vit_dino_class_forward.1} parent=11 // pred_check
          %p553 = pneg %p329
        $region62: #{vit_dino_class_forward.1} parent=11 // pred_check_branch
          %555 = sbr.rel (%p553) target = $region64
        $region63: #{vit_dino_class_forward.1} parent=11 // pred_region
          _
        $region64: #{vit_dino_class_forward.1} parent=11 // pred_fallthru
          _
        // Predicated region
        $region65: #{vit_dino_class_forward.1} parent=11 // pred_check
          %p556 = pneg %p350
        $region66: #{vit_dino_class_forward.1} parent=11 // pred_check_branch
          %558 = sbr.rel (%p556) target = $region68
        $region67: #{vit_dino_class_forward.1} parent=11 // pred_region
          _
        $region68: #{vit_dino_class_forward.1} parent=11 // pred_fallthru
          _
        // Predicated region
        $region69: #{vit_dino_class_forward.1} parent=11 // pred_check
          %p559 = pneg %p371
        $region70: #{vit_dino_class_forward.1} parent=11 // pred_check_branch
          %561 = sbr.rel (%p559) target = $region72
        $region71: #{vit_dino_class_forward.1} parent=11 // pred_region
          _
        $region72: #{vit_dino_class_forward.1} parent=11 // pred_fallthru
          _
        // Predicated region
        $region73: #{vit_dino_class_forward.1} parent=11 // pred_check
          %p562 = pneg %p392
        $region74: #{vit_dino_class_forward.1} parent=11 // pred_check_branch
          %564 = sbr.rel (%p562) target = $region76
        $region75: #{vit_dino_class_forward.1} parent=11 // pred_region
          _
        $region76: #{vit_dino_class_forward.1} parent=11 // pred_fallthru
          _
        // Predicated region
        $region77: #{vit_dino_class_forward.1} parent=11 // pred_check
          %p565 = pneg %p413
        $region78: #{vit_dino_class_forward.1} parent=11 // pred_check_branch
          %567 = sbr.rel (%p565) target = $region80
        $region79: #{vit_dino_class_forward.1} parent=11 // pred_region
          _
        $region80: #{vit_dino_class_forward.1} parent=11 // pred_fallthru
          _
        // Predicated region
        $region81: #{vit_dino_class_forward.1} parent=11 // pred_check
          %p568 = pneg %p434
        $region82: #{vit_dino_class_forward.1} parent=11 // pred_check_branch
          %570 = sbr.rel (%p568) target = $region84
        $region83: #{vit_dino_class_forward.1} parent=11 // pred_region
          _
        $region84: #{vit_dino_class_forward.1} parent=11 // pred_fallthru
          _
        // Predicated region
        $region85: #{vit_dino_class_forward.1} parent=11 // pred_check
          %p571 = pneg %p455
        $region86: #{vit_dino_class_forward.1} parent=11 // pred_check_branch
          %573 = sbr.rel (%p571) target = $region88
        $region87: #{vit_dino_class_forward.1} parent=11 // pred_region
          _
        $region88: #{vit_dino_class_forward.1} parent=11 // pred_fallthru
          _
        // Predicated region
        $region89: #{vit_dino_class_forward.1} parent=11 // pred_check
          %p574 = pneg %p476
        $region90: #{vit_dino_class_forward.1} parent=11 // pred_check_branch
          %576 = sbr.rel (%p574) target = $region92
        $region91: #{vit_dino_class_forward.1} parent=11 // pred_region
          _
        $region92: #{vit_dino_class_forward.1} parent=11 // pred_fallthru
          _
      $region12: #{vit_dino_class_forward.1} parent=5 // pred_fallthru
        _
      %p577 = scmp.lt.s32.totalorder %s30, 2
      // Predicated region
      $region93: #{vit_dino_class_forward.1} parent=5 // pred_check
        %p578 = pneg %p577
      $region94: #{vit_dino_class_forward.1} parent=5 // pred_check_branch
        %580 = sbr.rel (%p578) target = $region96
      $region95: #{vit_dino_class_forward.1} parent=5 // pred_region
        // Predicated region
        $region97: #{vit_dino_class_forward.1} parent=95 // pred_check
          %p581 = pneg %p50
        $region98: #{vit_dino_class_forward.1} parent=95 // pred_check_branch
          %583 = sbr.rel (%p581) target = $region100
        $region99: #{vit_dino_class_forward.1} parent=95 // pred_region
          %p584 = scmp.lt.s32.totalorder %s30, 1
          %s585 = scalar_select %p584, %s30, 1
          %s586 = smul.addr %s585, 6
          %s587 = smul.addr %s586, 8
          %s588 = scalar_lea.vmem %s0, %s587
        $region100: #{vit_dino_class_forward.1} parent=95 // pred_fallthru
          _
      $region96: #{vit_dino_class_forward.1} parent=5 // pred_fallthru
        _
      %p589 = scmp.le.s32.totalorder 1, %s30
      %p590 = scmp.lt.s32.totalorder %s30, 3
      %p591 = pnand %p589, %p590
      %p592 = pneg %p591
      // Predicated region
      $region101: #{vit_dino_class_forward.1} parent=5 // pred_check
        _
      $region102: #{vit_dino_class_forward.1} parent=5 // pred_check_branch
        %594 = sbr.rel (%p591) target = $region104
      $region103: #{vit_dino_class_forward.1} parent=5 // pred_region
        %s595 = ssub.s32 %s30, 1
        %p596 = scmp.lt.s32.totalorder %s35, 1
        %s597 = scalar_select %p596, %s35, 1
        %s598 = smul.addr %s597, 6
        %s599 = smul.addr %s598, 8
        %s600 = scalar_lea.vmem %s0, %s599
        %p601 = pneg %p56
        %p602 = pneg %p53
        %p603 = pneg %p77
        %p604 = pneg %p74
        %p605 = pneg %p98
        %p606 = pneg %p95
        %p607 = pneg %p119
        %p608 = pneg %p116
        %p609 = pneg %p140
        %p610 = pneg %p137
        %p611 = pneg %p161
        %p612 = pneg %p158
        %p613 = pneg %p182
        %p614 = pneg %p179
        %p615 = pneg %p203
        %p616 = pneg %p200
        %p617 = pneg %p224
        %p618 = pneg %p221
        %p619 = pneg %p245
        %p620 = pneg %p242
        %p621 = pneg %p266
        %p622 = pneg %p263
        %p623 = pneg %p287
        %p624 = pneg %p284
        %p625 = pneg %p308
        %p626 = pneg %p305
        %p627 = pneg %p329
        %p628 = pneg %p326
        %p629 = pneg %p350
        %p630 = pneg %p347
        %p631 = pneg %p371
        %p632 = pneg %p368
        %p633 = pneg %p392
        %p634 = pneg %p389
        %p635 = pneg %p413
        %p636 = pneg %p410
        %p637 = pneg %p434
        %p638 = pneg %p431
        %p639 = pneg %p455
        %p640 = pneg %p452
        %p641 = pneg %p476
        %p642 = pneg %p473
        %p643 = pneg %p502
        %p644 = pneg %p499
        %s645 = sand.u32 %s489, 1
        %s646 = scalar_lea.sflag [#allocation3], %s645
        %s647 = sand.u32 %s489, 1
        %s648 = scalar_lea.vmem [#allocation2], %s647
        %p649 = scmp.lt.s32.totalorder %s35, 1
        %s650 = scalar_select %p649, %s35, 1
        %s651 = smul.addr %s650, 6
        %s652 = smul.addr %s651, 8
        %s653 = scalar_lea.vmem %s0, %s652
        %v655 = vld [vmem:[%s653] sm:$0x1f]
        %v656 = vld [vmem:[%s653 + $0x8] sm:$0x1f]
        %v657 = vld [vmem:[%s653 + $0x10] sm:$0x1f]
        %v658 = vld [vmem:[%s653 + $0x18] sm:$0x1f]
        %v659 = vld [vmem:[%s653 + $0x20] sm:$0x1f]
        %v660 = vld [vmem:[%s653 + $0x28] sm:$0x1f]
        %v661 = vld [vmem:[%s1] sm:$0xff]
        %v662 = vld [vmem:[%s1 + $0x8] sm:$0xff]
        %v663 = vld [vmem:[%s1 + $0x10] sm:$0xff]
        %v664 = vld [vmem:[%s1 + $0x18] sm:$0xff]
        %v665 = vld [vmem:[%s1 + $0x20] sm:$0xff]
        %v666 = vld [vmem:[%s1 + $0x28] sm:$0xff]
        %v667 = vld [vmem:[%s1 + $0x30] sm:$0xff]
        %v668 = vld [vmem:[%s1 + $0x38] sm:$0xff]
        %v669 = vld [vmem:[%s1 + $0x40] sm:$0xff]
        %v670 = vld [vmem:[%s1 + $0x48] sm:$0xff]
        %v671 = vld [vmem:[%s1 + $0x50] sm:$0xff]
        %v672 = vld [vmem:[%s1 + $0x58] sm:$0xff]
        %v673 = vld [vmem:[%s1 + $0x60] sm:$0xff]
        %v674 = vld [vmem:[%s1 + $0x68] sm:$0xff]
        %v675 = vld [vmem:[%s1 + $0x70] sm:$0xff]
        %v676 = vld [vmem:[%s1 + $0x78] sm:$0xff]
        %v677 = vld [vmem:[%s1 + $0x80] sm:$0xff]
        %v678 = vld [vmem:[%s1 + $0x88] sm:$0xff]
        %v679 = vld [vmem:[%s1 + $0x90] sm:$0xff]
        %v680 = vld [vmem:[%s1 + $0x98] sm:$0xff]
        %v681 = vld [vmem:[%s1 + $0xa0] sm:$0xff]
        %v682 = vld [vmem:[%s1 + $0xa8] sm:$0xff]
        %v683 = vld [vmem:[%s1 + $0xb0] sm:$0xff]
        %v684 = vld [vmem:[%s1 + $0xb8] sm:$0xff]
        %v685 = vld [vmem:[%s1 + $0xc0] sm:$0xff]
        %v686 = vld [vmem:[%s1 + $0xc8] sm:$0xff]
        %v687 = vld [vmem:[%s1 + $0xd0] sm:$0xff]
        %v688 = vld [vmem:[%s1 + $0xd8] sm:$0xff]
        %v689 = vld [vmem:[%s1 + $0xe0] sm:$0xff]
        %v690 = vld [vmem:[%s1 + $0xe8] sm:$0xff]
        %v691 = vld [vmem:[%s1 + $0xf0] sm:$0xff]
        %v692 = vld [vmem:[%s1 + $0xf8] sm:$0xff]
        %v693 = vld [vmem:[%s1 + $0x100] sm:$0xff]
        %v694 = vld [vmem:[%s1 + $0x108] sm:$0xff]
        %v695 = vld [vmem:[%s1 + $0x110] sm:$0xff]
        %v696 = vld [vmem:[%s1 + $0x118] sm:$0xff]
        %v697 = vld [vmem:[%s1 + $0x120] sm:$0xff]
        %v698 = vld [vmem:[%s1 + $0x128] sm:$0xff]
        %v699 = vld [vmem:[%s1 + $0x130] sm:$0xff]
        %v700 = vld [vmem:[%s1 + $0x138] sm:$0xff]
        %v701 = vld [vmem:[%s1 + $0x140] sm:$0xff]
        %v702 = vld [vmem:[%s1 + $0x148] sm:$0xff]
        %v703 = vld [vmem:[%s1 + $0x150] sm:$0xff]
        %v704 = vld [vmem:[%s1 + $0x158] sm:$0xff]
        %v705 = vld [vmem:[%s1 + $0x160] sm:$0xff]
        %v706 = vld [vmem:[%s1 + $0x168] sm:$0xff]
        %v707 = vld [vmem:[%s1 + $0x170] sm:$0xff]
        %v708 = vld [vmem:[%s1 + $0x178] sm:$0xff]
        %v709 = vld [vmem:[%s1 + $0x180] sm:$0xff]
        %v710 = vld [vmem:[%s1 + $0x188] sm:$0xff]
        %v711 = vld [vmem:[%s1 + $0x190] sm:$0xff]
        %v712 = vld [vmem:[%s1 + $0x198] sm:$0xff]
        %v713 = vld [vmem:[%s1 + $0x1a0] sm:$0xff]
        %v714 = vld [vmem:[%s1 + $0x1a8] sm:$0xff]
        %v715 = vld [vmem:[%s1 + $0x1b0] sm:$0xff]
        %v716 = vld [vmem:[%s1 + $0x1b8] sm:$0xff]
        %v717 = vld [vmem:[%s1 + $0x1c0] sm:$0xff]
        %v718 = vld [vmem:[%s1 + $0x1c8] sm:$0xff]
        %v719 = vld [vmem:[%s1 + $0x1d0] sm:$0xff]
        %v720 = vld [vmem:[%s1 + $0x1d8] sm:$0xff]
        %v721 = vld [vmem:[%s1 + $0x1e0] sm:$0xff]
        %v722 = vld [vmem:[%s1 + $0x1e8] sm:$0xff]
        %v723 = vld [vmem:[%s1 + $0x1f0] sm:$0xff]
        %v724 = vld [vmem:[%s1 + $0x1f8] sm:$0xff]
        %v725 = vld [vmem:[%s1 + $0x200] sm:$0xff]
        %v726 = vld [vmem:[%s1 + $0x208] sm:$0xff]
        %v727 = vld [vmem:[%s1 + $0x210] sm:$0xff]
        %v728 = vld [vmem:[%s1 + $0x218] sm:$0xff]
        %v729 = vld [vmem:[%s1 + $0x220] sm:$0xff]
        %v730 = vld [vmem:[%s1 + $0x228] sm:$0xff]
        %v731 = vld [vmem:[%s1 + $0x230] sm:$0xff]
        %v732 = vld [vmem:[%s1 + $0x238] sm:$0xff]
        %v733 = vld [vmem:[%s1 + $0x240] sm:$0xff]
        %v734 = vld [vmem:[%s1 + $0x248] sm:$0xff]
        %v735 = vld [vmem:[%s1 + $0x250] sm:$0xff]
        %v736 = vld [vmem:[%s1 + $0x258] sm:$0xff]
        %v737 = vld [vmem:[%s1 + $0x260] sm:$0xff]
        %v738 = vld [vmem:[%s1 + $0x268] sm:$0xff]
        %v739 = vld [vmem:[%s1 + $0x270] sm:$0xff]
        %v740 = vld [vmem:[%s1 + $0x278] sm:$0xff]
        %v741 = vld [vmem:[%s1 + $0x280] sm:$0xff]
        %v742 = vld [vmem:[%s1 + $0x288] sm:$0xff]
        %v743 = vld [vmem:[%s1 + $0x290] sm:$0xff]
        %v744 = vld [vmem:[%s1 + $0x298] sm:$0xff]
        %v745 = vld [vmem:[%s1 + $0x2a0] sm:$0xff]
        %v746 = vld [vmem:[%s1 + $0x2a8] sm:$0xff]
        %v747 = vld [vmem:[%s1 + $0x2b0] sm:$0xff]
        %v748 = vld [vmem:[%s1 + $0x2b8] sm:$0xff]
        %v749 = vld [vmem:[%s1 + $0x2c0] sm:$0xff]
        %v750 = vld [vmem:[%s1 + $0x2c8] sm:$0xff]
        %v751 = vld [vmem:[%s1 + $0x2d0] sm:$0xff]
        %v752 = vld [vmem:[%s1 + $0x2d8] sm:$0xff]
        %v753 = vld [vmem:[%s1 + $0x2e0] sm:$0xff]
        %v754 = vld [vmem:[%s1 + $0x2e8] sm:$0xff]
        %v755 = vld [vmem:[%s1 + $0x2f0] sm:$0xff]
        %v756 = vld [vmem:[%s1 + $0x2f8] sm:$0xff]
        %v757 = vpack.c.bf16 %v655, %v655
        %v758 = vpack.c.bf16 %v656, %v656
        %v759 = vpack.c.bf16 %v657, %v657
        %v760 = vpack.c.bf16 %v658, %v658
        %v761 = vpack.c.bf16 %v659, %v659
        %v762 = vpack.c.bf16 %v660, %v660
        %v763 = vpack.c.bf16 %v662, %v661
        %v764 = vpack.c.bf16 %v664, %v663
        %v765 = vpack.c.bf16 %v666, %v665
        %v766 = vpack.c.bf16 %v668, %v667
        %v767 = vpack.c.bf16 %v670, %v669
        %v768 = vpack.c.bf16 %v672, %v671
        %v769 = vpack.c.bf16 %v674, %v673
        %v770 = vpack.c.bf16 %v676, %v675
        %v771 = vpack.c.bf16 %v678, %v677
        %v772 = vpack.c.bf16 %v680, %v679
        %v773 = vpack.c.bf16 %v682, %v681
        %v774 = vpack.c.bf16 %v684, %v683
        %v775 = vpack.c.bf16 %v686, %v685
        %v776 = vpack.c.bf16 %v688, %v687
        %v777 = vpack.c.bf16 %v690, %v689
        %v778 = vpack.c.bf16 %v692, %v691
        %v779 = vpack.c.bf16 %v694, %v693
        %v780 = vpack.c.bf16 %v696, %v695
        %v781 = vpack.c.bf16 %v698, %v697
        %v782 = vpack.c.bf16 %v700, %v699
        %v783 = vpack.c.bf16 %v702, %v701
        %v784 = vpack.c.bf16 %v704, %v703
        %v785 = vpack.c.bf16 %v706, %v705
        %v786 = vpack.c.bf16 %v708, %v707
        %v787 = vpack.c.bf16 %v710, %v709
        %v788 = vpack.c.bf16 %v712, %v711
        %v789 = vpack.c.bf16 %v714, %v713
        %v790 = vpack.c.bf16 %v716, %v715
        %v791 = vpack.c.bf16 %v718, %v717
        %v792 = vpack.c.bf16 %v720, %v719
        %v793 = vpack.c.bf16 %v722, %v721
        %v794 = vpack.c.bf16 %v724, %v723
        %v795 = vpack.c.bf16 %v726, %v725
        %v796 = vpack.c.bf16 %v728, %v727
        %v797 = vpack.c.bf16 %v730, %v729
        %v798 = vpack.c.bf16 %v732, %v731
        %v799 = vpack.c.bf16 %v734, %v733
        %v800 = vpack.c.bf16 %v736, %v735
        %v801 = vpack.c.bf16 %v738, %v737
        %v802 = vpack.c.bf16 %v740, %v739
        %v803 = vpack.c.bf16 %v742, %v741
        %v804 = vpack.c.bf16 %v744, %v743
        %v805 = vpack.c.bf16 %v746, %v745
        %v806 = vpack.c.bf16 %v748, %v747
        %v807 = vpack.c.bf16 %v750, %v749
        %v808 = vpack.c.bf16 %v752, %v751
        %v809 = vpack.c.bf16 %v754, %v753
        %v810 = vpack.c.bf16 %v756, %v755
        %v811 = vlaneseq
        %v812 = vshrl.u32 %v811, 7
        %vm813 = vcmp.eq.s32.totalorder %v812, 0
        %v814 = vld [vmem:[%s3] sm:$0x1]
        %v816 = vperm.slane %v814, 0
        %v818 = vld [vmem:[%s2] sm:$0x1]
        %v820 = vperm.slane %v818, 0
        %v822 = vsel %vm813, %v816, %v820
        %v823 = vld [vmem:[%s4] sm:$0x1f]
        %824 = vmatpush.bf16.msra.mxu0 %v770
        %825 = vmatpush.bf16.msra.mxu0 %v769
        %826 = vmatpush.bf16.msra.mxu0 %v768
        %827 = vmatpush.bf16.msra.mxu0 %v767
        %828 = vmatpush.bf16.msra.mxu0 %v766
        %829 = vmatpush.bf16.msra.mxu0 %v765
        %830 = vmatpush.bf16.msra.mxu0 %v764
        %831 = vmatpush.bf16.msra.mxu0 %v763
        %832 = vmatmul.bf16.gmra.mxu0 %v757
        %v833 = vpop.f32.mrf.mxu0
        %v834 = vadd.f32 %v823, %v833
        %v835 = vpop.f32.mrf.mxu0
        %836 = vdwg.mxu0
        %837 = vmatpush.bf16.msra.mxu0 %v778
        %838 = vmatpush.bf16.msra.mxu0 %v777
        %839 = vmatpush.bf16.msra.mxu0 %v776
        %840 = vmatpush.bf16.msra.mxu0 %v775
        %841 = vmatpush.bf16.msra.mxu0 %v774
        %842 = vmatpush.bf16.msra.mxu0 %v773
        %843 = vmatpush.bf16.msra.mxu0 %v772
        %844 = vmatpush.bf16.msra.mxu0 %v771
        %845 = vmatmul.bf16.gmra.mxu0 %v758
        %v846 = vpop.f32.mrf.mxu0
        %v847 = vadd.f32 %v834, %v846
        %v848 = vpop.f32.mrf.mxu0
        %849 = vdwg.mxu0
        %850 = vmatpush.bf16.msra.mxu0 %v786
        %851 = vmatpush.bf16.msra.mxu0 %v785
        %852 = vmatpush.bf16.msra.mxu0 %v784
        %853 = vmatpush.bf16.msra.mxu0 %v783
        %854 = vmatpush.bf16.msra.mxu0 %v782
        %855 = vmatpush.bf16.msra.mxu0 %v781
        %856 = vmatpush.bf16.msra.mxu0 %v780
        %857 = vmatpush.bf16.msra.mxu0 %v779
        %858 = vmatmul.bf16.gmra.mxu0 %v759
        %v859 = vpop.f32.mrf.mxu0
        %v860 = vadd.f32 %v847, %v859
        %v861 = vpop.f32.mrf.mxu0
        %862 = vdwg.mxu0
        %863 = vmatpush.bf16.msra.mxu0 %v794
        %864 = vmatpush.bf16.msra.mxu0 %v793
        %865 = vmatpush.bf16.msra.mxu0 %v792
        %866 = vmatpush.bf16.msra.mxu0 %v791
        %867 = vmatpush.bf16.msra.mxu0 %v790
        %868 = vmatpush.bf16.msra.mxu0 %v789
        %869 = vmatpush.bf16.msra.mxu0 %v788
        %870 = vmatpush.bf16.msra.mxu0 %v787
        %871 = vmatmul.bf16.gmra.mxu0 %v760
        %v872 = vpop.f32.mrf.mxu0
        %v873 = vadd.f32 %v860, %v872
        %v874 = vpop.f32.mrf.mxu0
        %875 = vdwg.mxu0
        %876 = vmatpush.bf16.msra.mxu0 %v802
        %877 = vmatpush.bf16.msra.mxu0 %v801
        %878 = vmatpush.bf16.msra.mxu0 %v800
        %879 = vmatpush.bf16.msra.mxu0 %v799
        %880 = vmatpush.bf16.msra.mxu0 %v798
        %881 = vmatpush.bf16.msra.mxu0 %v797
        %882 = vmatpush.bf16.msra.mxu0 %v796
        %883 = vmatpush.bf16.msra.mxu0 %v795
        %884 = vmatmul.bf16.gmra.mxu0 %v761
        %v885 = vpop.f32.mrf.mxu0
        %v886 = vadd.f32 %v873, %v885
        %v887 = vpop.f32.mrf.mxu0
        %888 = vdwg.mxu0
        %889 = vmatpush.bf16.msra.mxu0 %v810
        %890 = vmatpush.bf16.msra.mxu0 %v809
        %891 = vmatpush.bf16.msra.mxu0 %v808
        %892 = vmatpush.bf16.msra.mxu0 %v807
        %893 = vmatpush.bf16.msra.mxu0 %v806
        %894 = vmatpush.bf16.msra.mxu0 %v805
        %895 = vmatpush.bf16.msra.mxu0 %v804
        %896 = vmatpush.bf16.msra.mxu0 %v803
        %897 = vmatmul.bf16.gmra.mxu0 %v762
        %v898 = vpop.f32.mrf.mxu0
        %v899 = vadd.f32 %v886, %v898
        %v900 = vpop.f32.mrf.mxu0
        %901 = vdwg.mxu0
        %v902 = vadd.f32 %v899, %v822
        %v903 = vld [vmem:[%s5] sm:$0x1]
        %v904 = vld [vmem:[%s6] sm:$0x1]
        %vm905 = vcmask 258048
        %v906 = vsel %vm905, %v902, 0.0
        %907 = vadd.xlane.f32.xlu0 %v906
        %v908 = vpop.xlane.xlu0 %907
        %v909 = vrcp.pop 32.0
        %v910 = vmul.f32 32.0, %v909
        %v911 = vsub.f32 1.0, %v910
        %v912 = vmul.f32 %v909, %v911
        %v913 = vadd.f32 %v909, %v912
        %vm914 = vweird.f32 %v909
        %v915 = vsel %vm914, %v909, %v913
        %v916 = vmul.f32 %v908, %v915
        %v917 = vsub.f32 %v902, %v916
        %v918 = vmul.f32 %v917, %v917
        %v919 = vsel %vm905, %v918, 0.0
        %920 = vadd.xlane.f32.xlu0 %v919
        %v921 = vpop.xlane.xlu0 %920
        %v922 = vmul.f32 %v921, %v915
        %v923 = vadd.f32 %v922, 1e-06
        %v924 = vrsqrt.pop %v923
        %v925 = vmul.f32 %v924, %v923
        %v926 = vmul.f32 %v925, %v924
        %v927 = vmul.f32 0.5, %v926
        %v928 = vsub.f32 1.5, %v927
        %v929 = vmul.f32 %v924, %v928
        %vm930 = vweird.f32 %v923
        %vm931 = vweird.f32 %v924
        %vm932 = vmor %vm930, %vm931
        %v933 = vsel %vm932, %v924, %v929
        %v934 = vmul.f32 %v917, %v933
        %v936 = vperm.slane %v903, 0
        %v938 = vmul.f32 %v934, %v936
        %v940 = vperm.slane %v904, 0
        %v942 = vadd.f32 %v938, %v940
        %v943 = vld [vmem:[%s7] sm:$0xff]
        %v944 = vld [vmem:[%s7 + $0x8] sm:$0xff]
        %v945 = vld [vmem:[%s7 + $0x10] sm:$0xff]
        %v946 = vld [vmem:[%s7 + $0x18] sm:$0xff]
        %v947 = vpack.c.bf16 %v942, %v942
        %v948 = vpack.c.bf16 %v944, %v943
        %v949 = vpack.c.bf16 %v946, %v945
        %v950 = vld [vmem:[%s8] sm:$0x1]
        %v952 = vperm.slane %v950, 0
        %vm954 = vcmask 261120
        %v956 = vsel %vm954, %v947, 0
        %958 = vmatpush.bf16.msra.mxu0 0
        %959 = vmatpush.bf16.msra.mxu0 0
        %960 = vmatpush.bf16.msra.mxu0 0
        %961 = vmatpush.bf16.msra.mxu0 0
        %962 = vmatpush.bf16.msra.mxu0 0
        %963 = vmatpush.bf16.msra.mxu0 0
        %964 = vmatpush.bf16.msra.mxu0 %v949
        %965 = vmatpush.bf16.msra.mxu0 %v948
        %966 = vmatmul.bf16.gmra.mxu0 %v956
        %v967 = vpop.f32.mrf.mxu0
        %v968 = vadd.f32 %v952, %v967
        %v969 = vpop.f32.mrf.mxu0
        %970 = vdwg.mxu0
        %v971 = vld [vmem:[%s9] sm:$0xff]
        %v972 = vld [vmem:[%s9 + $0x8] sm:$0xff]
        %v973 = vld [vmem:[%s9 + $0x10] sm:$0xff]
        %v974 = vld [vmem:[%s9 + $0x18] sm:$0xff]
        %v975 = vld [vmem:[%s10] sm:$0x1]
        %v977 = vperm.slane %v975, 0
        %v979 = vpack.c.bf16 %v968, %v968
        %981 = vrot.lane.b32.xlu0 %v979, 96
        %v982 = vpop.permute.xlu0 %981
        %vm983 = vcmask 64512
        %v985 = vsel %vm983, %v979, 0
        %v988 = vsel %vm983, %v982, 0
        %990 = vmatpush.bf16.xpose.msra.mxu0 0
        %991 = vmatpush.bf16.xpose.msra.mxu0 0
        %992 = vmatpush.bf16.xpose.msra.mxu0 0
        %993 = vmatpush.bf16.xpose.msra.mxu0 0
        %994 = vmatpush.bf16.xpose.msra.mxu0 0
        %995 = vmatpush.bf16.xpose.msra.mxu0 0
        %996 = vmatpush.bf16.xpose.msra.mxu0 0
        %997 = vmatpush.bf16.xpose.msra.mxu0 %v988
        %998 = vmatmul.bf16.gmra.mxu0 %v985
        %v999 = vpop.f32.mrf.mxu0
        %v1000 = vadd.f32 0.0, %v999
        %v1001 = vpop.f32.mrf.mxu0
        %1002 = vdwg.mxu0
        %v1003 = vmul.f32 %v1000, 0.35355338
        %vm1004 = vcmask 36864
        %v1005 = vsel %vm1004, %v1003, -inf
        %1006 = vmax.xlane.f32.xlu0 %v1005
        %v1007 = vpop.xlane.xlu0 %1006
        %v1008 = vsub.f32 %v1003, %v1007
        %v1009 = vmul.f32 %v1008, 1.442695
        %v1010 = vpow.pop %v1009
        %v1011 = vsel %vm1004, %v1010, 0.0
        %1012 = vadd.xlane.f32.xlu0 %v1011
        %v1013 = vpop.xlane.xlu0 %1012
        %v1014 = vpack.c.bf16 %v1010, %v1010
        %1015 = vrot.lane.b32.xlu0 %v979, 64
        %v1016 = vpop.permute.xlu0 %1015
        %vm1017 = vcmask 39936
        %v1019 = vsel %vm1017, %v1014, 0
        %vm1021 = vcmask 1041408
        %vm1022 = vcmask 1042432
        %v1023 = vsel %vm1021, 4294967295, 65535
        %v1024 = vsel %vm1022, %v1023, 0
        %v1026 = vand.u32 %v1016, %v1024
        %1028 = vmatpush.bf16.msra.mxu0 0
        %1029 = vmatpush.bf16.msra.mxu0 0
        %1030 = vmatpush.bf16.msra.mxu0 0
        %1031 = vmatpush.bf16.msra.mxu0 0
        %1032 = vmatpush.bf16.msra.mxu0 0
        %1033 = vmatpush.bf16.msra.mxu0 0
        %1034 = vmatpush.bf16.msra.mxu0 0
        %1035 = vmatpush.bf16.msra.mxu0 %v1026
        %1036 = vmatmul.bf16.gmra.mxu0 %v1019
        %v1037 = vpop.f32.mrf.mxu0
        %v1038 = vadd.f32 0.0, %v1037
        %v1039 = vpop.f32.mrf.mxu0
        %1040 = vdwg.mxu0
        %v1041 = vrcp.pop %v1013
        %v1042 = vmul.f32 %v1038, %v1041
        %v1043 = vpack.c.bf16 %v1042, %v1042
        %v1044 = vpack.c.bf16 %v971, %v971
        %v1046 = vsel %vm983, %v1043, 0
        %vm1048 = vcmask 1043456
        %v1050 = vsel %vm1048, %v1044, 0
        %1052 = vmatpush.bf16.msra.mxu0 0
        %1053 = vmatpush.bf16.msra.mxu0 0
        %1054 = vmatpush.bf16.msra.mxu0 0
        %1055 = vmatpush.bf16.msra.mxu0 0
        %1056 = vmatpush.bf16.msra.mxu0 0
        %1057 = vmatpush.bf16.msra.mxu0 0
        %1058 = vmatpush.bf16.msra.mxu0 0
        %1059 = vmatpush.bf16.msra.mxu0 %v1050
        %1060 = vmatmul.bf16.gmra.mxu0 %v1046
        %v1061 = vpop.f32.mrf.mxu0
        %v1062 = vadd.f32 0.0, %v1061
        %v1063 = vpop.f32.mrf.mxu0
        %1064 = vdwg.mxu0
        %v1065 = vadd.f32 %v977, %v1062
        %1066 = vrot.lane.b32.xlu0 %v979, 120
        %v1067 = vpop.permute.xlu0 %1066
        %1068 = vrot.lane.b32.xlu0 %v979, 88
        %v1069 = vpop.permute.xlu0 %1068
        %v1071 = vsel %vm983, %v1067, 0
        %v1074 = vsel %vm983, %v1069, 0
        %1076 = vmatpush.bf16.xpose.msra.mxu0 0
        %1077 = vmatpush.bf16.xpose.msra.mxu0 0
        %1078 = vmatpush.bf16.xpose.msra.mxu0 0
        %1079 = vmatpush.bf16.xpose.msra.mxu0 0
        %1080 = vmatpush.bf16.xpose.msra.mxu0 0
        %1081 = vmatpush.bf16.xpose.msra.mxu0 0
        %1082 = vmatpush.bf16.xpose.msra.mxu0 0
        %1083 = vmatpush.bf16.xpose.msra.mxu0 %v1074
        %1084 = vmatmul.bf16.gmra.mxu0 %v1071
        %v1085 = vpop.f32.mrf.mxu0
        %v1086 = vadd.f32 0.0, %v1085
        %v1087 = vpop.f32.mrf.mxu0
        %1088 = vdwg.mxu0
        %v1089 = vmul.f32 %v1086, 0.35355338
        %v1090 = vsel %vm1004, %v1089, -inf
        %1091 = vmax.xlane.f32.xlu0 %v1090
        %v1092 = vpop.xlane.xlu0 %1091
        %v1093 = vsub.f32 %v1089, %v1092
        %v1094 = vmul.f32 %v1093, 1.442695
        %v1095 = vpow.pop %v1094
        %v1096 = vsel %vm1004, %v1095, 0.0
        %1097 = vadd.xlane.f32.xlu0 %v1096
        %v1098 = vpop.xlane.xlu0 %1097
        %v1099 = vpack.c.bf16 %v1095, %v1095
        %1100 = vrot.lane.b32.xlu0 %v979, 56
        %v1101 = vpop.permute.xlu0 %1100
        %v1103 = vsel %vm1017, %v1099, 0
        %v1106 = vand.u32 %v1101, %v1024
        %1108 = vmatpush.bf16.msra.mxu0 0
        %1109 = vmatpush.bf16.msra.mxu0 0
        %1110 = vmatpush.bf16.msra.mxu0 0
        %1111 = vmatpush.bf16.msra.mxu0 0
        %1112 = vmatpush.bf16.msra.mxu0 0
        %1113 = vmatpush.bf16.msra.mxu0 0
        %1114 = vmatpush.bf16.msra.mxu0 0
        %1115 = vmatpush.bf16.msra.mxu0 %v1106
        %1116 = vmatmul.bf16.gmra.mxu0 %v1103
        %v1117 = vpop.f32.mrf.mxu0
        %v1118 = vadd.f32 0.0, %v1117
        %v1119 = vpop.f32.mrf.mxu0
        %1120 = vdwg.mxu0
        %v1121 = vrcp.pop %v1098
        %v1122 = vmul.f32 %v1118, %v1121
        %v1123 = vpack.c.bf16 %v1122, %v1122
        %v1124 = vpack.c.bf16 %v972, %v972
        %v1126 = vsel %vm983, %v1123, 0
        %v1129 = vsel %vm1048, %v1124, 0
        %1131 = vmatpush.bf16.msra.mxu0 0
        %1132 = vmatpush.bf16.msra.mxu0 0
        %1133 = vmatpush.bf16.msra.mxu0 0
        %1134 = vmatpush.bf16.msra.mxu0 0
        %1135 = vmatpush.bf16.msra.mxu0 0
        %1136 = vmatpush.bf16.msra.mxu0 0
        %1137 = vmatpush.bf16.msra.mxu0 0
        %1138 = vmatpush.bf16.msra.mxu0 %v1129
        %1139 = vmatmul.bf16.gmra.mxu0 %v1126
        %v1140 = vpop.f32.mrf.mxu0
        %v1141 = vadd.f32 0.0, %v1140
        %v1142 = vpop.f32.mrf.mxu0
        %1143 = vdwg.mxu0
        %v1144 = vadd.f32 %v1065, %v1141
        %1145 = vrot.lane.b32.xlu0 %v979, 112
        %v1146 = vpop.permute.xlu0 %1145
        %1147 = vrot.lane.b32.xlu0 %v979, 80
        %v1148 = vpop.permute.xlu0 %1147
        %v1150 = vsel %vm983, %v1146, 0
        %v1153 = vsel %vm983, %v1148, 0
        %1155 = vmatpush.bf16.xpose.msra.mxu0 0
        %1156 = vmatpush.bf16.xpose.msra.mxu0 0
        %1157 = vmatpush.bf16.xpose.msra.mxu0 0
        %1158 = vmatpush.bf16.xpose.msra.mxu0 0
        %1159 = vmatpush.bf16.xpose.msra.mxu0 0
        %1160 = vmatpush.bf16.xpose.msra.mxu0 0
        %1161 = vmatpush.bf16.xpose.msra.mxu0 0
        %1162 = vmatpush.bf16.xpose.msra.mxu0 %v1153
        %1163 = vmatmul.bf16.gmra.mxu0 %v1150
        %v1164 = vpop.f32.mrf.mxu0
        %v1165 = vadd.f32 0.0, %v1164
        %v1166 = vpop.f32.mrf.mxu0
        %1167 = vdwg.mxu0
        %v1168 = vmul.f32 %v1165, 0.35355338
        %v1169 = vsel %vm1004, %v1168, -inf
        %1170 = vmax.xlane.f32.xlu0 %v1169
        %v1171 = vpop.xlane.xlu0 %1170
        %v1172 = vsub.f32 %v1168, %v1171
        %v1173 = vmul.f32 %v1172, 1.442695
        %v1174 = vpow.pop %v1173
        %v1175 = vsel %vm1004, %v1174, 0.0
        %1176 = vadd.xlane.f32.xlu0 %v1175
        %v1177 = vpop.xlane.xlu0 %1176
        %v1178 = vpack.c.bf16 %v1174, %v1174
        %1179 = vrot.lane.b32.xlu0 %v979, 48
        %v1180 = vpop.permute.xlu0 %1179
        %v1182 = vsel %vm1017, %v1178, 0
        %v1185 = vand.u32 %v1180, %v1024
        %1187 = vmatpush.bf16.msra.mxu0 0
        %1188 = vmatpush.bf16.msra.mxu0 0
        %1189 = vmatpush.bf16.msra.mxu0 0
        %1190 = vmatpush.bf16.msra.mxu0 0
        %1191 = vmatpush.bf16.msra.mxu0 0
        %1192 = vmatpush.bf16.msra.mxu0 0
        %1193 = vmatpush.bf16.msra.mxu0 0
        %1194 = vmatpush.bf16.msra.mxu0 %v1185
        %1195 = vmatmul.bf16.gmra.mxu0 %v1182
        %v1196 = vpop.f32.mrf.mxu0
        %v1197 = vadd.f32 0.0, %v1196
        %v1198 = vpop.f32.mrf.mxu0
        %1199 = vdwg.mxu0
        %v1200 = vrcp.pop %v1177
        %v1201 = vmul.f32 %v1197, %v1200
        %v1202 = vpack.c.bf16 %v1201, %v1201
        %v1203 = vpack.c.bf16 %v973, %v973
        %v1205 = vsel %vm983, %v1202, 0
        %v1208 = vsel %vm1048, %v1203, 0
        %1210 = vmatpush.bf16.msra.mxu0 0
        %1211 = vmatpush.bf16.msra.mxu0 0
        %1212 = vmatpush.bf16.msra.mxu0 0
        %1213 = vmatpush.bf16.msra.mxu0 0
        %1214 = vmatpush.bf16.msra.mxu0 0
        %1215 = vmatpush.bf16.msra.mxu0 0
        %1216 = vmatpush.bf16.msra.mxu0 0
        %1217 = vmatpush.bf16.msra.mxu0 %v1208
        %1218 = vmatmul.bf16.gmra.mxu0 %v1205
        %v1219 = vpop.f32.mrf.mxu0
        %v1220 = vadd.f32 0.0, %v1219
        %v1221 = vpop.f32.mrf.mxu0
        %1222 = vdwg.mxu0
        %v1223 = vadd.f32 %v1144, %v1220
        %1224 = vrot.lane.b32.xlu0 %v979, 104
        %v1225 = vpop.permute.xlu0 %1224
        %1226 = vrot.lane.b32.xlu0 %v979, 72
        %v1227 = vpop.permute.xlu0 %1226
        %v1229 = vsel %vm983, %v1225, 0
        %v1232 = vsel %vm983, %v1227, 0
        %1234 = vmatpush.bf16.xpose.msra.mxu0 0
        %1235 = vmatpush.bf16.xpose.msra.mxu0 0
        %1236 = vmatpush.bf16.xpose.msra.mxu0 0
        %1237 = vmatpush.bf16.xpose.msra.mxu0 0
        %1238 = vmatpush.bf16.xpose.msra.mxu0 0
        %1239 = vmatpush.bf16.xpose.msra.mxu0 0
        %1240 = vmatpush.bf16.xpose.msra.mxu0 0
        %1241 = vmatpush.bf16.xpose.msra.mxu0 %v1232
        %1242 = vmatmul.bf16.gmra.mxu0 %v1229
        %v1243 = vpop.f32.mrf.mxu0
        %v1244 = vadd.f32 0.0, %v1243
        %v1245 = vpop.f32.mrf.mxu0
        %1246 = vdwg.mxu0
        %v1247 = vmul.f32 %v1244, 0.35355338
        %v1248 = vsel %vm1004, %v1247, -inf
        %1249 = vmax.xlane.f32.xlu0 %v1248
        %v1250 = vpop.xlane.xlu0 %1249
        %v1251 = vsub.f32 %v1247, %v1250
        %v1252 = vmul.f32 %v1251, 1.442695
        %v1253 = vpow.pop %v1252
        %v1254 = vsel %vm1004, %v1253, 0.0
        %1255 = vadd.xlane.f32.xlu0 %v1254
        %v1256 = vpop.xlane.xlu0 %1255
        %v1257 = vpack.c.bf16 %v1253, %v1253
        %1258 = vrot.lane.b32.xlu0 %v979, 40
        %v1259 = vpop.permute.xlu0 %1258
        %v1261 = vsel %vm1017, %v1257, 0
        %v1264 = vand.u32 %v1259, %v1024
        %1266 = vmatpush.bf16.msra.mxu0 0
        %1267 = vmatpush.bf16.msra.mxu0 0
        %1268 = vmatpush.bf16.msra.mxu0 0
        %1269 = vmatpush.bf16.msra.mxu0 0
        %1270 = vmatpush.bf16.msra.mxu0 0
        %1271 = vmatpush.bf16.msra.mxu0 0
        %1272 = vmatpush.bf16.msra.mxu0 0
        %1273 = vmatpush.bf16.msra.mxu0 %v1264
        %1274 = vmatmul.bf16.gmra.mxu0 %v1261
        %v1275 = vpop.f32.mrf.mxu0
        %v1276 = vadd.f32 0.0, %v1275
        %v1277 = vpop.f32.mrf.mxu0
        %1278 = vdwg.mxu0
        %v1279 = vrcp.pop %v1256
        %v1280 = vmul.f32 %v1276, %v1279
        %v1281 = vpack.c.bf16 %v1280, %v1280
        %v1282 = vpack.c.bf16 %v974, %v974
        %v1284 = vsel %vm983, %v1281, 0
        %v1287 = vsel %vm1048, %v1282, 0
        %1289 = vmatpush.bf16.msra.mxu0 0
        %1290 = vmatpush.bf16.msra.mxu0 0
        %1291 = vmatpush.bf16.msra.mxu0 0
        %1292 = vmatpush.bf16.msra.mxu0 0
        %1293 = vmatpush.bf16.msra.mxu0 0
        %1294 = vmatpush.bf16.msra.mxu0 0
        %1295 = vmatpush.bf16.msra.mxu0 0
        %1296 = vmatpush.bf16.msra.mxu0 %v1287
        %1297 = vmatmul.bf16.gmra.mxu0 %v1284
        %v1298 = vpop.f32.mrf.mxu0
        %v1299 = vadd.f32 0.0, %v1298
        %v1300 = vpop.f32.mrf.mxu0
        %1301 = vdwg.mxu0
        %v1302 = vadd.f32 %v1223, %v1299
        %v1303 = vadd.f32 %v902, %v1302
        %v1304 = vld [vmem:[%s11] sm:$0x1]
        %v1305 = vld [vmem:[%s12] sm:$0x1]
        %v1306 = vsel %vm905, %v1303, 0.0
        %1307 = vadd.xlane.f32.xlu0 %v1306
        %v1308 = vpop.xlane.xlu0 %1307
        %v1309 = vmul.f32 %v1308, %v915
        %v1310 = vsub.f32 %v1303, %v1309
        %v1311 = vmul.f32 %v1310, %v1310
        %v1312 = vsel %vm905, %v1311, 0.0
        %1313 = vadd.xlane.f32.xlu0 %v1312
        %v1314 = vpop.xlane.xlu0 %1313
        %v1315 = vmul.f32 %v1314, %v915
        %v1316 = vadd.f32 %v1315, 1e-06
        %v1317 = vrsqrt.pop %v1316
        %v1318 = vmul.f32 %v1317, %v1316
        %v1319 = vmul.f32 %v1318, %v1317
        %v1320 = vmul.f32 0.5, %v1319
        %v1321 = vsub.f32 1.5, %v1320
        %v1322 = vmul.f32 %v1317, %v1321
        %vm1323 = vweird.f32 %v1316
        %vm1324 = vweird.f32 %v1317
        %vm1325 = vmor %vm1323, %vm1324
        %v1326 = vsel %vm1325, %v1317, %v1322
        %v1327 = vmul.f32 %v1310, %v1326
        %v1329 = vperm.slane %v1304, 0
        %v1331 = vmul.f32 %v1327, %v1329
        %v1333 = vperm.slane %v1305, 0
        %v1335 = vadd.f32 %v1331, %v1333
        %v1336 = vld [vmem:[%s13] sm:$0xff]
        %v1337 = vld [vmem:[%s13 + $0x8] sm:$0xff]
        %v1338 = vld [vmem:[%s13 + $0x10] sm:$0xff]
        %v1339 = vld [vmem:[%s13 + $0x18] sm:$0xff]
        %v1340 = vpack.c.bf16 %v1335, %v1335
        %v1341 = vpack.c.bf16 %v1337, %v1336
        %v1342 = vpack.c.bf16 %v1339, %v1338
        %v1343 = vld [vmem:[%s14] sm:$0x1]
        %v1345 = vperm.slane %v1343, 0
        %v1348 = vsel %vm954, %v1340, 0
        %1350 = vmatpush.bf16.msra.mxu0 0
        %1351 = vmatpush.bf16.msra.mxu0 0
        %1352 = vmatpush.bf16.msra.mxu0 0
        %1353 = vmatpush.bf16.msra.mxu0 0
        %1354 = vmatpush.bf16.msra.mxu0 0
        %1355 = vmatpush.bf16.msra.mxu0 0
        %1356 = vmatpush.bf16.msra.mxu0 %v1342
        %1357 = vmatpush.bf16.msra.mxu0 %v1341
        %1358 = vmatmul.bf16.gmra.mxu0 %v1348
        %v1359 = vpop.f32.mrf.mxu0
        %v1360 = vadd.f32 %v1345, %v1359
        %v1361 = vpop.f32.mrf.mxu0
        %1362 = vdwg.mxu0
        %v1363 = vmul.f32 %v1360, 0.5
        %v1364 = vmul.f32 %v1360, 0.70710677
        %v1365 = vmul.f32 %v1364, %v1364
        %v1366 = vmin.f32 16.0, %v1365
        %v1367 = vmul.f32 %v1366, 2.1237322e-06
        %v1368 = vadd.f32 %v1367, 0.00028619796
        %v1369 = vmul.f32 %v1366, %v1368
        %v1370 = vadd.f32 %v1369, 0.0036580483
        %v1371 = vmul.f32 %v1366, %v1370
        %v1372 = vadd.f32 %v1371, 0.05243302
        %v1373 = vmul.f32 %v1366, %v1372
        %v1374 = vadd.f32 %v1373, 0.18741608
        %v1375 = vmul.f32 %v1366, %v1374
        %v1376 = vadd.f32 %v1375, 1.1283791
        %v1377 = vmul.f32 %v1364, %v1376
        %v1378 = vmul.f32 %v1366, 3.8918573e-05
        %v1379 = vadd.f32 %v1378, 0.001143296
        %v1380 = vmul.f32 %v1366, %v1379
        %v1381 = vadd.f32 %v1380, 0.014752088
        %v1382 = vmul.f32 %v1366, %v1381
        %v1383 = vadd.f32 %v1382, 0.112945676
        %v1384 = vmul.f32 %v1366, %v1383
        %v1385 = vadd.f32 %v1384, 0.4994258
        %v1386 = vmul.f32 %v1366, %v1385
        %v1387 = vadd.f32 %v1386, 1.0
        %v1388 = vrcp.pop %v1387
        %v1389 = vmul.f32 %v1387, %v1388
        %v1390 = vsub.f32 1.0, %v1389
        %v1391 = vmul.f32 %v1388, %v1390
        %v1392 = vadd.f32 %v1388, %v1391
        %vm1393 = vweird.f32 %v1387
        %vm1394 = vweird.f32 %v1388
        %vm1395 = vmor %vm1393, %vm1394
        %v1396 = vsel %vm1395, %v1388, %v1392
        %v1397 = vand.u32 2147483647, %v1387
        %vm1398 = vcmp.eq.f32.partialorder %v1397, 8.507059e+37
        %v1399 = vand.u32 %v1387, 2147483648
        %v1400 = vor.u32 1.1754944e-38, %v1399
        %v1401 = vsel %vm1398, %v1400, %v1396
        %v1402 = vmul.f32 %v1377, %v1401
        %v1403 = vmin.f32 %v1402, 1.0
        %v1404 = vmax.f32 %v1403, -1.0
        %v1405 = vadd.f32 %v1404, 1.0
        %v1406 = vmul.f32 %v1363, %v1405
        %v1407 = vld [vmem:[%s15] sm:$0xff]
        %v1408 = vld [vmem:[%s15 + $0x8] sm:$0xff]
        %v1409 = vld [vmem:[%s15 + $0x10] sm:$0xff]
        %v1410 = vld [vmem:[%s15 + $0x18] sm:$0xff]
        %v1411 = vld [vmem:[%s15 + $0x20] sm:$0xff]
        %v1412 = vld [vmem:[%s15 + $0x28] sm:$0xff]
        %v1413 = vld [vmem:[%s15 + $0x30] sm:$0xff]
        %v1414 = vld [vmem:[%s15 + $0x38] sm:$0xff]
        %v1415 = vld [vmem:[%s15 + $0x40] sm:$0xff]
        %v1416 = vld [vmem:[%s15 + $0x48] sm:$0xff]
        %v1417 = vld [vmem:[%s15 + $0x50] sm:$0xff]
        %v1418 = vld [vmem:[%s15 + $0x58] sm:$0xff]
        %v1419 = vld [vmem:[%s15 + $0x60] sm:$0xff]
        %v1420 = vld [vmem:[%s15 + $0x68] sm:$0xff]
        %v1421 = vld [vmem:[%s15 + $0x70] sm:$0xff]
        %v1422 = vld [vmem:[%s15 + $0x78] sm:$0xff]
        %v1423 = vpack.c.bf16 %v1406, %v1406
        %v1424 = vpack.c.bf16 %v1408, %v1407
        %v1425 = vpack.c.bf16 %v1410, %v1409
        %v1426 = vpack.c.bf16 %v1412, %v1411
        %v1427 = vpack.c.bf16 %v1414, %v1413
        %v1428 = vpack.c.bf16 %v1416, %v1415
        %v1429 = vpack.c.bf16 %v1418, %v1417
        %v1430 = vpack.c.bf16 %v1420, %v1419
        %v1431 = vpack.c.bf16 %v1422, %v1421
        %v1432 = vld [vmem:[%s16] sm:$0x1]
        %v1434 = vperm.slane %v1432, 0
        %1436 = vmatpush.bf16.msra.mxu0 %v1431
        %1437 = vmatpush.bf16.msra.mxu0 %v1430
        %1438 = vmatpush.bf16.msra.mxu0 %v1429
        %1439 = vmatpush.bf16.msra.mxu0 %v1428
        %1440 = vmatpush.bf16.msra.mxu0 %v1427
        %1441 = vmatpush.bf16.msra.mxu0 %v1426
        %1442 = vmatpush.bf16.msra.mxu0 %v1425
        %1443 = vmatpush.bf16.msra.mxu0 %v1424
        %1444 = vmatmul.bf16.gmra.mxu0 %v1423
        %v1445 = vpop.f32.mrf.mxu0
        %v1446 = vadd.f32 %v1434, %v1445
        %v1447 = vpop.f32.mrf.mxu0
        %1448 = vdwg.mxu0
        %v1449 = vadd.f32 %v1303, %v1446
        %s1450 = scalar_lea.vmem %s5, 1
        %v1451 = vld [vmem:[%s1450] sm:$0x1]
        %s1452 = scalar_lea.vmem %s6, 1
        %v1453 = vld [vmem:[%s1452] sm:$0x1]
        %v1454 = vsel %vm905, %v1449, 0.0
        %1455 = vadd.xlane.f32.xlu0 %v1454
        %v1456 = vpop.xlane.xlu0 %1455
        %v1457 = vmul.f32 %v1456, %v915
        %v1458 = vsub.f32 %v1449, %v1457
        %v1459 = vmul.f32 %v1458, %v1458
        %v1460 = vsel %vm905, %v1459, 0.0
        %1461 = vadd.xlane.f32.xlu0 %v1460
        %v1462 = vpop.xlane.xlu0 %1461
        %v1463 = vmul.f32 %v1462, %v915
        %v1464 = vadd.f32 %v1463, 1e-06
        %v1465 = vrsqrt.pop %v1464
        %v1466 = vmul.f32 %v1465, %v1464
        %v1467 = vmul.f32 %v1466, %v1465
        %v1468 = vmul.f32 0.5, %v1467
        %v1469 = vsub.f32 1.5, %v1468
        %v1470 = vmul.f32 %v1465, %v1469
        %vm1471 = vweird.f32 %v1464
        %vm1472 = vweird.f32 %v1465
        %vm1473 = vmor %vm1471, %vm1472
        %v1474 = vsel %vm1473, %v1465, %v1470
        %v1475 = vmul.f32 %v1458, %v1474
        %v1477 = vperm.slane %v1451, 0
        %v1479 = vmul.f32 %v1475, %v1477
        %v1481 = vperm.slane %v1453, 0
        %v1483 = vadd.f32 %v1479, %v1481
        %s1484 = scalar_lea.vmem %s7, 32
        %v1485 = vld [vmem:[%s1484] sm:$0xff]
        %v1486 = vld [vmem:[%s1484 + $0x8] sm:$0xff]
        %v1487 = vld [vmem:[%s1484 + $0x10] sm:$0xff]
        %v1488 = vld [vmem:[%s1484 + $0x18] sm:$0xff]
        %v1489 = vpack.c.bf16 %v1483, %v1483
        %v1490 = vpack.c.bf16 %v1486, %v1485
        %v1491 = vpack.c.bf16 %v1488, %v1487
        %s1492 = scalar_lea.vmem %s8, 1
        %v1493 = vld [vmem:[%s1492] sm:$0x1]
        %v1495 = vperm.slane %v1493, 0
        %v1498 = vsel %vm954, %v1489, 0
        %1500 = vmatpush.bf16.msra.mxu0 0
        %1501 = vmatpush.bf16.msra.mxu0 0
        %1502 = vmatpush.bf16.msra.mxu0 0
        %1503 = vmatpush.bf16.msra.mxu0 0
        %1504 = vmatpush.bf16.msra.mxu0 0
        %1505 = vmatpush.bf16.msra.mxu0 0
        %1506 = vmatpush.bf16.msra.mxu0 %v1491
        %1507 = vmatpush.bf16.msra.mxu0 %v1490
        %1508 = vmatmul.bf16.gmra.mxu0 %v1498
        %v1509 = vpop.f32.mrf.mxu0
        %v1510 = vadd.f32 %v1495, %v1509
        %v1511 = vpop.f32.mrf.mxu0
        %1512 = vdwg.mxu0
        %s1513 = scalar_lea.vmem %s9, 32
        %v1514 = vld [vmem:[%s1513] sm:$0xff]
        %v1515 = vld [vmem:[%s1513 + $0x8] sm:$0xff]
        %v1516 = vld [vmem:[%s1513 + $0x10] sm:$0xff]
        %v1517 = vld [vmem:[%s1513 + $0x18] sm:$0xff]
        %s1518 = scalar_lea.vmem %s10, 1
        %v1519 = vld [vmem:[%s1518] sm:$0x1]
        %v1521 = vperm.slane %v1519, 0
        %v1523 = vpack.c.bf16 %v1510, %v1510
        %1525 = vrot.lane.b32.xlu0 %v1523, 96
        %v1526 = vpop.permute.xlu0 %1525
        %v1528 = vsel %vm983, %v1523, 0
        %v1531 = vsel %vm983, %v1526, 0
        %1533 = vmatpush.bf16.xpose.msra.mxu0 0
        %1534 = vmatpush.bf16.xpose.msra.mxu0 0
        %1535 = vmatpush.bf16.xpose.msra.mxu0 0
        %1536 = vmatpush.bf16.xpose.msra.mxu0 0
        %1537 = vmatpush.bf16.xpose.msra.mxu0 0
        %1538 = vmatpush.bf16.xpose.msra.mxu0 0
        %1539 = vmatpush.bf16.xpose.msra.mxu0 0
        %1540 = vmatpush.bf16.xpose.msra.mxu0 %v1531
        %1541 = vmatmul.bf16.gmra.mxu0 %v1528
        %v1542 = vpop.f32.mrf.mxu0
        %v1543 = vadd.f32 0.0, %v1542
        %v1544 = vpop.f32.mrf.mxu0
        %1545 = vdwg.mxu0
        %v1546 = vmul.f32 %v1543, 0.35355338
        %v1547 = vsel %vm1004, %v1546, -inf
        %1548 = vmax.xlane.f32.xlu0 %v1547
        %v1549 = vpop.xlane.xlu0 %1548
        %v1550 = vsub.f32 %v1546, %v1549
        %v1551 = vmul.f32 %v1550, 1.442695
        %v1552 = vpow.pop %v1551
        %v1553 = vsel %vm1004, %v1552, 0.0
        %1554 = vadd.xlane.f32.xlu0 %v1553
        %v1555 = vpop.xlane.xlu0 %1554
        %v1556 = vpack.c.bf16 %v1552, %v1552
        %1557 = vrot.lane.b32.xlu0 %v1523, 64
        %v1558 = vpop.permute.xlu0 %1557
        %v1560 = vsel %vm1017, %v1556, 0
        %v1563 = vand.u32 %v1558, %v1024
        %1565 = vmatpush.bf16.msra.mxu0 0
        %1566 = vmatpush.bf16.msra.mxu0 0
        %1567 = vmatpush.bf16.msra.mxu0 0
        %1568 = vmatpush.bf16.msra.mxu0 0
        %1569 = vmatpush.bf16.msra.mxu0 0
        %1570 = vmatpush.bf16.msra.mxu0 0
        %1571 = vmatpush.bf16.msra.mxu0 0
        %1572 = vmatpush.bf16.msra.mxu0 %v1563
        %1573 = vmatmul.bf16.gmra.mxu0 %v1560
        %v1574 = vpop.f32.mrf.mxu0
        %v1575 = vadd.f32 0.0, %v1574
        %v1576 = vpop.f32.mrf.mxu0
        %1577 = vdwg.mxu0
        %v1578 = vrcp.pop %v1555
        %v1579 = vmul.f32 %v1575, %v1578
        %v1580 = vpack.c.bf16 %v1579, %v1579
        %v1581 = vpack.c.bf16 %v1514, %v1514
        %v1583 = vsel %vm983, %v1580, 0
        %v1586 = vsel %vm1048, %v1581, 0
        %1588 = vmatpush.bf16.msra.mxu0 0
        %1589 = vmatpush.bf16.msra.mxu0 0
        %1590 = vmatpush.bf16.msra.mxu0 0
        %1591 = vmatpush.bf16.msra.mxu0 0
        %1592 = vmatpush.bf16.msra.mxu0 0
        %1593 = vmatpush.bf16.msra.mxu0 0
        %1594 = vmatpush.bf16.msra.mxu0 0
        %1595 = vmatpush.bf16.msra.mxu0 %v1586
        %1596 = vmatmul.bf16.gmra.mxu0 %v1583
        %v1597 = vpop.f32.mrf.mxu0
        %v1598 = vadd.f32 0.0, %v1597
        %v1599 = vpop.f32.mrf.mxu0
        %1600 = vdwg.mxu0
        %v1601 = vadd.f32 %v1521, %v1598
        %1602 = vrot.lane.b32.xlu0 %v1523, 120
        %v1603 = vpop.permute.xlu0 %1602
        %1604 = vrot.lane.b32.xlu0 %v1523, 88
        %v1605 = vpop.permute.xlu0 %1604
        %v1607 = vsel %vm983, %v1603, 0
        %v1610 = vsel %vm983, %v1605, 0
        %1612 = vmatpush.bf16.xpose.msra.mxu0 0
        %1613 = vmatpush.bf16.xpose.msra.mxu0 0
        %1614 = vmatpush.bf16.xpose.msra.mxu0 0
        %1615 = vmatpush.bf16.xpose.msra.mxu0 0
        %1616 = vmatpush.bf16.xpose.msra.mxu0 0
        %1617 = vmatpush.bf16.xpose.msra.mxu0 0
        %1618 = vmatpush.bf16.xpose.msra.mxu0 0
        %1619 = vmatpush.bf16.xpose.msra.mxu0 %v1610
        %1620 = vmatmul.bf16.gmra.mxu0 %v1607
        %v1621 = vpop.f32.mrf.mxu0
        %v1622 = vadd.f32 0.0, %v1621
        %v1623 = vpop.f32.mrf.mxu0
        %1624 = vdwg.mxu0
        %v1625 = vmul.f32 %v1622, 0.35355338
        %v1626 = vsel %vm1004, %v1625, -inf
        %1627 = vmax.xlane.f32.xlu0 %v1626
        %v1628 = vpop.xlane.xlu0 %1627
        %v1629 = vsub.f32 %v1625, %v1628
        %v1630 = vmul.f32 %v1629, 1.442695
        %v1631 = vpow.pop %v1630
        %v1632 = vsel %vm1004, %v1631, 0.0
        %1633 = vadd.xlane.f32.xlu0 %v1632
        %v1634 = vpop.xlane.xlu0 %1633
        %v1635 = vpack.c.bf16 %v1631, %v1631
        %1636 = vrot.lane.b32.xlu0 %v1523, 56
        %v1637 = vpop.permute.xlu0 %1636
        %v1639 = vsel %vm1017, %v1635, 0
        %v1642 = vand.u32 %v1637, %v1024
        %1644 = vmatpush.bf16.msra.mxu0 0
        %1645 = vmatpush.bf16.msra.mxu0 0
        %1646 = vmatpush.bf16.msra.mxu0 0
        %1647 = vmatpush.bf16.msra.mxu0 0
        %1648 = vmatpush.bf16.msra.mxu0 0
        %1649 = vmatpush.bf16.msra.mxu0 0
        %1650 = vmatpush.bf16.msra.mxu0 0
        %1651 = vmatpush.bf16.msra.mxu0 %v1642
        %1652 = vmatmul.bf16.gmra.mxu0 %v1639
        %v1653 = vpop.f32.mrf.mxu0
        %v1654 = vadd.f32 0.0, %v1653
        %v1655 = vpop.f32.mrf.mxu0
        %1656 = vdwg.mxu0
        %v1657 = vrcp.pop %v1634
        %v1658 = vmul.f32 %v1654, %v1657
        %v1659 = vpack.c.bf16 %v1658, %v1658
        %v1660 = vpack.c.bf16 %v1515, %v1515
        %v1662 = vsel %vm983, %v1659, 0
        %v1665 = vsel %vm1048, %v1660, 0
        %1667 = vmatpush.bf16.msra.mxu0 0
        %1668 = vmatpush.bf16.msra.mxu0 0
        %1669 = vmatpush.bf16.msra.mxu0 0
        %1670 = vmatpush.bf16.msra.mxu0 0
        %1671 = vmatpush.bf16.msra.mxu0 0
        %1672 = vmatpush.bf16.msra.mxu0 0
        %1673 = vmatpush.bf16.msra.mxu0 0
        %1674 = vmatpush.bf16.msra.mxu0 %v1665
        %1675 = vmatmul.bf16.gmra.mxu0 %v1662
        %v1676 = vpop.f32.mrf.mxu0
        %v1677 = vadd.f32 0.0, %v1676
        %v1678 = vpop.f32.mrf.mxu0
        %1679 = vdwg.mxu0
        %v1680 = vadd.f32 %v1601, %v1677
        %1681 = vrot.lane.b32.xlu0 %v1523, 112
        %v1682 = vpop.permute.xlu0 %1681
        %1683 = vrot.lane.b32.xlu0 %v1523, 80
        %v1684 = vpop.permute.xlu0 %1683
        %v1686 = vsel %vm983, %v1682, 0
        %v1689 = vsel %vm983, %v1684, 0
        %1691 = vmatpush.bf16.xpose.msra.mxu0 0
        %1692 = vmatpush.bf16.xpose.msra.mxu0 0
        %1693 = vmatpush.bf16.xpose.msra.mxu0 0
        %1694 = vmatpush.bf16.xpose.msra.mxu0 0
        %1695 = vmatpush.bf16.xpose.msra.mxu0 0
        %1696 = vmatpush.bf16.xpose.msra.mxu0 0
        %1697 = vmatpush.bf16.xpose.msra.mxu0 0
        %1698 = vmatpush.bf16.xpose.msra.mxu0 %v1689
        %1699 = vmatmul.bf16.gmra.mxu0 %v1686
        %v1700 = vpop.f32.mrf.mxu0
        %v1701 = vadd.f32 0.0, %v1700
        %v1702 = vpop.f32.mrf.mxu0
        %1703 = vdwg.mxu0
        %v1704 = vmul.f32 %v1701, 0.35355338
        %v1705 = vsel %vm1004, %v1704, -inf
        %1706 = vmax.xlane.f32.xlu0 %v1705
        %v1707 = vpop.xlane.xlu0 %1706
        %v1708 = vsub.f32 %v1704, %v1707
        %v1709 = vmul.f32 %v1708, 1.442695
        %v1710 = vpow.pop %v1709
        %v1711 = vsel %vm1004, %v1710, 0.0
        %1712 = vadd.xlane.f32.xlu0 %v1711
        %v1713 = vpop.xlane.xlu0 %1712
        %v1714 = vpack.c.bf16 %v1710, %v1710
        %1715 = vrot.lane.b32.xlu0 %v1523, 48
        %v1716 = vpop.permute.xlu0 %1715
        %v1718 = vsel %vm1017, %v1714, 0
        %v1721 = vand.u32 %v1716, %v1024
        %1723 = vmatpush.bf16.msra.mxu0 0
        %1724 = vmatpush.bf16.msra.mxu0 0
        %1725 = vmatpush.bf16.msra.mxu0 0
        %1726 = vmatpush.bf16.msra.mxu0 0
        %1727 = vmatpush.bf16.msra.mxu0 0
        %1728 = vmatpush.bf16.msra.mxu0 0
        %1729 = vmatpush.bf16.msra.mxu0 0
        %1730 = vmatpush.bf16.msra.mxu0 %v1721
        %1731 = vmatmul.bf16.gmra.mxu0 %v1718
        %v1732 = vpop.f32.mrf.mxu0
        %v1733 = vadd.f32 0.0, %v1732
        %v1734 = vpop.f32.mrf.mxu0
        %1735 = vdwg.mxu0
        %v1736 = vrcp.pop %v1713
        %v1737 = vmul.f32 %v1733, %v1736
        %v1738 = vpack.c.bf16 %v1737, %v1737
        %v1739 = vpack.c.bf16 %v1516, %v1516
        %v1741 = vsel %vm983, %v1738, 0
        %v1744 = vsel %vm1048, %v1739, 0
        %1746 = vmatpush.bf16.msra.mxu0 0
        %1747 = vmatpush.bf16.msra.mxu0 0
        %1748 = vmatpush.bf16.msra.mxu0 0
        %1749 = vmatpush.bf16.msra.mxu0 0
        %1750 = vmatpush.bf16.msra.mxu0 0
        %1751 = vmatpush.bf16.msra.mxu0 0
        %1752 = vmatpush.bf16.msra.mxu0 0
        %1753 = vmatpush.bf16.msra.mxu0 %v1744
        %1754 = vmatmul.bf16.gmra.mxu0 %v1741
        %v1755 = vpop.f32.mrf.mxu0
        %v1756 = vadd.f32 0.0, %v1755
        %v1757 = vpop.f32.mrf.mxu0
        %1758 = vdwg.mxu0
        %v1759 = vadd.f32 %v1680, %v1756
        %1760 = vrot.lane.b32.xlu0 %v1523, 104
        %v1761 = vpop.permute.xlu0 %1760
        %1762 = vrot.lane.b32.xlu0 %v1523, 72
        %v1763 = vpop.permute.xlu0 %1762
        %v1765 = vsel %vm983, %v1761, 0
        %v1768 = vsel %vm983, %v1763, 0
        %1770 = vmatpush.bf16.xpose.msra.mxu0 0
        %1771 = vmatpush.bf16.xpose.msra.mxu0 0
        %1772 = vmatpush.bf16.xpose.msra.mxu0 0
        %1773 = vmatpush.bf16.xpose.msra.mxu0 0
        %1774 = vmatpush.bf16.xpose.msra.mxu0 0
        %1775 = vmatpush.bf16.xpose.msra.mxu0 0
        %1776 = vmatpush.bf16.xpose.msra.mxu0 0
        %1777 = vmatpush.bf16.xpose.msra.mxu0 %v1768
        %1778 = vmatmul.bf16.gmra.mxu0 %v1765
        %v1779 = vpop.f32.mrf.mxu0
        %v1780 = vadd.f32 0.0, %v1779
        %v1781 = vpop.f32.mrf.mxu0
        %1782 = vdwg.mxu0
        %v1783 = vmul.f32 %v1780, 0.35355338
        %v1784 = vsel %vm1004, %v1783, -inf
        %1785 = vmax.xlane.f32.xlu0 %v1784
        %v1786 = vpop.xlane.xlu0 %1785
        %v1787 = vsub.f32 %v1783, %v1786
        %v1788 = vmul.f32 %v1787, 1.442695
        %v1789 = vpow.pop %v1788
        %v1790 = vsel %vm1004, %v1789, 0.0
        %1791 = vadd.xlane.f32.xlu0 %v1790
        %v1792 = vpop.xlane.xlu0 %1791
        %v1793 = vpack.c.bf16 %v1789, %v1789
        %1794 = vrot.lane.b32.xlu0 %v1523, 40
        %v1795 = vpop.permute.xlu0 %1794
        %v1797 = vsel %vm1017, %v1793, 0
        %v1800 = vand.u32 %v1795, %v1024
        %1802 = vmatpush.bf16.msra.mxu0 0
        %1803 = vmatpush.bf16.msra.mxu0 0
        %1804 = vmatpush.bf16.msra.mxu0 0
        %1805 = vmatpush.bf16.msra.mxu0 0
        %1806 = vmatpush.bf16.msra.mxu0 0
        %1807 = vmatpush.bf16.msra.mxu0 0
        %1808 = vmatpush.bf16.msra.mxu0 0
        %1809 = vmatpush.bf16.msra.mxu0 %v1800
        %1810 = vmatmul.bf16.gmra.mxu0 %v1797
        %v1811 = vpop.f32.mrf.mxu0
        %v1812 = vadd.f32 0.0, %v1811
        %v1813 = vpop.f32.mrf.mxu0
        %1814 = vdwg.mxu0
        %v1815 = vrcp.pop %v1792
        %v1816 = vmul.f32 %v1812, %v1815
        %v1817 = vpack.c.bf16 %v1816, %v1816
        %v1818 = vpack.c.bf16 %v1517, %v1517
        %v1820 = vsel %vm983, %v1817, 0
        %v1823 = vsel %vm1048, %v1818, 0
        %1825 = vmatpush.bf16.msra.mxu0 0
        %1826 = vmatpush.bf16.msra.mxu0 0
        %1827 = vmatpush.bf16.msra.mxu0 0
        %1828 = vmatpush.bf16.msra.mxu0 0
        %1829 = vmatpush.bf16.msra.mxu0 0
        %1830 = vmatpush.bf16.msra.mxu0 0
        %1831 = vmatpush.bf16.msra.mxu0 0
        %1832 = vmatpush.bf16.msra.mxu0 %v1823
        %1833 = vmatmul.bf16.gmra.mxu0 %v1820
        %v1834 = vpop.f32.mrf.mxu0
        %v1835 = vadd.f32 0.0, %v1834
        %v1836 = vpop.f32.mrf.mxu0
        %1837 = vdwg.mxu0
        %v1838 = vadd.f32 %v1759, %v1835
        %v1839 = vadd.f32 %v1449, %v1838
        %s1840 = scalar_lea.vmem %s11, 1
        %v1841 = vld [vmem:[%s1840] sm:$0x1]
        %s1842 = scalar_lea.vmem %s12, 1
        %v1843 = vld [vmem:[%s1842] sm:$0x1]
        %v1844 = vsel %vm905, %v1839, 0.0
        %1845 = vadd.xlane.f32.xlu0 %v1844
        %v1846 = vpop.xlane.xlu0 %1845
        %v1847 = vmul.f32 %v1846, %v915
        %v1848 = vsub.f32 %v1839, %v1847
        %v1849 = vmul.f32 %v1848, %v1848
        %v1850 = vsel %vm905, %v1849, 0.0
        %1851 = vadd.xlane.f32.xlu0 %v1850
        %v1852 = vpop.xlane.xlu0 %1851
        %v1853 = vmul.f32 %v1852, %v915
        %v1854 = vadd.f32 %v1853, 1e-06
        %v1855 = vrsqrt.pop %v1854
        %v1856 = vmul.f32 %v1855, %v1854
        %v1857 = vmul.f32 %v1856, %v1855
        %v1858 = vmul.f32 0.5, %v1857
        %v1859 = vsub.f32 1.5, %v1858
        %v1860 = vmul.f32 %v1855, %v1859
        %vm1861 = vweird.f32 %v1854
        %vm1862 = vweird.f32 %v1855
        %vm1863 = vmor %vm1861, %vm1862
        %v1864 = vsel %vm1863, %v1855, %v1860
        %v1865 = vmul.f32 %v1848, %v1864
        %v1867 = vperm.slane %v1841, 0
        %v1869 = vmul.f32 %v1865, %v1867
        %v1871 = vperm.slane %v1843, 0
        %v1873 = vadd.f32 %v1869, %v1871
        %s1874 = scalar_lea.vmem %s13, 32
        %v1875 = vld [vmem:[%s1874] sm:$0xff]
        %v1876 = vld [vmem:[%s1874 + $0x8] sm:$0xff]
        %v1877 = vld [vmem:[%s1874 + $0x10] sm:$0xff]
        %v1878 = vld [vmem:[%s1874 + $0x18] sm:$0xff]
        %v1879 = vpack.c.bf16 %v1873, %v1873
        %v1880 = vpack.c.bf16 %v1876, %v1875
        %v1881 = vpack.c.bf16 %v1878, %v1877
        %s1882 = scalar_lea.vmem %s14, 1
        %v1883 = vld [vmem:[%s1882] sm:$0x1]
        %v1885 = vperm.slane %v1883, 0
        %v1888 = vsel %vm954, %v1879, 0
        %1890 = vmatpush.bf16.msra.mxu0 0
        %1891 = vmatpush.bf16.msra.mxu0 0
        %1892 = vmatpush.bf16.msra.mxu0 0
        %1893 = vmatpush.bf16.msra.mxu0 0
        %1894 = vmatpush.bf16.msra.mxu0 0
        %1895 = vmatpush.bf16.msra.mxu0 0
        %1896 = vmatpush.bf16.msra.mxu0 %v1881
        %1897 = vmatpush.bf16.msra.mxu0 %v1880
        %1898 = vmatmul.bf16.gmra.mxu0 %v1888
        %v1899 = vpop.f32.mrf.mxu0
        %v1900 = vadd.f32 %v1885, %v1899
        %v1901 = vpop.f32.mrf.mxu0
        %1902 = vdwg.mxu0
        %v1903 = vmul.f32 %v1900, 0.5
        %v1904 = vmul.f32 %v1900, 0.70710677
        %v1905 = vmul.f32 %v1904, %v1904
        %v1906 = vmin.f32 16.0, %v1905
        %v1907 = vmul.f32 %v1906, 2.1237322e-06
        %v1908 = vadd.f32 %v1907, 0.00028619796
        %v1909 = vmul.f32 %v1906, %v1908
        %v1910 = vadd.f32 %v1909, 0.0036580483
        %v1911 = vmul.f32 %v1906, %v1910
        %v1912 = vadd.f32 %v1911, 0.05243302
        %v1913 = vmul.f32 %v1906, %v1912
        %v1914 = vadd.f32 %v1913, 0.18741608
        %v1915 = vmul.f32 %v1906, %v1914
        %v1916 = vadd.f32 %v1915, 1.1283791
        %v1917 = vmul.f32 %v1904, %v1916
        %v1918 = vmul.f32 %v1906, 3.8918573e-05
        %v1919 = vadd.f32 %v1918, 0.001143296
        %v1920 = vmul.f32 %v1906, %v1919
        %v1921 = vadd.f32 %v1920, 0.014752088
        %v1922 = vmul.f32 %v1906, %v1921
        %v1923 = vadd.f32 %v1922, 0.112945676
        %v1924 = vmul.f32 %v1906, %v1923
        %v1925 = vadd.f32 %v1924, 0.4994258
        %v1926 = vmul.f32 %v1906, %v1925
        %v1927 = vadd.f32 %v1926, 1.0
        %v1928 = vrcp.pop %v1927
        %v1929 = vmul.f32 %v1927, %v1928
        %v1930 = vsub.f32 1.0, %v1929
        %v1931 = vmul.f32 %v1928, %v1930
        %v1932 = vadd.f32 %v1928, %v1931
        %vm1933 = vweird.f32 %v1927
        %vm1934 = vweird.f32 %v1928
        %vm1935 = vmor %vm1933, %vm1934
        %v1936 = vsel %vm1935, %v1928, %v1932
        %v1937 = vand.u32 2147483647, %v1927
        %vm1938 = vcmp.eq.f32.partialorder %v1937, 8.507059e+37
        %v1939 = vand.u32 %v1927, 2147483648
        %v1940 = vor.u32 1.1754944e-38, %v1939
        %v1941 = vsel %vm1938, %v1940, %v1936
        %v1942 = vmul.f32 %v1917, %v1941
        %v1943 = vmin.f32 %v1942, 1.0
        %v1944 = vmax.f32 %v1943, -1.0
        %v1945 = vadd.f32 %v1944, 1.0
        %v1946 = vmul.f32 %v1903, %v1945
        %s1947 = scalar_lea.vmem %s15, 128
        %v1948 = vld [vmem:[%s1947] sm:$0xff]
        %v1949 = vld [vmem:[%s1947 + $0x8] sm:$0xff]
        %v1950 = vld [vmem:[%s1947 + $0x10] sm:$0xff]
        %v1951 = vld [vmem:[%s1947 + $0x18] sm:$0xff]
        %v1952 = vld [vmem:[%s1947 + $0x20] sm:$0xff]
        %v1953 = vld [vmem:[%s1947 + $0x28] sm:$0xff]
        %v1954 = vld [vmem:[%s1947 + $0x30] sm:$0xff]
        %v1955 = vld [vmem:[%s1947 + $0x38] sm:$0xff]
        %v1956 = vld [vmem:[%s1947 + $0x40] sm:$0xff]
        %v1957 = vld [vmem:[%s1947 + $0x48] sm:$0xff]
        %v1958 = vld [vmem:[%s1947 + $0x50] sm:$0xff]
        %v1959 = vld [vmem:[%s1947 + $0x58] sm:$0xff]
        %v1960 = vld [vmem:[%s1947 + $0x60] sm:$0xff]
        %v1961 = vld [vmem:[%s1947 + $0x68] sm:$0xff]
        %v1962 = vld [vmem:[%s1947 + $0x70] sm:$0xff]
        %v1963 = vld [vmem:[%s1947 + $0x78] sm:$0xff]
        %v1964 = vpack.c.bf16 %v1946, %v1946
        %v1965 = vpack.c.bf16 %v1949, %v1948
        %v1966 = vpack.c.bf16 %v1951, %v1950
        %v1967 = vpack.c.bf16 %v1953, %v1952
        %v1968 = vpack.c.bf16 %v1955, %v1954
        %v1969 = vpack.c.bf16 %v1957, %v1956
        %v1970 = vpack.c.bf16 %v1959, %v1958
        %v1971 = vpack.c.bf16 %v1961, %v1960
        %v1972 = vpack.c.bf16 %v1963, %v1962
        %s1973 = scalar_lea.vmem %s16, 1
        %v1974 = vld [vmem:[%s1973] sm:$0x1]
        %v1976 = vperm.slane %v1974, 0
        %1978 = vmatpush.bf16.msra.mxu0 %v1972
        %1979 = vmatpush.bf16.msra.mxu0 %v1971
        %1980 = vmatpush.bf16.msra.mxu0 %v1970
        %1981 = vmatpush.bf16.msra.mxu0 %v1969
        %1982 = vmatpush.bf16.msra.mxu0 %v1968
        %1983 = vmatpush.bf16.msra.mxu0 %v1967
        %1984 = vmatpush.bf16.msra.mxu0 %v1966
        %1985 = vmatpush.bf16.msra.mxu0 %v1965
        %1986 = vmatmul.bf16.gmra.mxu0 %v1964
        %v1987 = vpop.f32.mrf.mxu0
        %v1988 = vadd.f32 %v1976, %v1987
        %v1989 = vpop.f32.mrf.mxu0
        %1990 = vdwg.mxu0
        %v1991 = vadd.f32 %v1839, %v1988
        %v1992 = vld [vmem:[%s17] sm:$0x1]
        %v1993 = vld [vmem:[%s18] sm:$0x1]
        %vm1994 = vcmask 253952
        %v1995 = vsel %vm1994, %v1991, 0.0
        %1996 = vadd.xlane.f32.xlu0 %v1995
        %v1997 = vpop.xlane.xlu0 %1996
        %v1998 = vmul.f32 %v1997, %v915
        %v1999 = vsub.f32 %v1991, %v1998
        %v2000 = vmul.f32 %v1999, %v1999
        %v2001 = vsel %vm1994, %v2000, 0.0
        %2002 = vadd.xlane.f32.xlu0 %v2001
        %v2003 = vpop.xlane.xlu0 %2002
        %v2004 = vmul.f32 %v2003, %v915
        %v2005 = vadd.f32 %v2004, 1e-06
        %v2006 = vrsqrt.pop %v2005
        %v2007 = vmul.f32 %v2006, %v2005
        %v2008 = vmul.f32 %v2007, %v2006
        %v2009 = vmul.f32 0.5, %v2008
        %v2010 = vsub.f32 1.5, %v2009
        %v2011 = vmul.f32 %v2006, %v2010
        %vm2012 = vweird.f32 %v2005
        %vm2013 = vweird.f32 %v2006
        %vm2014 = vmor %vm2012, %vm2013
        %v2015 = vsel %vm2014, %v2006, %v2011
        %v2016 = vmul.f32 %v1999, %v2015
        %v2017 = vmul.f32 %v2016, %v1992
        %v2018 = vadd.f32 %v2017, %v1993
        %v2019 = vld [vmem:[%s19] sm:$0xff]
        %v2020 = vld [vmem:[%s19 + $0x8] sm:$0xff]
        %v2021 = vld [vmem:[%s19 + $0x10] sm:$0xff]
        %v2022 = vld [vmem:[%s19 + $0x18] sm:$0xff]
        %v2023 = vpack.c.bf16 %v2018, %v2018
        %v2024 = vpack.c.bf16 %v2020, %v2019
        %v2025 = vpack.c.bf16 %v2022, %v2021
        %v2026 = vld [vmem:[%s20] sm:$0x1]
        %v2028 = vsel %vm954, %v2023, 0
        %2030 = vmatpush.bf16.msra.mxu0 0
        %2031 = vmatpush.bf16.msra.mxu0 0
        %2032 = vmatpush.bf16.msra.mxu0 0
        %2033 = vmatpush.bf16.msra.mxu0 0
        %2034 = vmatpush.bf16.msra.mxu0 0
        %2035 = vmatpush.bf16.msra.mxu0 0
        %2036 = vmatpush.bf16.msra.mxu0 %v2025
        %2037 = vmatpush.bf16.msra.mxu0 %v2024
        %2038 = vmatmul.bf16.gmra.mxu0 %v2028
        %v2039 = vpop.f32.mrf.mxu0
        %v2040 = vadd.f32 %v2026, %v2039
        %v2041 = vpop.f32.mrf.mxu0
        %2042 = vdwg.mxu0
        %vm2043 = vcmask 24576
        %2044 = vst.msk [vmem:[%s648] sm:$0x1] %vm2043, %v2040
        %s2045 = sand.u32 %s489, 1
        %s2046 = scalar_lea.sflag [#allocation3], %s2045
        %s2047 = sand.u32 %s489, 1
        %s2048 = scalar_lea.vmem [#allocation2], %s2047
        // Predicated region
        $region105: #{vit_dino_class_forward.1} parent=103 // pred_check
          %p2049 = pneg %p499
        $region106: #{vit_dino_class_forward.1} parent=103 // pred_check_branch
          %2051 = sbr.rel (%p2049) target = $region108
        $region107: #{vit_dino_class_forward.1} parent=103 // pred_region
          %2053 = vsyncadd %s2046, 0
          %s2054 = scalar_lea.hbm %s21, %s35
          %s2056 = sshll.u32 %s2048, 4
          %s2057 = int_to_ptr.vmem [resolvable:$true] %s2056
          %s2058 = sshll.u32 %s2054, 4
          %s2059 = int_to_ptr.hbm [resolvable:$true] %s2058
          %2061 = dma.vmem_to_hbm [thread:$0]  %s2057, 16, %s2059, %s2046
        $region108: #{vit_dino_class_forward.1} parent=103 // pred_fallthru
          _
      $region104: #{vit_dino_class_forward.1} parent=5 // pred_fallthru
        _
      %p2062 = scmp.le.s32.totalorder 2, %s30
      // Predicated region
      $region109: #{vit_dino_class_forward.1} parent=5 // pred_check
        %p2063 = pneg %p2062
      $region110: #{vit_dino_class_forward.1} parent=5 // pred_check_branch
        %2065 = sbr.rel (%p2063) target = $region112
      $region111: #{vit_dino_class_forward.1} parent=5 // pred_region
        %s2066 = ssub.s32 %s30, 2
        // Predicated region
        $region113: #{vit_dino_class_forward.1} parent=111 // pred_check
          %p2067 = pneg %p505
        $region114: #{vit_dino_class_forward.1} parent=111 // pred_check_branch
          %2069 = sbr.rel (%p2067) target = $region116
        $region115: #{vit_dino_class_forward.1} parent=111 // pred_region
          %s2070 = sand.u32 %s490, 1
          %s2071 = scalar_lea.sflag [#allocation3], %s2070
          %s2072 = sand.u32 %s490, 1
          %s2073 = scalar_lea.vmem [#allocation2], %s2072
          %2075 = dma.done %s2071, 16
        $region116: #{vit_dino_class_forward.1} parent=111 // pred_fallthru
          _
      $region112: #{vit_dino_class_forward.1} parent=5 // pred_fallthru
        _
    $region6: #{vit_dino_class_forward.1} parent=1 // loop_footer
      %s34 = sadd.s32 1, %s30
    $region7: #{vit_dino_class_forward.1} parent=1 // loop_footer_branch
      %29 = sbr.rel target = $region3
    $region8: #{vit_dino_class_forward.1} parent=1 // loop_exit
      _
    %2076 = vsyncpa [#allocation3], 1
    %s2077 = scalar_lea.sflag [#allocation3], 1
    %2078 = vsyncpa %s2077, 1

</llo_original>
